<compile_context>
chip_gen: v7x
topology: tpu7x:2x2x1
jax: 0.10.0
libtpu: 0.0.40
codegen_flags: <defaults>
</compile_context>

<pallas_src>
import jax
import jax.numpy as jnp
from jax import lax
from jax.experimental import pallas as pl
from jax.experimental.pallas import tpu as pltpu


def _lstm_head_kernel(x3_ref, x2_ref, w1x_ref, w1h_ref, b1_ref,
                      w2x_ref, w2h_ref, b2_ref, wlin_ref, blin_ref,
                      out_ref, xbf_ref):
    """Stacked LSTM over the full sequence + fused output epilogue.

    x3_ref : (T, B, n)    f32  time-major input sequence (LSTM input)
    x2_ref : (T*B, n)     f32  same data, flattened (residual for the epilogue)
    w1x_ref: (n, 4*H1)    bf16 layer-1 input weights,  gate cols [i|f|o|g]
    w1h_ref: (H1, 4*H1)   bf16 layer-1 recurrent weights
    b1_ref : (1, 4*H1)    f32  layer-1 bias (b_ih + b_hh)
    w2x_ref: (H1, 4*Hp)   bf16 layer-2 input weights (gate cols padded to Hp)
    w2h_ref: (Hp, 4*Hp)   bf16 layer-2 recurrent weights (rows + cols padded)
    b2_ref : (1, 4*Hp)    f32  layer-2 bias (padded)
    wlin_ref:(n, n)       f32  linear1 weight, already transposed
    blin_ref:(1, n)       f32  linear1 bias
    out_ref: (T*B, n)     f32  module output, flattened
    xbf_ref: (T, B, n)    bf16 scratch: pre-cast input sequence
    """
    T, B, _ = x3_ref.shape
    H1 = w1h_ref.shape[0]
    Hp = w2h_ref.shape[0]
    n_out = out_ref.shape[-1]

    # Hoisted out of the recurrence: weight loads, bias broadcasts, bf16 cast
    # of the whole sequence (JAX does not CSE broadcast_in_dim inside loops).
    w1x = w1x_ref[...]
    w1h = w1h_ref[...]
    w2x = w2x_ref[...]
    w2h = w2h_ref[...]
    b1 = jnp.broadcast_to(b1_ref[...], (B, 4 * H1))
    b2 = jnp.broadcast_to(b2_ref[...], (B, 4 * Hp))
    xbf_ref[...] = x3_ref[...].astype(jnp.bfloat16)

    def fast_sigmoid(v):
        # Exact identity sigmoid(x) = 0.5*tanh(0.5*x) + 0.5:
        # one EUP push + two VPU ops (the VALU slots are idle here).
        return 0.5 * jnp.tanh(0.5 * v) + 0.5

    def cell(gates, c, H):
        # Gate columns are packed [i | f | o | g]: sigmoid on the first three
        # tiles only, tanh on the last one.
        s = fast_sigmoid(gates[:, :3 * H])
        g = jnp.tanh(gates[:, 3 * H:])
        i_g = s[:, 0:H]
        f_g = s[:, H:2 * H]
        o_g = s[:, 2 * H:3 * H]
        c_new = f_g * c + i_g * g
        h_new = o_g * jnp.tanh(c_new)
        return h_new, c_new

    def step(t, carry):
        h1, c1, h2, c2 = carry
        x_t = xbf_ref[t]                                           # (B, n) bf16
        # Layer 1: two accumulating MXU dots, no per-step lane concat.
        gates1 = (jnp.dot(h1.astype(jnp.bfloat16), w1h,
                          preferred_element_type=jnp.float32)
                  + jnp.dot(x_t, w1x, preferred_element_type=jnp.float32)
                  + b1)
        h1, c1 = cell(gates1, c1, H1)
        # Layer 2 (hidden padded to Hp -> every slice is lane-tile aligned).
        gates2 = (jnp.dot(h2.astype(jnp.bfloat16), w2h,
                          preferred_element_type=jnp.float32)
                  + jnp.dot(h1.astype(jnp.bfloat16), w2x,
                            preferred_element_type=jnp.float32)
                  + b2)
        h2, c2 = cell(gates2, c2, Hp)
        return (h1, c1, h2, c2)

    init = (jnp.zeros((B, H1), jnp.float32), jnp.zeros((B, H1), jnp.float32),
            jnp.zeros((B, Hp), jnp.float32), jnp.zeros((B, Hp), jnp.float32))
    _, _, h2_final, _ = lax.fori_loop(0, T, step, init, unroll=True)

    # Fused epilogue: x_out = relu(x_res + x_lstm2[-1]) @ W_lin.T + b_lin.
    h2_last = h2_final[:, :n_out]                                  # (B, n) f32
    h2_rep = jnp.concatenate([h2_last] * T, axis=0)                # (T*B, n)
    res = jnp.maximum(x2_ref[...] + h2_rep, 0.0)                   # relu
    y = jnp.dot(res, wlin_ref[...],
                preferred_element_type=jnp.float32) + blin_ref[...]
    out_ref[...] = y.astype(out_ref.dtype)


def lstm_head_forward(x, params, n_his, n_vertice):
    """LSTM head + epilogue of STGCN_LSTM_OUT.forward.

    x: (B, T, n) f32 -- the tconv output (B, 1, T, n) with the singleton channel
    squeezed.  The torch .view((T, B, n)) is a row-major reinterpretation,
    reproduced exactly by jnp.reshape.  Returns (T, B, n) f32 (module output).
    """
    batch = x.shape[0]
    x_seq = jnp.reshape(x, (n_his, batch, n_vertice))       # == torch .view
    x_flat = jnp.reshape(x_seq, (n_his * batch, n_vertice))
    (w1x, w1h, b1, w2x, w2h, b2, wlin, blin) = params
    out2d = pl.pallas_call(
        _lstm_head_kernel,
        out_shape=jax.ShapeDtypeStruct((n_his * batch, n_vertice), jnp.float32),
        in_specs=[pl.BlockSpec(memory_space=pltpu.MemorySpace.VMEM)] * 10,
        out_specs=pl.BlockSpec(memory_space=pltpu.MemorySpace.VMEM),
        scratch_shapes=[pltpu.VMEM((n_his, batch, n_vertice), jnp.bfloat16)],
    )(x_seq, x_flat, w1x, w1h, b1, w2x, w2h, b2, wlin, blin)
    return jnp.reshape(out2d, (n_his, batch, n_vertice))


def _torch_lstm_init(key, input_size, hidden_size):
    """torch.nn.LSTM default init: U(-1/sqrt(H), 1/sqrt(H)), gate order [i,f,g,o]."""
    k1, k2, k3, k4 = jax.random.split(key, 4)
    bound = 1.0 / (hidden_size ** 0.5)
    w_ih = jax.random.uniform(k1, (4 * hidden_size, input_size), jnp.float32,
                              -bound, bound)
    w_hh = jax.random.uniform(k2, (4 * hidden_size, hidden_size), jnp.float32,
                              -bound, bound)
    b_ih = jax.random.uniform(k3, (4 * hidden_size,), jnp.float32, -bound, bound)
    b_hh = jax.random.uniform(k4, (4 * hidden_size,), jnp.float32, -bound, bound)
    return w_ih, w_hh, b_ih, b_hh


def _torch_linear_init(key, in_features, out_features):
    """torch.nn.Linear default init (bound = 1/sqrt(fan_in))."""
    k1, k2 = jax.random.split(key)
    bound = 1.0 / (in_features ** 0.5)
    w = jax.random.uniform(k1, (out_features, in_features), jnp.float32,
                           -bound, bound)
    b = jax.random.uniform(k2, (out_features,), jnp.float32, -bound, bound)
    return w, b


def pack_kernel_params(layer1_raw, layer2_raw, linear_raw, hidden_pad=128):
    """Gate-reorder to [i,f,o,g], fold biases, split input/recurrent weight
    blocks, pad layer-2 gates to full 128-lane tiles, cast MXU operands to bf16."""
    w_ih1, w_hh1, b_ih1, b_hh1 = layer1_raw
    w_ih2, w_hh2, b_ih2, b_hh2 = layer2_raw
    lin_w, lin_b = linear_raw
    H1 = w_hh1.shape[1]
    H2 = w_hh2.shape[1]
    Hp = hidden_pad
    assert H1 % 128 == 0 and H2 <= Hp

    def reorder(m, H):
        # m: (K, 4H), gate column blocks in torch order [i,f,g,o] -> [i,f,o,g].
        return jnp.concatenate(
            [m[:, 0:H], m[:, H:2 * H], m[:, 3 * H:4 * H], m[:, 2 * H:3 * H]],
            axis=-1)

    def pad_gate_cols(m, H, Hp_):
        # m: (K, 4H) in [i,f,o,g] order -> (K, 4*Hp_), each gate block placed at
        # a 128-lane tile boundary, zero elsewhere.
        out = jnp.zeros((m.shape[0], 4 * Hp_), m.dtype)
        for gi in range(4):
            out = out.at[:, gi * Hp_:gi * Hp_ + H].set(m[:, gi * H:(gi + 1) * H])
        return out

    # Layer 1 (H1 = 128: gate tiles already lane-aligned).
    w1x = reorder(w_ih1.T, H1).astype(jnp.bfloat16)                  # (In, 4*H1)
    w1h = reorder(w_hh1.T, H1).astype(jnp.bfloat16)                  # (H1, 4*H1)
    b1 = reorder((b_ih1 + b_hh1)[None, :], H1).astype(jnp.float32)   # (1, 4*H1)

    # Layer 2: pad hidden H2 -> Hp.  Padded gate columns give gates = 0, so
    # c_pad stays 0 (0.5*c + 0.5*0) and h_pad = 0.5*tanh(0) = 0 forever:
    # padded hidden positions stay exactly zero through the recurrence.
    w2x = pad_gate_cols(reorder(w_ih2.T, H2), H2, Hp).astype(jnp.bfloat16)   # (H1, 4*Hp)
    w2h = jnp.zeros((Hp, 4 * Hp), jnp.float32)
    w2h = w2h.at[:H2, :].set(pad_gate_cols(reorder(w_hh2.T, H2), H2, Hp))
    w2h = w2h.astype(jnp.bfloat16)                                           # (Hp, 4*Hp)
    b2 = pad_gate_cols(reorder((b_ih2 + b_hh2)[None, :], H2), H2, Hp
                       ).astype(jnp.float32)                                 # (1, 4*Hp)

    # Output linear (tiny; kept f32 for accuracy).
    wlin = lin_w.T.astype(jnp.float32)                               # (n, n)
    blin = lin_b[None, :].astype(jnp.float32)                        # (1, n)
    return (w1x, w1h, b1, w2x, w2h, b2, wlin, blin)


def _lstm_layer_ref(x, w_ih, w_hh, b_ih, b_hh):
    """Pure-JAX f32 reference matching torch.nn.LSTM (time-major, zero init)."""
    _, B, _ = x.shape
    H = w_hh.shape[1]
    wih_t, whh_t = w_ih.T, w_hh.T
    b = (b_ih + b_hh)[None, :]

    def step(carry, x_t):
        h, c = carry
        gates = x_t @ wih_t + h @ whh_t + b
        i = jax.nn.sigmoid(gates[:, 0:H])
        f = jax.nn.sigmoid(gates[:, H:2 * H])
        g = jnp.tanh(gates[:, 2 * H:3 * H])
        o = jax.nn.sigmoid(gates[:, 3 * H:4 * H])
        c = f * c + i * g
        h = o * jnp.tanh(c)
        return (h, c), h

    init = (jnp.zeros((B, H), jnp.float32), jnp.zeros((B, H), jnp.float32))
    _, hs = lax.scan(step, init, x)
    return hs


if __name__ == "__main__":
    batch_size, n_vertice, n_his = 2, 16, 8
    hidden = 128

    key = jax.random.PRNGKey(0)
    kx, k1, k2, k3 = jax.random.split(key, 4)

    # LSTM-head input: in the module this is the tconv output (B, 1, T, n);
    # feed the equivalent (B, T, n) tensor here.
    x = jax.random.normal(kx, (batch_size, n_his, n_vertice), jnp.float32)

    raw1 = _torch_lstm_init(k1, n_vertice, hidden)       # nn.LSTM(n_vertice, 128)
    raw2 = _torch_lstm_init(k2, hidden, n_vertice)       # nn.LSTM(128, n_vertice)
    lin = _torch_linear_init(k3, n_vertice, n_vertice)   # nn.Linear(n, n)
    params = pack_kernel_params(raw1, raw2, lin)

    out = lstm_head_forward(x, params, n_his, n_vertice)
    out = jax.block_until_ready(out)
    assert out.shape == (n_his, batch_size, n_vertice)

    # Pure-JAX f32 reference of the same sub-graph (torch semantics, including
    # the broadcasting relu(x_res + x_lstm2[-1]) and linear1).
    x_seq = jnp.reshape(x, (n_his, batch_size, n_vertice))
    h2_seq = _lstm_layer_ref(_lstm_layer_ref(x_seq, *raw1), *raw2)
    res = jax.nn.relu(x_seq + h2_seq[-1][None, :, :])
    ref = jnp.einsum('tbn,mn->tbm', res, lin[0]) + lin[1]

    # Kernel uses bf16 MXU operands (f32 accumulation), hence the tolerance.
    assert jnp.allclose(out, ref, atol=3e-2, rtol=3e-2), (
        "mismatch vs reference: max|diff|="
        f"{float(jnp.max(jnp.abs(out - ref))):.3e}")

    print("KERNEL_OK")
</pallas_src>

<mosaic_0001>
module attributes {stable_mosaic.version = 11 : i64} {
  func.func @_lstm_head_kernel(%arg0: memref<8x2x16xf32, #tpu.memory_space<vmem>>, %arg1: memref<16x16xf32, #tpu.memory_space<vmem>>, %arg2: memref<16x512xbf16, #tpu.memory_space<vmem>>, %arg3: memref<128x512xbf16, #tpu.memory_space<vmem>>, %arg4: memref<1x512xf32, #tpu.memory_space<vmem>>, %arg5: memref<128x512xbf16, #tpu.memory_space<vmem>>, %arg6: memref<128x512xbf16, #tpu.memory_space<vmem>>, %arg7: memref<1x512xf32, #tpu.memory_space<vmem>>, %arg8: memref<16x16xf32, #tpu.memory_space<vmem>>, %arg9: memref<1x16xf32, #tpu.memory_space<vmem>>, %arg10: memref<16x16xf32, #tpu.memory_space<vmem>>, %arg11: memref<8x2x16xbf16, #tpu.memory_space<vmem>>) attributes {dimension_semantics = [], scalar_prefetch = 0 : i64, scratch_operands = 1 : i64, tpu.core_type = #tpu.core_type<tc>} {
    %c0 = arith.constant 0 : index
    %c0_0 = arith.constant 0 : index
    %0 = vector.load %arg2[%c0, %c0_0] : memref<16x512xbf16, #tpu.memory_space<vmem>>, vector<16x512xbf16>
    %c0_1 = arith.constant 0 : index
    %c0_2 = arith.constant 0 : index
    %1 = vector.load %arg3[%c0_1, %c0_2] : memref<128x512xbf16, #tpu.memory_space<vmem>>, vector<128x512xbf16>
    %c0_3 = arith.constant 0 : index
    %c0_4 = arith.constant 0 : index
    %2 = vector.load %arg5[%c0_3, %c0_4] : memref<128x512xbf16, #tpu.memory_space<vmem>>, vector<128x512xbf16>
    %c0_5 = arith.constant 0 : index
    %c0_6 = arith.constant 0 : index
    %3 = vector.load %arg6[%c0_5, %c0_6] : memref<128x512xbf16, #tpu.memory_space<vmem>>, vector<128x512xbf16>
    %c0_7 = arith.constant 0 : index
    %c0_8 = arith.constant 0 : index
    %4 = vector.load %arg4[%c0_7, %c0_8] : memref<1x512xf32, #tpu.memory_space<vmem>>, vector<1x512xf32>
    %5 = vector.shape_cast %4 : vector<1x512xf32> to vector<1x512xf32>
    %6 = vector.broadcast %5 : vector<1x512xf32> to vector<2x512xf32>
    %c0_9 = arith.constant 0 : index
    %c0_10 = arith.constant 0 : index
    %7 = vector.load %arg7[%c0_9, %c0_10] : memref<1x512xf32, #tpu.memory_space<vmem>>, vector<1x512xf32>
    %8 = vector.shape_cast %7 : vector<1x512xf32> to vector<1x512xf32>
    %9 = vector.broadcast %8 : vector<1x512xf32> to vector<2x512xf32>
    %c0_11 = arith.constant 0 : index
    %c0_12 = arith.constant 0 : index
    %c0_13 = arith.constant 0 : index
    %10 = vector.load %arg0[%c0_11, %c0_12, %c0_13] : memref<8x2x16xf32, #tpu.memory_space<vmem>>, vector<8x2x16xf32>
    %11 = arith.truncf %10 : vector<8x2x16xf32> to vector<8x2x16xbf16>
    %c0_14 = arith.constant 0 : index
    %c0_15 = arith.constant 0 : index
    %c0_16 = arith.constant 0 : index
    %12 = vector.load %arg11[%c0_14, %c0_15, %c0_16] : memref<8x2x16xbf16, #tpu.memory_space<vmem>>, vector<8x2x16xbf16>
    tpu.vector_store %arg11[%c0_14, %c0_15, %c0_16], %11 {strides = array<i32>} : memref<8x2x16xbf16, #tpu.memory_space<vmem>>, vector<8x2x16xbf16>,
    %cst = arith.constant 0.000000e+00 : f32
    %13 = vector.broadcast %cst : f32 to vector<2x128xf32>
    %cst_17 = arith.constant 0.000000e+00 : f32
    %14 = vector.broadcast %cst_17 : f32 to vector<2x128xf32>
    %cst_18 = arith.constant 0.000000e+00 : f32
    %15 = vector.broadcast %cst_18 : f32 to vector<2x128xf32>
    %cst_19 = arith.constant 0.000000e+00 : f32
    %16 = vector.broadcast %cst_19 : f32 to vector<2x128xf32>
    %c0_i32 = arith.constant 0 : i32
    %17 = arith.index_cast %c0_i32 : i32 to index
    %c0_20 = arith.constant 0 : index
    %c0_21 = arith.constant 0 : index
    %18 = vector.load %arg11[%17, %c0_20, %c0_21] : memref<8x2x16xbf16, #tpu.memory_space<vmem>>, vector<1x2x16xbf16>
    %19 = vector.shape_cast %18 : vector<1x2x16xbf16> to vector<2x16xbf16>
    %20 = arith.truncf %13 : vector<2x128xf32> to vector<2x128xbf16>
    %cst_22 = arith.constant dense<0.000000e+00> : vector<2x512xf32>
    %21 = tpu.matmul %20, %1, %cst_22 {dimension_numbers = #tpu.dot_dimension_numbers<[1], [0], [0], [1], [0, 0, 1, 1], [], []>} : vector<2x128xbf16>, vector<128x512xbf16>, vector<2x512xf32> -> vector<2x512xf32>
    %cst_23 = arith.constant dense<0.000000e+00> : vector<2x512xf32>
    %22 = tpu.matmul %19, %0, %cst_23 {dimension_numbers = #tpu.dot_dimension_numbers<[1], [0], [0], [1], [0, 0, 1, 1], [], []>} : vector<2x16xbf16>, vector<16x512xbf16>, vector<2x512xf32> -> vector<2x512xf32>
    %23 = arith.addf %21, %22 : vector<2x512xf32>
    %24 = arith.addf %23, %6 : vector<2x512xf32>
    %25 = vector.extract_strided_slice %24 {offsets = [0, 0], sizes = [2, 384], strides = [1, 1]} : vector<2x512xf32> to vector<2x384xf32>
    %cst_24 = arith.constant 5.000000e-01 : f32
    %26 = vector.broadcast %cst_24 : f32 to vector<2x384xf32>
    %27 = arith.mulf %26, %25 : vector<2x384xf32>
    %28 = math.tanh %27 : vector<2x384xf32>
    %cst_25 = arith.constant 5.000000e-01 : f32
    %29 = vector.broadcast %cst_25 : f32 to vector<2x384xf32>
    %30 = arith.mulf %29, %28 : vector<2x384xf32>
    %cst_26 = arith.constant 5.000000e-01 : f32
    %31 = vector.broadcast %cst_26 : f32 to vector<2x384xf32>
    %32 = arith.addf %30, %31 : vector<2x384xf32>
    %33 = vector.extract_strided_slice %24 {offsets = [0, 384], sizes = [2, 128], strides = [1, 1]} : vector<2x512xf32> to vector<2x128xf32>
    %34 = math.tanh %33 : vector<2x128xf32>
    %35 = vector.extract_strided_slice %32 {offsets = [0, 0], sizes = [2, 128], strides = [1, 1]} : vector<2x384xf32> to vector<2x128xf32>
    %36 = vector.extract_strided_slice %32 {offsets = [0, 128], sizes = [2, 128], strides = [1, 1]} : vector<2x384xf32> to vector<2x128xf32>
    %37 = vector.extract_strided_slice %32 {offsets = [0, 256], sizes = [2, 128], strides = [1, 1]} : vector<2x384xf32> to vector<2x128xf32>
    %38 = arith.mulf %36, %14 : vector<2x128xf32>
    %39 = arith.mulf %35, %34 : vector<2x128xf32>
    %40 = arith.addf %38, %39 : vector<2x128xf32>
    %41 = math.tanh %40 : vector<2x128xf32>
    %42 = arith.mulf %37, %41 : vector<2x128xf32>
    %43 = arith.truncf %15 : vector<2x128xf32> to vector<2x128xbf16>
    %cst_27 = arith.constant dense<0.000000e+00> : vector<2x512xf32>
    %44 = tpu.matmul %43, %3, %cst_27 {dimension_numbers = #tpu.dot_dimension_numbers<[1], [0], [0], [1], [0, 0, 1, 1], [], []>} : vector<2x128xbf16>, vector<128x512xbf16>, vector<2x512xf32> -> vector<2x512xf32>
    %45 = arith.truncf %42 : vector<2x128xf32> to vector<2x128xbf16>
    %cst_28 = arith.constant dense<0.000000e+00> : vector<2x512xf32>
    %46 = tpu.matmul %45, %2, %cst_28 {dimension_numbers = #tpu.dot_dimension_numbers<[1], [0], [0], [1], [0, 0, 1, 1], [], []>} : vector<2x128xbf16>, vector<128x512xbf16>, vector<2x512xf32> -> vector<2x512xf32>
    %47 = arith.addf %44, %46 : vector<2x512xf32>
    %48 = arith.addf %47, %9 : vector<2x512xf32>
    %49 = vector.extract_strided_slice %48 {offsets = [0, 0], sizes = [2, 384], strides = [1, 1]} : vector<2x512xf32> to vector<2x384xf32>
    %cst_29 = arith.constant 5.000000e-01 : f32
    %50 = vector.broadcast %cst_29 : f32 to vector<2x384xf32>
    %51 = arith.mulf %50, %49 : vector<2x384xf32>
    %52 = math.tanh %51 : vector<2x384xf32>
    %cst_30 = arith.constant 5.000000e-01 : f32
    %53 = vector.broadcast %cst_30 : f32 to vector<2x384xf32>
    %54 = arith.mulf %53, %52 : vector<2x384xf32>
    %cst_31 = arith.constant 5.000000e-01 : f32
    %55 = vector.broadcast %cst_31 : f32 to vector<2x384xf32>
    %56 = arith.addf %54, %55 : vector<2x384xf32>
    %57 = vector.extract_strided_slice %48 {offsets = [0, 384], sizes = [2, 128], strides = [1, 1]} : vector<2x512xf32> to vector<2x128xf32>
    %58 = math.tanh %57 : vector<2x128xf32>
    %59 = vector.extract_strided_slice %56 {offsets = [0, 0], sizes = [2, 128], strides = [1, 1]} : vector<2x384xf32> to vector<2x128xf32>
    %60 = vector.extract_strided_slice %56 {offsets = [0, 128], sizes = [2, 128], strides = [1, 1]} : vector<2x384xf32> to vector<2x128xf32>
    %61 = vector.extract_strided_slice %56 {offsets = [0, 256], sizes = [2, 128], strides = [1, 1]} : vector<2x384xf32> to vector<2x128xf32>
    %62 = arith.mulf %60, %16 : vector<2x128xf32>
    %63 = arith.mulf %59, %58 : vector<2x128xf32>
    %64 = arith.addf %62, %63 : vector<2x128xf32>
    %65 = math.tanh %64 : vector<2x128xf32>
    %66 = arith.mulf %61, %65 : vector<2x128xf32>
    %c1_i32 = arith.constant 1 : i32
    %67 = arith.index_cast %c1_i32 : i32 to index
    %c0_32 = arith.constant 0 : index
    %c0_33 = arith.constant 0 : index
    %68 = vector.load %arg11[%67, %c0_32, %c0_33] : memref<8x2x16xbf16, #tpu.memory_space<vmem>>, vector<1x2x16xbf16>
    %69 = vector.shape_cast %68 : vector<1x2x16xbf16> to vector<2x16xbf16>
    %70 = arith.truncf %42 : vector<2x128xf32> to vector<2x128xbf16>
    %cst_34 = arith.constant dense<0.000000e+00> : vector<2x512xf32>
    %71 = tpu.matmul %70, %1, %cst_34 {dimension_numbers = #tpu.dot_dimension_numbers<[1], [0], [0], [1], [0, 0, 1, 1], [], []>} : vector<2x128xbf16>, vector<128x512xbf16>, vector<2x512xf32> -> vector<2x512xf32>
    %cst_35 = arith.constant dense<0.000000e+00> : vector<2x512xf32>
    %72 = tpu.matmul %69, %0, %cst_35 {dimension_numbers = #tpu.dot_dimension_numbers<[1], [0], [0], [1], [0, 0, 1, 1], [], []>} : vector<2x16xbf16>, vector<16x512xbf16>, vector<2x512xf32> -> vector<2x512xf32>
    %73 = arith.addf %71, %72 : vector<2x512xf32>
    %74 = arith.addf %73, %6 : vector<2x512xf32>
    %75 = vector.extract_strided_slice %74 {offsets = [0, 0], sizes = [2, 384], strides = [1, 1]} : vector<2x512xf32> to vector<2x384xf32>
    %cst_36 = arith.constant 5.000000e-01 : f32
    %76 = vector.broadcast %cst_36 : f32 to vector<2x384xf32>
    %77 = arith.mulf %76, %75 : vector<2x384xf32>
    %78 = math.tanh %77 : vector<2x384xf32>
    %cst_37 = arith.constant 5.000000e-01 : f32
    %79 = vector.broadcast %cst_37 : f32 to vector<2x384xf32>
    %80 = arith.mulf %79, %78 : vector<2x384xf32>
    %cst_38 = arith.constant 5.000000e-01 : f32
    %81 = vector.broadcast %cst_38 : f32 to vector<2x384xf32>
    %82 = arith.addf %80, %81 : vector<2x384xf32>
    %83 = vector.extract_strided_slice %74 {offsets = [0, 384], sizes = [2, 128], strides = [1, 1]} : vector<2x512xf32> to vector<2x128xf32>
    %84 = math.tanh %83 : vector<2x128xf32>
    %85 = vector.extract_strided_slice %82 {offsets = [0, 0], sizes = [2, 128], strides = [1, 1]} : vector<2x384xf32> to vector<2x128xf32>
    %86 = vector.extract_strided_slice %82 {offsets = [0, 128], sizes = [2, 128], strides = [1, 1]} : vector<2x384xf32> to vector<2x128xf32>
    %87 = vector.extract_strided_slice %82 {offsets = [0, 256], sizes = [2, 128], strides = [1, 1]} : vector<2x384xf32> to vector<2x128xf32>
    %88 = arith.mulf %86, %40 : vector<2x128xf32>
    %89 = arith.mulf %85, %84 : vector<2x128xf32>
    %90 = arith.addf %88, %89 : vector<2x128xf32>
    %91 = math.tanh %90 : vector<2x128xf32>
    %92 = arith.mulf %87, %91 : vector<2x128xf32>
    %93 = arith.truncf %66 : vector<2x128xf32> to vector<2x128xbf16>
    %cst_39 = arith.constant dense<0.000000e+00> : vector<2x512xf32>
    %94 = tpu.matmul %93, %3, %cst_39 {dimension_numbers = #tpu.dot_dimension_numbers<[1], [0], [0], [1], [0, 0, 1, 1], [], []>} : vector<2x128xbf16>, vector<128x512xbf16>, vector<2x512xf32> -> vector<2x512xf32>
    %95 = arith.truncf %92 : vector<2x128xf32> to vector<2x128xbf16>
    %cst_40 = arith.constant dense<0.000000e+00> : vector<2x512xf32>
    %96 = tpu.matmul %95, %2, %cst_40 {dimension_numbers = #tpu.dot_dimension_numbers<[1], [0], [0], [1], [0, 0, 1, 1], [], []>} : vector<2x128xbf16>, vector<128x512xbf16>, vector<2x512xf32> -> vector<2x512xf32>
    %97 = arith.addf %94, %96 : vector<2x512xf32>
    %98 = arith.addf %97, %9 : vector<2x512xf32>
    %99 = vector.extract_strided_slice %98 {offsets = [0, 0], sizes = [2, 384], strides = [1, 1]} : vector<2x512xf32> to vector<2x384xf32>
    %cst_41 = arith.constant 5.000000e-01 : f32
    %100 = vector.broadcast %cst_41 : f32 to vector<2x384xf32>
    %101 = arith.mulf %100, %99 : vector<2x384xf32>
    %102 = math.tanh %101 : vector<2x384xf32>
    %cst_42 = arith.constant 5.000000e-01 : f32
    %103 = vector.broadcast %cst_42 : f32 to vector<2x384xf32>
    %104 = arith.mulf %103, %102 : vector<2x384xf32>
    %cst_43 = arith.constant 5.000000e-01 : f32
    %105 = vector.broadcast %cst_43 : f32 to vector<2x384xf32>
    %106 = arith.addf %104, %105 : vector<2x384xf32>
    %107 = vector.extract_strided_slice %98 {offsets = [0, 384], sizes = [2, 128], strides = [1, 1]} : vector<2x512xf32> to vector<2x128xf32>
    %108 = math.tanh %107 : vector<2x128xf32>
    %109 = vector.extract_strided_slice %106 {offsets = [0, 0], sizes = [2, 128], strides = [1, 1]} : vector<2x384xf32> to vector<2x128xf32>
    %110 = vector.extract_strided_slice %106 {offsets = [0, 128], sizes = [2, 128], strides = [1, 1]} : vector<2x384xf32> to vector<2x128xf32>
    %111 = vector.extract_strided_slice %106 {offsets = [0, 256], sizes = [2, 128], strides = [1, 1]} : vector<2x384xf32> to vector<2x128xf32>
    %112 = arith.mulf %110, %64 : vector<2x128xf32>
    %113 = arith.mulf %109, %108 : vector<2x128xf32>
    %114 = arith.addf %112, %113 : vector<2x128xf32>
    %115 = math.tanh %114 : vector<2x128xf32>
    %116 = arith.mulf %111, %115 : vector<2x128xf32>
    %c2_i32 = arith.constant 2 : i32
    %117 = arith.index_cast %c2_i32 : i32 to index
    %c0_44 = arith.constant 0 : index
    %c0_45 = arith.constant 0 : index
    %118 = vector.load %arg11[%117, %c0_44, %c0_45] : memref<8x2x16xbf16, #tpu.memory_space<vmem>>, vector<1x2x16xbf16>
    %119 = vector.shape_cast %118 : vector<1x2x16xbf16> to vector<2x16xbf16>
    %120 = arith.truncf %92 : vector<2x128xf32> to vector<2x128xbf16>
    %cst_46 = arith.constant dense<0.000000e+00> : vector<2x512xf32>
    %121 = tpu.matmul %120, %1, %cst_46 {dimension_numbers = #tpu.dot_dimension_numbers<[1], [0], [0], [1], [0, 0, 1, 1], [], []>} : vector<2x128xbf16>, vector<128x512xbf16>, vector<2x512xf32> -> vector<2x512xf32>
    %cst_47 = arith.constant dense<0.000000e+00> : vector<2x512xf32>
    %122 = tpu.matmul %119, %0, %cst_47 {dimension_numbers = #tpu.dot_dimension_numbers<[1], [0], [0], [1], [0, 0, 1, 1], [], []>} : vector<2x16xbf16>, vector<16x512xbf16>, vector<2x512xf32> -> vector<2x512xf32>
    %123 = arith.addf %121, %122 : vector<2x512xf32>
    %124 = arith.addf %123, %6 : vector<2x512xf32>
    %125 = vector.extract_strided_slice %124 {offsets = [0, 0], sizes = [2, 384], strides = [1, 1]} : vector<2x512xf32> to vector<2x384xf32>
    %cst_48 = arith.constant 5.000000e-01 : f32
    %126 = vector.broadcast %cst_48 : f32 to vector<2x384xf32>
    %127 = arith.mulf %126, %125 : vector<2x384xf32>
    %128 = math.tanh %127 : vector<2x384xf32>
    %cst_49 = arith.constant 5.000000e-01 : f32
    %129 = vector.broadcast %cst_49 : f32 to vector<2x384xf32>
    %130 = arith.mulf %129, %128 : vector<2x384xf32>
    %cst_50 = arith.constant 5.000000e-01 : f32
    %131 = vector.broadcast %cst_50 : f32 to vector<2x384xf32>
    %132 = arith.addf %130, %131 : vector<2x384xf32>
    %133 = vector.extract_strided_slice %124 {offsets = [0, 384], sizes = [2, 128], strides = [1, 1]} : vector<2x512xf32> to vector<2x128xf32>
    %134 = math.tanh %133 : vector<2x128xf32>
    %135 = vector.extract_strided_slice %132 {offsets = [0, 0], sizes = [2, 128], strides = [1, 1]} : vector<2x384xf32> to vector<2x128xf32>
    %136 = vector.extract_strided_slice %132 {offsets = [0, 128], sizes = [2, 128], strides = [1, 1]} : vector<2x384xf32> to vector<2x128xf32>
    %137 = vector.extract_strided_slice %132 {offsets = [0, 256], sizes = [2, 128], strides = [1, 1]} : vector<2x384xf32> to vector<2x128xf32>
    %138 = arith.mulf %136, %90 : vector<2x128xf32>
    %139 = arith.mulf %135, %134 : vector<2x128xf32>
    %140 = arith.addf %138, %139 : vector<2x128xf32>
    %141 = math.tanh %140 : vector<2x128xf32>
    %142 = arith.mulf %137, %141 : vector<2x128xf32>
    %143 = arith.truncf %116 : vector<2x128xf32> to vector<2x128xbf16>
    %cst_51 = arith.constant dense<0.000000e+00> : vector<2x512xf32>
    %144 = tpu.matmul %143, %3, %cst_51 {dimension_numbers = #tpu.dot_dimension_numbers<[1], [0], [0], [1], [0, 0, 1, 1], [], []>} : vector<2x128xbf16>, vector<128x512xbf16>, vector<2x512xf32> -> vector<2x512xf32>
    %145 = arith.truncf %142 : vector<2x128xf32> to vector<2x128xbf16>
    %cst_52 = arith.constant dense<0.000000e+00> : vector<2x512xf32>
    %146 = tpu.matmul %145, %2, %cst_52 {dimension_numbers = #tpu.dot_dimension_numbers<[1], [0], [0], [1], [0, 0, 1, 1], [], []>} : vector<2x128xbf16>, vector<128x512xbf16>, vector<2x512xf32> -> vector<2x512xf32>
    %147 = arith.addf %144, %146 : vector<2x512xf32>
    %148 = arith.addf %147, %9 : vector<2x512xf32>
    %149 = vector.extract_strided_slice %148 {offsets = [0, 0], sizes = [2, 384], strides = [1, 1]} : vector<2x512xf32> to vector<2x384xf32>
    %cst_53 = arith.constant 5.000000e-01 : f32
    %150 = vector.broadcast %cst_53 : f32 to vector<2x384xf32>
    %151 = arith.mulf %150, %149 : vector<2x384xf32>
    %152 = math.tanh %151 : vector<2x384xf32>
    %cst_54 = arith.constant 5.000000e-01 : f32
    %153 = vector.broadcast %cst_54 : f32 to vector<2x384xf32>
    %154 = arith.mulf %153, %152 : vector<2x384xf32>
    %cst_55 = arith.constant 5.000000e-01 : f32
    %155 = vector.broadcast %cst_55 : f32 to vector<2x384xf32>
    %156 = arith.addf %154, %155 : vector<2x384xf32>
    %157 = vector.extract_strided_slice %148 {offsets = [0, 384], sizes = [2, 128], strides = [1, 1]} : vector<2x512xf32> to vector<2x128xf32>
    %158 = math.tanh %157 : vector<2x128xf32>
    %159 = vector.extract_strided_slice %156 {offsets = [0, 0], sizes = [2, 128], strides = [1, 1]} : vector<2x384xf32> to vector<2x128xf32>
    %160 = vector.extract_strided_slice %156 {offsets = [0, 128], sizes = [2, 128], strides = [1, 1]} : vector<2x384xf32> to vector<2x128xf32>
    %161 = vector.extract_strided_slice %156 {offsets = [0, 256], sizes = [2, 128], strides = [1, 1]} : vector<2x384xf32> to vector<2x128xf32>
    %162 = arith.mulf %160, %114 : vector<2x128xf32>
    %163 = arith.mulf %159, %158 : vector<2x128xf32>
    %164 = arith.addf %162, %163 : vector<2x128xf32>
    %165 = math.tanh %164 : vector<2x128xf32>
    %166 = arith.mulf %161, %165 : vector<2x128xf32>
    %c3_i32 = arith.constant 3 : i32
    %167 = arith.index_cast %c3_i32 : i32 to index
    %c0_56 = arith.constant 0 : index
    %c0_57 = arith.constant 0 : index
    %168 = vector.load %arg11[%167, %c0_56, %c0_57] : memref<8x2x16xbf16, #tpu.memory_space<vmem>>, vector<1x2x16xbf16>
    %169 = vector.shape_cast %168 : vector<1x2x16xbf16> to vector<2x16xbf16>
    %170 = arith.truncf %142 : vector<2x128xf32> to vector<2x128xbf16>
    %cst_58 = arith.constant dense<0.000000e+00> : vector<2x512xf32>
    %171 = tpu.matmul %170, %1, %cst_58 {dimension_numbers = #tpu.dot_dimension_numbers<[1], [0], [0], [1], [0, 0, 1, 1], [], []>} : vector<2x128xbf16>, vector<128x512xbf16>, vector<2x512xf32> -> vector<2x512xf32>
    %cst_59 = arith.constant dense<0.000000e+00> : vector<2x512xf32>
    %172 = tpu.matmul %169, %0, %cst_59 {dimension_numbers = #tpu.dot_dimension_numbers<[1], [0], [0], [1], [0, 0, 1, 1], [], []>} : vector<2x16xbf16>, vector<16x512xbf16>, vector<2x512xf32> -> vector<2x512xf32>
    %173 = arith.addf %171, %172 : vector<2x512xf32>
    %174 = arith.addf %173, %6 : vector<2x512xf32>
    %175 = vector.extract_strided_slice %174 {offsets = [0, 0], sizes = [2, 384], strides = [1, 1]} : vector<2x512xf32> to vector<2x384xf32>
    %cst_60 = arith.constant 5.000000e-01 : f32
    %176 = vector.broadcast %cst_60 : f32 to vector<2x384xf32>
    %177 = arith.mulf %176, %175 : vector<2x384xf32>
    %178 = math.tanh %177 : vector<2x384xf32>
    %cst_61 = arith.constant 5.000000e-01 : f32
    %179 = vector.broadcast %cst_61 : f32 to vector<2x384xf32>
    %180 = arith.mulf %179, %178 : vector<2x384xf32>
    %cst_62 = arith.constant 5.000000e-01 : f32
    %181 = vector.broadcast %cst_62 : f32 to vector<2x384xf32>
    %182 = arith.addf %180, %181 : vector<2x384xf32>
    %183 = vector.extract_strided_slice %174 {offsets = [0, 384], sizes = [2, 128], strides = [1, 1]} : vector<2x512xf32> to vector<2x128xf32>
    %184 = math.tanh %183 : vector<2x128xf32>
    %185 = vector.extract_strided_slice %182 {offsets = [0, 0], sizes = [2, 128], strides = [1, 1]} : vector<2x384xf32> to vector<2x128xf32>
    %186 = vector.extract_strided_slice %182 {offsets = [0, 128], sizes = [2, 128], strides = [1, 1]} : vector<2x384xf32> to vector<2x128xf32>
    %187 = vector.extract_strided_slice %182 {offsets = [0, 256], sizes = [2, 128], strides = [1, 1]} : vector<2x384xf32> to vector<2x128xf32>
    %188 = arith.mulf %186, %140 : vector<2x128xf32>
    %189 = arith.mulf %185, %184 : vector<2x128xf32>
    %190 = arith.addf %188, %189 : vector<2x128xf32>
    %191 = math.tanh %190 : vector<2x128xf32>
    %192 = arith.mulf %187, %191 : vector<2x128xf32>
    %193 = arith.truncf %166 : vector<2x128xf32> to vector<2x128xbf16>
    %cst_63 = arith.constant dense<0.000000e+00> : vector<2x512xf32>
    %194 = tpu.matmul %193, %3, %cst_63 {dimension_numbers = #tpu.dot_dimension_numbers<[1], [0], [0], [1], [0, 0, 1, 1], [], []>} : vector<2x128xbf16>, vector<128x512xbf16>, vector<2x512xf32> -> vector<2x512xf32>
    %195 = arith.truncf %192 : vector<2x128xf32> to vector<2x128xbf16>
    %cst_64 = arith.constant dense<0.000000e+00> : vector<2x512xf32>
    %196 = tpu.matmul %195, %2, %cst_64 {dimension_numbers = #tpu.dot_dimension_numbers<[1], [0], [0], [1], [0, 0, 1, 1], [], []>} : vector<2x128xbf16>, vector<128x512xbf16>, vector<2x512xf32> -> vector<2x512xf32>
    %197 = arith.addf %194, %196 : vector<2x512xf32>
    %198 = arith.addf %197, %9 : vector<2x512xf32>
    %199 = vector.extract_strided_slice %198 {offsets = [0, 0], sizes = [2, 384], strides = [1, 1]} : vector<2x512xf32> to vector<2x384xf32>
    %cst_65 = arith.constant 5.000000e-01 : f32
    %200 = vector.broadcast %cst_65 : f32 to vector<2x384xf32>
    %201 = arith.mulf %200, %199 : vector<2x384xf32>
    %202 = math.tanh %201 : vector<2x384xf32>
    %cst_66 = arith.constant 5.000000e-01 : f32
    %203 = vector.broadcast %cst_66 : f32 to vector<2x384xf32>
    %204 = arith.mulf %203, %202 : vector<2x384xf32>
    %cst_67 = arith.constant 5.000000e-01 : f32
    %205 = vector.broadcast %cst_67 : f32 to vector<2x384xf32>
    %206 = arith.addf %204, %205 : vector<2x384xf32>
    %207 = vector.extract_strided_slice %198 {offsets = [0, 384], sizes = [2, 128], strides = [1, 1]} : vector<2x512xf32> to vector<2x128xf32>
    %208 = math.tanh %207 : vector<2x128xf32>
    %209 = vector.extract_strided_slice %206 {offsets = [0, 0], sizes = [2, 128], strides = [1, 1]} : vector<2x384xf32> to vector<2x128xf32>
    %210 = vector.extract_strided_slice %206 {offsets = [0, 128], sizes = [2, 128], strides = [1, 1]} : vector<2x384xf32> to vector<2x128xf32>
    %211 = vector.extract_strided_slice %206 {offsets = [0, 256], sizes = [2, 128], strides = [1, 1]} : vector<2x384xf32> to vector<2x128xf32>
    %212 = arith.mulf %210, %164 : vector<2x128xf32>
    %213 = arith.mulf %209, %208 : vector<2x128xf32>
    %214 = arith.addf %212, %213 : vector<2x128xf32>
    %215 = math.tanh %214 : vector<2x128xf32>
    %216 = arith.mulf %211, %215 : vector<2x128xf32>
    %c4_i32 = arith.constant 4 : i32
    %217 = arith.index_cast %c4_i32 : i32 to index
    %c0_68 = arith.constant 0 : index
    %c0_69 = arith.constant 0 : index
    %218 = vector.load %arg11[%217, %c0_68, %c0_69] : memref<8x2x16xbf16, #tpu.memory_space<vmem>>, vector<1x2x16xbf16>
    %219 = vector.shape_cast %218 : vector<1x2x16xbf16> to vector<2x16xbf16>
    %220 = arith.truncf %192 : vector<2x128xf32> to vector<2x128xbf16>
    %cst_70 = arith.constant dense<0.000000e+00> : vector<2x512xf32>
    %221 = tpu.matmul %220, %1, %cst_70 {dimension_numbers = #tpu.dot_dimension_numbers<[1], [0], [0], [1], [0, 0, 1, 1], [], []>} : vector<2x128xbf16>, vector<128x512xbf16>, vector<2x512xf32> -> vector<2x512xf32>
    %cst_71 = arith.constant dense<0.000000e+00> : vector<2x512xf32>
    %222 = tpu.matmul %219, %0, %cst_71 {dimension_numbers = #tpu.dot_dimension_numbers<[1], [0], [0], [1], [0, 0, 1, 1], [], []>} : vector<2x16xbf16>, vector<16x512xbf16>, vector<2x512xf32> -> vector<2x512xf32>
    %223 = arith.addf %221, %222 : vector<2x512xf32>
    %224 = arith.addf %223, %6 : vector<2x512xf32>
    %225 = vector.extract_strided_slice %224 {offsets = [0, 0], sizes = [2, 384], strides = [1, 1]} : vector<2x512xf32> to vector<2x384xf32>
    %cst_72 = arith.constant 5.000000e-01 : f32
    %226 = vector.broadcast %cst_72 : f32 to vector<2x384xf32>
    %227 = arith.mulf %226, %225 : vector<2x384xf32>
    %228 = math.tanh %227 : vector<2x384xf32>
    %cst_73 = arith.constant 5.000000e-01 : f32
    %229 = vector.broadcast %cst_73 : f32 to vector<2x384xf32>
    %230 = arith.mulf %229, %228 : vector<2x384xf32>
    %cst_74 = arith.constant 5.000000e-01 : f32
    %231 = vector.broadcast %cst_74 : f32 to vector<2x384xf32>
    %232 = arith.addf %230, %231 : vector<2x384xf32>
    %233 = vector.extract_strided_slice %224 {offsets = [0, 384], sizes = [2, 128], strides = [1, 1]} : vector<2x512xf32> to vector<2x128xf32>
    %234 = math.tanh %233 : vector<2x128xf32>
    %235 = vector.extract_strided_slice %232 {offsets = [0, 0], sizes = [2, 128], strides = [1, 1]} : vector<2x384xf32> to vector<2x128xf32>
    %236 = vector.extract_strided_slice %232 {offsets = [0, 128], sizes = [2, 128], strides = [1, 1]} : vector<2x384xf32> to vector<2x128xf32>
    %237 = vector.extract_strided_slice %232 {offsets = [0, 256], sizes = [2, 128], strides = [1, 1]} : vector<2x384xf32> to vector<2x128xf32>
    %238 = arith.mulf %236, %190 : vector<2x128xf32>
    %239 = arith.mulf %235, %234 : vector<2x128xf32>
    %240 = arith.addf %238, %239 : vector<2x128xf32>
    %241 = math.tanh %240 : vector<2x128xf32>
    %242 = arith.mulf %237, %241 : vector<2x128xf32>
    %243 = arith.truncf %216 : vector<2x128xf32> to vector<2x128xbf16>
    %cst_75 = arith.constant dense<0.000000e+00> : vector<2x512xf32>
    %244 = tpu.matmul %243, %3, %cst_75 {dimension_numbers = #tpu.dot_dimension_numbers<[1], [0], [0], [1], [0, 0, 1, 1], [], []>} : vector<2x128xbf16>, vector<128x512xbf16>, vector<2x512xf32> -> vector<2x512xf32>
    %245 = arith.truncf %242 : vector<2x128xf32> to vector<2x128xbf16>
    %cst_76 = arith.constant dense<0.000000e+00> : vector<2x512xf32>
    %246 = tpu.matmul %245, %2, %cst_76 {dimension_numbers = #tpu.dot_dimension_numbers<[1], [0], [0], [1], [0, 0, 1, 1], [], []>} : vector<2x128xbf16>, vector<128x512xbf16>, vector<2x512xf32> -> vector<2x512xf32>
    %247 = arith.addf %244, %246 : vector<2x512xf32>
    %248 = arith.addf %247, %9 : vector<2x512xf32>
    %249 = vector.extract_strided_slice %248 {offsets = [0, 0], sizes = [2, 384], strides = [1, 1]} : vector<2x512xf32> to vector<2x384xf32>
    %cst_77 = arith.constant 5.000000e-01 : f32
    %250 = vector.broadcast %cst_77 : f32 to vector<2x384xf32>
    %251 = arith.mulf %250, %249 : vector<2x384xf32>
    %252 = math.tanh %251 : vector<2x384xf32>
    %cst_78 = arith.constant 5.000000e-01 : f32
    %253 = vector.broadcast %cst_78 : f32 to vector<2x384xf32>
    %254 = arith.mulf %253, %252 : vector<2x384xf32>
    %cst_79 = arith.constant 5.000000e-01 : f32
    %255 = vector.broadcast %cst_79 : f32 to vector<2x384xf32>
    %256 = arith.addf %254, %255 : vector<2x384xf32>
    %257 = vector.extract_strided_slice %248 {offsets = [0, 384], sizes = [2, 128], strides = [1, 1]} : vector<2x512xf32> to vector<2x128xf32>
    %258 = math.tanh %257 : vector<2x128xf32>
    %259 = vector.extract_strided_slice %256 {offsets = [0, 0], sizes = [2, 128], strides = [1, 1]} : vector<2x384xf32> to vector<2x128xf32>
    %260 = vector.extract_strided_slice %256 {offsets = [0, 128], sizes = [2, 128], strides = [1, 1]} : vector<2x384xf32> to vector<2x128xf32>
    %261 = vector.extract_strided_slice %256 {offsets = [0, 256], sizes = [2, 128], strides = [1, 1]} : vector<2x384xf32> to vector<2x128xf32>
    %262 = arith.mulf %260, %214 : vector<2x128xf32>
    %263 = arith.mulf %259, %258 : vector<2x128xf32>
    %264 = arith.addf %262, %263 : vector<2x128xf32>
    %265 = math.tanh %264 : vector<2x128xf32>
    %266 = arith.mulf %261, %265 : vector<2x128xf32>
    %c5_i32 = arith.constant 5 : i32
    %267 = arith.index_cast %c5_i32 : i32 to index
    %c0_80 = arith.constant 0 : index
    %c0_81 = arith.constant 0 : index
    %268 = vector.load %arg11[%267, %c0_80, %c0_81] : memref<8x2x16xbf16, #tpu.memory_space<vmem>>, vector<1x2x16xbf16>
    %269 = vector.shape_cast %268 : vector<1x2x16xbf16> to vector<2x16xbf16>
    %270 = arith.truncf %242 : vector<2x128xf32> to vector<2x128xbf16>
    %cst_82 = arith.constant dense<0.000000e+00> : vector<2x512xf32>
    %271 = tpu.matmul %270, %1, %cst_82 {dimension_numbers = #tpu.dot_dimension_numbers<[1], [0], [0], [1], [0, 0, 1, 1], [], []>} : vector<2x128xbf16>, vector<128x512xbf16>, vector<2x512xf32> -> vector<2x512xf32>
    %cst_83 = arith.constant dense<0.000000e+00> : vector<2x512xf32>
    %272 = tpu.matmul %269, %0, %cst_83 {dimension_numbers = #tpu.dot_dimension_numbers<[1], [0], [0], [1], [0, 0, 1, 1], [], []>} : vector<2x16xbf16>, vector<16x512xbf16>, vector<2x512xf32> -> vector<2x512xf32>
    %273 = arith.addf %271, %272 : vector<2x512xf32>
    %274 = arith.addf %273, %6 : vector<2x512xf32>
    %275 = vector.extract_strided_slice %274 {offsets = [0, 0], sizes = [2, 384], strides = [1, 1]} : vector<2x512xf32> to vector<2x384xf32>
    %cst_84 = arith.constant 5.000000e-01 : f32
    %276 = vector.broadcast %cst_84 : f32 to vector<2x384xf32>
    %277 = arith.mulf %276, %275 : vector<2x384xf32>
    %278 = math.tanh %277 : vector<2x384xf32>
    %cst_85 = arith.constant 5.000000e-01 : f32
    %279 = vector.broadcast %cst_85 : f32 to vector<2x384xf32>
    %280 = arith.mulf %279, %278 : vector<2x384xf32>
    %cst_86 = arith.constant 5.000000e-01 : f32
    %281 = vector.broadcast %cst_86 : f32 to vector<2x384xf32>
    %282 = arith.addf %280, %281 : vector<2x384xf32>
    %283 = vector.extract_strided_slice %274 {offsets = [0, 384], sizes = [2, 128], strides = [1, 1]} : vector<2x512xf32> to vector<2x128xf32>
    %284 = math.tanh %283 : vector<2x128xf32>
    %285 = vector.extract_strided_slice %282 {offsets = [0, 0], sizes = [2, 128], strides = [1, 1]} : vector<2x384xf32> to vector<2x128xf32>
    %286 = vector.extract_strided_slice %282 {offsets = [0, 128], sizes = [2, 128], strides = [1, 1]} : vector<2x384xf32> to vector<2x128xf32>
    %287 = vector.extract_strided_slice %282 {offsets = [0, 256], sizes = [2, 128], strides = [1, 1]} : vector<2x384xf32> to vector<2x128xf32>
    %288 = arith.mulf %286, %240 : vector<2x128xf32>
    %289 = arith.mulf %285, %284 : vector<2x128xf32>
    %290 = arith.addf %288, %289 : vector<2x128xf32>
    %291 = math.tanh %290 : vector<2x128xf32>
    %292 = arith.mulf %287, %291 : vector<2x128xf32>
    %293 = arith.truncf %266 : vector<2x128xf32> to vector<2x128xbf16>
    %cst_87 = arith.constant dense<0.000000e+00> : vector<2x512xf32>
    %294 = tpu.matmul %293, %3, %cst_87 {dimension_numbers = #tpu.dot_dimension_numbers<[1], [0], [0], [1], [0, 0, 1, 1], [], []>} : vector<2x128xbf16>, vector<128x512xbf16>, vector<2x512xf32> -> vector<2x512xf32>
    %295 = arith.truncf %292 : vector<2x128xf32> to vector<2x128xbf16>
    %cst_88 = arith.constant dense<0.000000e+00> : vector<2x512xf32>
    %296 = tpu.matmul %295, %2, %cst_88 {dimension_numbers = #tpu.dot_dimension_numbers<[1], [0], [0], [1], [0, 0, 1, 1], [], []>} : vector<2x128xbf16>, vector<128x512xbf16>, vector<2x512xf32> -> vector<2x512xf32>
    %297 = arith.addf %294, %296 : vector<2x512xf32>
    %298 = arith.addf %297, %9 : vector<2x512xf32>
    %299 = vector.extract_strided_slice %298 {offsets = [0, 0], sizes = [2, 384], strides = [1, 1]} : vector<2x512xf32> to vector<2x384xf32>
    %cst_89 = arith.constant 5.000000e-01 : f32
    %300 = vector.broadcast %cst_89 : f32 to vector<2x384xf32>
    %301 = arith.mulf %300, %299 : vector<2x384xf32>
    %302 = math.tanh %301 : vector<2x384xf32>
    %cst_90 = arith.constant 5.000000e-01 : f32
    %303 = vector.broadcast %cst_90 : f32 to vector<2x384xf32>
    %304 = arith.mulf %303, %302 : vector<2x384xf32>
    %cst_91 = arith.constant 5.000000e-01 : f32
    %305 = vector.broadcast %cst_91 : f32 to vector<2x384xf32>
    %306 = arith.addf %304, %305 : vector<2x384xf32>
    %307 = vector.extract_strided_slice %298 {offsets = [0, 384], sizes = [2, 128], strides = [1, 1]} : vector<2x512xf32> to vector<2x128xf32>
    %308 = math.tanh %307 : vector<2x128xf32>
    %309 = vector.extract_strided_slice %306 {offsets = [0, 0], sizes = [2, 128], strides = [1, 1]} : vector<2x384xf32> to vector<2x128xf32>
    %310 = vector.extract_strided_slice %306 {offsets = [0, 128], sizes = [2, 128], strides = [1, 1]} : vector<2x384xf32> to vector<2x128xf32>
    %311 = vector.extract_strided_slice %306 {offsets = [0, 256], sizes = [2, 128], strides = [1, 1]} : vector<2x384xf32> to vector<2x128xf32>
    %312 = arith.mulf %310, %264 : vector<2x128xf32>
    %313 = arith.mulf %309, %308 : vector<2x128xf32>
    %314 = arith.addf %312, %313 : vector<2x128xf32>
    %315 = math.tanh %314 : vector<2x128xf32>
    %316 = arith.mulf %311, %315 : vector<2x128xf32>
    %c6_i32 = arith.constant 6 : i32
    %317 = arith.index_cast %c6_i32 : i32 to index
    %c0_92 = arith.constant 0 : index
    %c0_93 = arith.constant 0 : index
    %318 = vector.load %arg11[%317, %c0_92, %c0_93] : memref<8x2x16xbf16, #tpu.memory_space<vmem>>, vector<1x2x16xbf16>
    %319 = vector.shape_cast %318 : vector<1x2x16xbf16> to vector<2x16xbf16>
    %320 = arith.truncf %292 : vector<2x128xf32> to vector<2x128xbf16>
    %cst_94 = arith.constant dense<0.000000e+00> : vector<2x512xf32>
    %321 = tpu.matmul %320, %1, %cst_94 {dimension_numbers = #tpu.dot_dimension_numbers<[1], [0], [0], [1], [0, 0, 1, 1], [], []>} : vector<2x128xbf16>, vector<128x512xbf16>, vector<2x512xf32> -> vector<2x512xf32>
    %cst_95 = arith.constant dense<0.000000e+00> : vector<2x512xf32>
    %322 = tpu.matmul %319, %0, %cst_95 {dimension_numbers = #tpu.dot_dimension_numbers<[1], [0], [0], [1], [0, 0, 1, 1], [], []>} : vector<2x16xbf16>, vector<16x512xbf16>, vector<2x512xf32> -> vector<2x512xf32>
    %323 = arith.addf %321, %322 : vector<2x512xf32>
    %324 = arith.addf %323, %6 : vector<2x512xf32>
    %325 = vector.extract_strided_slice %324 {offsets = [0, 0], sizes = [2, 384], strides = [1, 1]} : vector<2x512xf32> to vector<2x384xf32>
    %cst_96 = arith.constant 5.000000e-01 : f32
    %326 = vector.broadcast %cst_96 : f32 to vector<2x384xf32>
    %327 = arith.mulf %326, %325 : vector<2x384xf32>
    %328 = math.tanh %327 : vector<2x384xf32>
    %cst_97 = arith.constant 5.000000e-01 : f32
    %329 = vector.broadcast %cst_97 : f32 to vector<2x384xf32>
    %330 = arith.mulf %329, %328 : vector<2x384xf32>
    %cst_98 = arith.constant 5.000000e-01 : f32
    %331 = vector.broadcast %cst_98 : f32 to vector<2x384xf32>
    %332 = arith.addf %330, %331 : vector<2x384xf32>
    %333 = vector.extract_strided_slice %324 {offsets = [0, 384], sizes = [2, 128], strides = [1, 1]} : vector<2x512xf32> to vector<2x128xf32>
    %334 = math.tanh %333 : vector<2x128xf32>
    %335 = vector.extract_strided_slice %332 {offsets = [0, 0], sizes = [2, 128], strides = [1, 1]} : vector<2x384xf32> to vector<2x128xf32>
    %336 = vector.extract_strided_slice %332 {offsets = [0, 128], sizes = [2, 128], strides = [1, 1]} : vector<2x384xf32> to vector<2x128xf32>
    %337 = vector.extract_strided_slice %332 {offsets = [0, 256], sizes = [2, 128], strides = [1, 1]} : vector<2x384xf32> to vector<2x128xf32>
    %338 = arith.mulf %336, %290 : vector<2x128xf32>
    %339 = arith.mulf %335, %334 : vector<2x128xf32>
    %340 = arith.addf %338, %339 : vector<2x128xf32>
    %341 = math.tanh %340 : vector<2x128xf32>
    %342 = arith.mulf %337, %341 : vector<2x128xf32>
    %343 = arith.truncf %316 : vector<2x128xf32> to vector<2x128xbf16>
    %cst_99 = arith.constant dense<0.000000e+00> : vector<2x512xf32>
    %344 = tpu.matmul %343, %3, %cst_99 {dimension_numbers = #tpu.dot_dimension_numbers<[1], [0], [0], [1], [0, 0, 1, 1], [], []>} : vector<2x128xbf16>, vector<128x512xbf16>, vector<2x512xf32> -> vector<2x512xf32>
    %345 = arith.truncf %342 : vector<2x128xf32> to vector<2x128xbf16>
    %cst_100 = arith.constant dense<0.000000e+00> : vector<2x512xf32>
    %346 = tpu.matmul %345, %2, %cst_100 {dimension_numbers = #tpu.dot_dimension_numbers<[1], [0], [0], [1], [0, 0, 1, 1], [], []>} : vector<2x128xbf16>, vector<128x512xbf16>, vector<2x512xf32> -> vector<2x512xf32>
    %347 = arith.addf %344, %346 : vector<2x512xf32>
    %348 = arith.addf %347, %9 : vector<2x512xf32>
    %349 = vector.extract_strided_slice %348 {offsets = [0, 0], sizes = [2, 384], strides = [1, 1]} : vector<2x512xf32> to vector<2x384xf32>
    %cst_101 = arith.constant 5.000000e-01 : f32
    %350 = vector.broadcast %cst_101 : f32 to vector<2x384xf32>
    %351 = arith.mulf %350, %349 : vector<2x384xf32>
    %352 = math.tanh %351 : vector<2x384xf32>
    %cst_102 = arith.constant 5.000000e-01 : f32
    %353 = vector.broadcast %cst_102 : f32 to vector<2x384xf32>
    %354 = arith.mulf %353, %352 : vector<2x384xf32>
    %cst_103 = arith.constant 5.000000e-01 : f32
    %355 = vector.broadcast %cst_103 : f32 to vector<2x384xf32>
    %356 = arith.addf %354, %355 : vector<2x384xf32>
    %357 = vector.extract_strided_slice %348 {offsets = [0, 384], sizes = [2, 128], strides = [1, 1]} : vector<2x512xf32> to vector<2x128xf32>
    %358 = math.tanh %357 : vector<2x128xf32>
    %359 = vector.extract_strided_slice %356 {offsets = [0, 0], sizes = [2, 128], strides = [1, 1]} : vector<2x384xf32> to vector<2x128xf32>
    %360 = vector.extract_strided_slice %356 {offsets = [0, 128], sizes = [2, 128], strides = [1, 1]} : vector<2x384xf32> to vector<2x128xf32>
    %361 = vector.extract_strided_slice %356 {offsets = [0, 256], sizes = [2, 128], strides = [1, 1]} : vector<2x384xf32> to vector<2x128xf32>
    %362 = arith.mulf %360, %314 : vector<2x128xf32>
    %363 = arith.mulf %359, %358 : vector<2x128xf32>
    %364 = arith.addf %362, %363 : vector<2x128xf32>
    %365 = math.tanh %364 : vector<2x128xf32>
    %366 = arith.mulf %361, %365 : vector<2x128xf32>
    %c7_i32 = arith.constant 7 : i32
    %367 = arith.index_cast %c7_i32 : i32 to index
    %c0_104 = arith.constant 0 : index
    %c0_105 = arith.constant 0 : index
    %368 = vector.load %arg11[%367, %c0_104, %c0_105] : memref<8x2x16xbf16, #tpu.memory_space<vmem>>, vector<1x2x16xbf16>
    %369 = vector.shape_cast %368 : vector<1x2x16xbf16> to vector<2x16xbf16>
    %370 = arith.truncf %342 : vector<2x128xf32> to vector<2x128xbf16>
    %cst_106 = arith.constant dense<0.000000e+00> : vector<2x512xf32>
    %371 = tpu.matmul %370, %1, %cst_106 {dimension_numbers = #tpu.dot_dimension_numbers<[1], [0], [0], [1], [0, 0, 1, 1], [], []>} : vector<2x128xbf16>, vector<128x512xbf16>, vector<2x512xf32> -> vector<2x512xf32>
    %cst_107 = arith.constant dense<0.000000e+00> : vector<2x512xf32>
    %372 = tpu.matmul %369, %0, %cst_107 {dimension_numbers = #tpu.dot_dimension_numbers<[1], [0], [0], [1], [0, 0, 1, 1], [], []>} : vector<2x16xbf16>, vector<16x512xbf16>, vector<2x512xf32> -> vector<2x512xf32>
    %373 = arith.addf %371, %372 : vector<2x512xf32>
    %374 = arith.addf %373, %6 : vector<2x512xf32>
    %375 = vector.extract_strided_slice %374 {offsets = [0, 0], sizes = [2, 384], strides = [1, 1]} : vector<2x512xf32> to vector<2x384xf32>
    %cst_108 = arith.constant 5.000000e-01 : f32
    %376 = vector.broadcast %cst_108 : f32 to vector<2x384xf32>
    %377 = arith.mulf %376, %375 : vector<2x384xf32>
    %378 = math.tanh %377 : vector<2x384xf32>
    %cst_109 = arith.constant 5.000000e-01 : f32
    %379 = vector.broadcast %cst_109 : f32 to vector<2x384xf32>
    %380 = arith.mulf %379, %378 : vector<2x384xf32>
    %cst_110 = arith.constant 5.000000e-01 : f32
    %381 = vector.broadcast %cst_110 : f32 to vector<2x384xf32>
    %382 = arith.addf %380, %381 : vector<2x384xf32>
    %383 = vector.extract_strided_slice %374 {offsets = [0, 384], sizes = [2, 128], strides = [1, 1]} : vector<2x512xf32> to vector<2x128xf32>
    %384 = math.tanh %383 : vector<2x128xf32>
    %385 = vector.extract_strided_slice %382 {offsets = [0, 0], sizes = [2, 128], strides = [1, 1]} : vector<2x384xf32> to vector<2x128xf32>
    %386 = vector.extract_strided_slice %382 {offsets = [0, 128], sizes = [2, 128], strides = [1, 1]} : vector<2x384xf32> to vector<2x128xf32>
    %387 = vector.extract_strided_slice %382 {offsets = [0, 256], sizes = [2, 128], strides = [1, 1]} : vector<2x384xf32> to vector<2x128xf32>
    %388 = arith.mulf %386, %340 : vector<2x128xf32>
    %389 = arith.mulf %385, %384 : vector<2x128xf32>
    %390 = arith.addf %388, %389 : vector<2x128xf32>
    %391 = math.tanh %390 : vector<2x128xf32>
    %392 = arith.mulf %387, %391 : vector<2x128xf32>
    %393 = arith.truncf %366 : vector<2x128xf32> to vector<2x128xbf16>
    %cst_111 = arith.constant dense<0.000000e+00> : vector<2x512xf32>
    %394 = tpu.matmul %393, %3, %cst_111 {dimension_numbers = #tpu.dot_dimension_numbers<[1], [0], [0], [1], [0, 0, 1, 1], [], []>} : vector<2x128xbf16>, vector<128x512xbf16>, vector<2x512xf32> -> vector<2x512xf32>
    %395 = arith.truncf %392 : vector<2x128xf32> to vector<2x128xbf16>
    %cst_112 = arith.constant dense<0.000000e+00> : vector<2x512xf32>
    %396 = tpu.matmul %395, %2, %cst_112 {dimension_numbers = #tpu.dot_dimension_numbers<[1], [0], [0], [1], [0, 0, 1, 1], [], []>} : vector<2x128xbf16>, vector<128x512xbf16>, vector<2x512xf32> -> vector<2x512xf32>
    %397 = arith.addf %394, %396 : vector<2x512xf32>
    %398 = arith.addf %397, %9 : vector<2x512xf32>
    %399 = vector.extract_strided_slice %398 {offsets = [0, 0], sizes = [2, 384], strides = [1, 1]} : vector<2x512xf32> to vector<2x384xf32>
    %cst_113 = arith.constant 5.000000e-01 : f32
    %400 = vector.broadcast %cst_113 : f32 to vector<2x384xf32>
    %401 = arith.mulf %400, %399 : vector<2x384xf32>
    %402 = math.tanh %401 : vector<2x384xf32>
    %cst_114 = arith.constant 5.000000e-01 : f32
    %403 = vector.broadcast %cst_114 : f32 to vector<2x384xf32>
    %404 = arith.mulf %403, %402 : vector<2x384xf32>
    %cst_115 = arith.constant 5.000000e-01 : f32
    %405 = vector.broadcast %cst_115 : f32 to vector<2x384xf32>
    %406 = arith.addf %404, %405 : vector<2x384xf32>
    %407 = vector.extract_strided_slice %398 {offsets = [0, 384], sizes = [2, 128], strides = [1, 1]} : vector<2x512xf32> to vector<2x128xf32>
    %408 = math.tanh %407 : vector<2x128xf32>
    %409 = vector.extract_strided_slice %406 {offsets = [0, 0], sizes = [2, 128], strides = [1, 1]} : vector<2x384xf32> to vector<2x128xf32>
    %410 = vector.extract_strided_slice %406 {offsets = [0, 128], sizes = [2, 128], strides = [1, 1]} : vector<2x384xf32> to vector<2x128xf32>
    %411 = vector.extract_strided_slice %406 {offsets = [0, 256], sizes = [2, 128], strides = [1, 1]} : vector<2x384xf32> to vector<2x128xf32>
    %412 = arith.mulf %410, %364 : vector<2x128xf32>
    %413 = arith.mulf %409, %408 : vector<2x128xf32>
    %414 = arith.addf %412, %413 : vector<2x128xf32>
    %415 = math.tanh %414 : vector<2x128xf32>
    %416 = arith.mulf %411, %415 : vector<2x128xf32>
    %c8_i32 = arith.constant 8 : i32
    %417 = vector.extract_strided_slice %416 {offsets = [0, 0], sizes = [2, 16], strides = [1, 1]} : vector<2x128xf32> to vector<2x16xf32>
    %418 = tpu.concatenate %417, %417, %417, %417, %417, %417, %417, %417 in 0 : vector<2x16xf32>, vector<2x16xf32>, vector<2x16xf32>, vector<2x16xf32>, vector<2x16xf32>, vector<2x16xf32>, vector<2x16xf32>, vector<2x16xf32> -> vector<16x16xf32>
    %c0_116 = arith.constant 0 : index
    %c0_117 = arith.constant 0 : index
    %419 = vector.load %arg1[%c0_116, %c0_117] : memref<16x16xf32, #tpu.memory_space<vmem>>, vector<16x16xf32>
    %420 = arith.addf %419, %418 : vector<16x16xf32>
    %cst_118 = arith.constant 0.000000e+00 : f32
    %421 = vector.broadcast %cst_118 : f32 to vector<16x16xf32>
    %422 = arith.maximumf %420, %421 : vector<16x16xf32>
    %c0_119 = arith.constant 0 : index
    %c0_120 = arith.constant 0 : index
    %423 = vector.load %arg8[%c0_119, %c0_120] : memref<16x16xf32, #tpu.memory_space<vmem>>, vector<16x16xf32>
    %cst_121 = arith.constant dense<0.000000e+00> : vector<16x16xf32>
    %424 = tpu.matmul %422, %423, %cst_121 {dimension_numbers = #tpu.dot_dimension_numbers<[1], [0], [0], [1], [0, 0, 1, 1], [], []>} : vector<16x16xf32>, vector<16x16xf32>, vector<16x16xf32> -> vector<16x16xf32>
    %c0_122 = arith.constant 0 : index
    %c0_123 = arith.constant 0 : index
    %425 = vector.load %arg9[%c0_122, %c0_123] : memref<1x16xf32, #tpu.memory_space<vmem>>, vector<1x16xf32>
    %426 = vector.broadcast %425 : vector<1x16xf32> to vector<16x16xf32>
    %427 = arith.addf %424, %426 : vector<16x16xf32>
    %c0_124 = arith.constant 0 : index
    %c0_125 = arith.constant 0 : index
    %428 = vector.load %arg10[%c0_124, %c0_125] : memref<16x16xf32, #tpu.memory_space<vmem>>, vector<16x16xf32>
    tpu.vector_store %arg10[%c0_124, %c0_125], %427 {strides = array<i32>} : memref<16x16xf32, #tpu.memory_space<vmem>>, vector<16x16xf32>,
    return
  }
}

</mosaic_0001>

<llo_original>
// kernel: tpu_custom_call.1
$region0: #{tpu_custom_call.1}
  #allocation0 [shape = 'u32[]', space=smem, size = 0x4, offset = 0x4, fixed_abs, tag = 'smem constant byte address 0x4 - core index']
  #allocation1 [shape = 'u32[144,128]{1,0:T(1,128)}', space=vmem, size = 0x12000, scoped, tag = 'internal scratch']
  #allocation2 [shape = 'bf16[8,2,16]{2,1,0:T(2,128)(2,1)}', space=vmem, size = 0x1000, scoped, tag = 'scratch operand']
  %s0 = inlined_call_operand.hbm [shape: f32[8,2,16], index: 0, kind: input, shape index: {}]
  %s1 = inlined_call_operand.hbm [shape: f32[16,16], index: 1, kind: input, shape index: {}]
  %s2 = inlined_call_operand.hbm [shape: bf16[16,512], index: 2, kind: input, shape index: {}]
  %s3 = inlined_call_operand.hbm [shape: bf16[128,512], index: 3, kind: input, shape index: {}]
  %s4 = inlined_call_operand.vmem [shape: f32[1,512], index: 4, kind: input, shape index: {}]
  %s5 = inlined_call_operand.hbm [shape: bf16[128,512], index: 5, kind: input, shape index: {}]
  %s6 = inlined_call_operand.hbm [shape: bf16[128,512], index: 6, kind: input, shape index: {}]
  %s7 = inlined_call_operand.vmem [shape: f32[1,512], index: 7, kind: input, shape index: {}]
  %s8 = inlined_call_operand.vmem [shape: f32[16,16], index: 8, kind: input, shape index: {}]
  %s9 = inlined_call_operand.vmem [shape: f32[1,16], index: 9, kind: input, shape index: {}]
  %s10 = inlined_call_operand.hbm [shape: f32[16,16], index: 10, kind: output, shape index: {}]
  %s11 = sld [smem:[#allocation0]]
  $region74: #{tpu_custom_call.1} parent=0
    _
  %s13 = ssub.s32 1, %s11
  %s14 = scalar_select 0, %s13, %s11
  $region1: #{tpu_custom_call.1} parent=0
    #allocation3 [shape = 'u8[8192]{0}', space=vmem, size = 0x2000, scoped, tag = 'input window, operand 0, single buffered']
    #allocation4 [shape = 's32[1]{0}', space=sflag, size = 0x4, scoped, tag = 'scoped memory for tpu_custom_call.1']
    #allocation5 [shape = 's32[1]{0}', space=sflag, size = 0x4, scoped, tag = 'scoped memory for tpu_custom_call.1']
    #allocation6 [shape = 'u8[8192]{0}', space=vmem, size = 0x2000, scoped, tag = 'input window, operand 1, single buffered']
    #allocation7 [shape = 's32[1]{0}', space=sflag, size = 0x4, scoped, tag = 'scoped memory for tpu_custom_call.1']
    #allocation8 [shape = 'u8[16384]{0}', space=vmem, size = 0x4000, scoped, tag = 'input window, operand 2, single buffered']
    #allocation9 [shape = 'u8[131072]{0}', space=vmem, size = 0x20000, scoped, tag = 'input window, operand 3, single buffered']
    #allocation10 [shape = 's32[1]{0}', space=sflag, size = 0x4, scoped, tag = 'scoped memory for tpu_custom_call.1']
    #allocation11 [shape = 'u8[131072]{0}', space=vmem, size = 0x20000, scoped, tag = 'input window, operand 5, single buffered']
    #allocation12 [shape = 'u8[131072]{0}', space=vmem, size = 0x20000, scoped, tag = 'input window, operand 6, single buffered']
    #allocation13 [shape = 's32[1]{0}', space=sflag, size = 0x4, scoped, tag = 'scoped memory for tpu_custom_call.1']
    #allocation14 [shape = 'u8[8192]{0}', space=vmem, size = 0x2000, scoped, tag = 'output window, operand 0, single buffered']
    %15 = vsyncpa [#allocation4], 0
    %16 = vsyncpa [#allocation7], 0
    %17 = vsyncpa [#allocation10], 0
    %18 = vsyncpa [#allocation13], 0
    %19 = vsyncpa [#allocation5], 0
    // Predicated region
    $region2: #{tpu_custom_call.1} parent=1 // pred_check
      _
    $region3: #{tpu_custom_call.1} parent=1 // pred_check_branch
      %21 = sbr.rel (0) target = $region5
    $region4: #{tpu_custom_call.1} parent=1 // pred_region
      %s23 = ssub.s32 256, 256
      %24 = vsyncadd [#allocation4], %s23
      %s25 = sshll.u32 [#allocation3], 4
      %s26 = int_to_ptr.vmem [resolvable:$true] %s25
      %31 = dma.hbm_to_vmem [thread:$0]  %s0, 256, %s26, [#allocation4], 32, 32, 2
    $region5: #{tpu_custom_call.1} parent=1 // pred_fallthru
      _
    // Predicated region
    $region6: #{tpu_custom_call.1} parent=1 // pred_check
      _
    $region7: #{tpu_custom_call.1} parent=1 // pred_check_branch
      %33 = sbr.rel (0) target = $region9
    $region8: #{tpu_custom_call.1} parent=1 // pred_region
      %s35 = ssub.s32 256, 256
      %36 = vsyncadd [#allocation7], %s35
      %s37 = sshll.u32 [#allocation6], 4
      %s38 = int_to_ptr.vmem [resolvable:$true] %s37
      %43 = dma.hbm_to_vmem [thread:$0]  %s1, 256, %s38, [#allocation7], 128, 128, 8
    $region9: #{tpu_custom_call.1} parent=1 // pred_fallthru
      _
    // Predicated region
    $region10: #{tpu_custom_call.1} parent=1 // pred_check
      _
    $region11: #{tpu_custom_call.1} parent=1 // pred_check_branch
      %45 = sbr.rel (0) target = $region13
    $region12: #{tpu_custom_call.1} parent=1 // pred_region
      %s47 = ssub.s32 512, 512
      %48 = vsyncadd [#allocation7], %s47
      %s49 = sshll.u32 [#allocation8], 4
      %s50 = int_to_ptr.vmem [resolvable:$true] %s49
      %55 = dma.hbm_to_vmem [thread:$0]  %s2, 512, %s50, [#allocation7], 256, 256, 16
    $region13: #{tpu_custom_call.1} parent=1 // pred_fallthru
      _
    // Predicated region
    $region14: #{tpu_custom_call.1} parent=1 // pred_check
      _
    $region15: #{tpu_custom_call.1} parent=1 // pred_check_branch
      %57 = sbr.rel (0) target = $region17
    $region16: #{tpu_custom_call.1} parent=1 // pred_region
      %s59 = ssub.s32 4096, 4096
      %60 = vsyncadd [#allocation10], %s59
      %s61 = sshll.u32 [#allocation9], 4
      %s62 = int_to_ptr.vmem [resolvable:$true] %s61
      %67 = dma.hbm_to_vmem [thread:$0]  %s3, 4096, %s62, [#allocation10], 256, 256, 16
    $region17: #{tpu_custom_call.1} parent=1 // pred_fallthru
      _
    // Predicated region
    $region18: #{tpu_custom_call.1} parent=1 // pred_check
      _
    $region19: #{tpu_custom_call.1} parent=1 // pred_check_branch
      %69 = sbr.rel (0) target = $region21
    $region20: #{tpu_custom_call.1} parent=1 // pred_region
      _
    $region21: #{tpu_custom_call.1} parent=1 // pred_fallthru
      _
    // Predicated region
    $region22: #{tpu_custom_call.1} parent=1 // pred_check
      _
    $region23: #{tpu_custom_call.1} parent=1 // pred_check_branch
      %71 = sbr.rel (0) target = $region25
    $region24: #{tpu_custom_call.1} parent=1 // pred_region
      %s73 = ssub.s32 4096, 4096
      %74 = vsyncadd [#allocation10], %s73
      %s75 = sshll.u32 [#allocation11], 4
      %s76 = int_to_ptr.vmem [resolvable:$true] %s75
      %81 = dma.hbm_to_vmem [thread:$0]  %s5, 4096, %s76, [#allocation10], 256, 256, 16
    $region25: #{tpu_custom_call.1} parent=1 // pred_fallthru
      _
    // Predicated region
    $region26: #{tpu_custom_call.1} parent=1 // pred_check
      _
    $region27: #{tpu_custom_call.1} parent=1 // pred_check_branch
      %83 = sbr.rel (0) target = $region29
    $region28: #{tpu_custom_call.1} parent=1 // pred_region
      %s85 = ssub.s32 4096, 4096
      %86 = vsyncadd [#allocation13], %s85
      %s87 = sshll.u32 [#allocation12], 4
      %s88 = int_to_ptr.vmem [resolvable:$true] %s87
      %93 = dma.hbm_to_vmem [thread:$0]  %s6, 4096, %s88, [#allocation13], 256, 256, 16
    $region29: #{tpu_custom_call.1} parent=1 // pred_fallthru
      _
    // Predicated region
    $region30: #{tpu_custom_call.1} parent=1 // pred_check
      _
    $region31: #{tpu_custom_call.1} parent=1 // pred_check_branch
      %95 = sbr.rel (0) target = $region33
    $region32: #{tpu_custom_call.1} parent=1 // pred_region
      _
    $region33: #{tpu_custom_call.1} parent=1 // pred_fallthru
      _
    // Predicated region
    $region34: #{tpu_custom_call.1} parent=1 // pred_check
      _
    $region35: #{tpu_custom_call.1} parent=1 // pred_check_branch
      %97 = sbr.rel (0) target = $region37
    $region36: #{tpu_custom_call.1} parent=1 // pred_region
      _
    $region37: #{tpu_custom_call.1} parent=1 // pred_fallthru
      _
    // Predicated region
    $region38: #{tpu_custom_call.1} parent=1 // pred_check
      _
    $region39: #{tpu_custom_call.1} parent=1 // pred_check_branch
      %99 = sbr.rel (0) target = $region41
    $region40: #{tpu_custom_call.1} parent=1 // pred_region
      _
    $region41: #{tpu_custom_call.1} parent=1 // pred_fallthru
      _
    // Predicated region
    $region42: #{tpu_custom_call.1} parent=1 // pred_check
      _
    $region43: #{tpu_custom_call.1} parent=1 // pred_check_branch
      %101 = sbr.rel (0) target = $region45
    $region44: #{tpu_custom_call.1} parent=1 // pred_region
      %102 = dma.done [#allocation4], 256
    $region45: #{tpu_custom_call.1} parent=1 // pred_fallthru
      _
    // Predicated region
    $region46: #{tpu_custom_call.1} parent=1 // pred_check
      _
    $region47: #{tpu_custom_call.1} parent=1 // pred_check_branch
      %104 = sbr.rel (0) target = $region49
    $region48: #{tpu_custom_call.1} parent=1 // pred_region
      %105 = dma.done [#allocation7], 256
    $region49: #{tpu_custom_call.1} parent=1 // pred_fallthru
      _
    // Predicated region
    $region50: #{tpu_custom_call.1} parent=1 // pred_check
      _
    $region51: #{tpu_custom_call.1} parent=1 // pred_check_branch
      %107 = sbr.rel (0) target = $region53
    $region52: #{tpu_custom_call.1} parent=1 // pred_region
      %108 = dma.done [#allocation7], 512
    $region53: #{tpu_custom_call.1} parent=1 // pred_fallthru
      _
    // Predicated region
    $region54: #{tpu_custom_call.1} parent=1 // pred_check
      _
    $region55: #{tpu_custom_call.1} parent=1 // pred_check_branch
      %110 = sbr.rel (0) target = $region57
    $region56: #{tpu_custom_call.1} parent=1 // pred_region
      %111 = dma.done [#allocation10], 4096
    $region57: #{tpu_custom_call.1} parent=1 // pred_fallthru
      _
    // Predicated region
    $region58: #{tpu_custom_call.1} parent=1 // pred_check
      _
    $region59: #{tpu_custom_call.1} parent=1 // pred_check_branch
      %113 = sbr.rel (0) target = $region61
    $region60: #{tpu_custom_call.1} parent=1 // pred_region
      %114 = dma.done [#allocation10], 4096
    $region61: #{tpu_custom_call.1} parent=1 // pred_fallthru
      _
    // Predicated region
    $region62: #{tpu_custom_call.1} parent=1 // pred_check
      _
    $region63: #{tpu_custom_call.1} parent=1 // pred_check_branch
      %116 = sbr.rel (0) target = $region65
    $region64: #{tpu_custom_call.1} parent=1 // pred_region
      %117 = dma.done [#allocation13], 4096
    $region65: #{tpu_custom_call.1} parent=1 // pred_fallthru
      _
    %v119 = vld [vmem:[#allocation8] sm:$0xff]
    %v120 = vld [vmem:[#allocation8 + $0x8] sm:$0xff]
    %v121 = vld [vmem:[#allocation8 + $0x10] sm:$0xff]
    %v122 = vld [vmem:[#allocation8 + $0x18] sm:$0xff]
    %v123 = vld [vmem:[#allocation9] sm:$0xff]
    %v124 = vld [vmem:[#allocation9 + $0x8] sm:$0xff]
    %v125 = vld [vmem:[#allocation9 + $0x10] sm:$0xff]
    %v126 = vld [vmem:[#allocation9 + $0x18] sm:$0xff]
    %v127 = vld [vmem:[#allocation9 + $0x20] sm:$0xff]
    %v128 = vld [vmem:[#allocation9 + $0x28] sm:$0xff]
    %v129 = vld [vmem:[#allocation9 + $0x30] sm:$0xff]
    %v130 = vld [vmem:[#allocation9 + $0x38] sm:$0xff]
    %v131 = vld [vmem:[#allocation9 + $0x40] sm:$0xff]
    %v132 = vld [vmem:[#allocation9 + $0x48] sm:$0xff]
    %v133 = vld [vmem:[#allocation9 + $0x50] sm:$0xff]
    %v134 = vld [vmem:[#allocation9 + $0x58] sm:$0xff]
    %v135 = vld [vmem:[#allocation9 + $0x60] sm:$0xff]
    %v136 = vld [vmem:[#allocation9 + $0x68] sm:$0xff]
    %v137 = vld [vmem:[#allocation9 + $0x70] sm:$0xff]
    %v138 = vld [vmem:[#allocation9 + $0x78] sm:$0xff]
    %v139 = vld [vmem:[#allocation9 + $0x80] sm:$0xff]
    %v140 = vld [vmem:[#allocation9 + $0x88] sm:$0xff]
    %v141 = vld [vmem:[#allocation9 + $0x90] sm:$0xff]
    %v142 = vld [vmem:[#allocation9 + $0x98] sm:$0xff]
    %v143 = vld [vmem:[#allocation9 + $0xa0] sm:$0xff]
    %v144 = vld [vmem:[#allocation9 + $0xa8] sm:$0xff]
    %v145 = vld [vmem:[#allocation9 + $0xb0] sm:$0xff]
    %v146 = vld [vmem:[#allocation9 + $0xb8] sm:$0xff]
    %v147 = vld [vmem:[#allocation9 + $0xc0] sm:$0xff]
    %v148 = vld [vmem:[#allocation9 + $0xc8] sm:$0xff]
    %v149 = vld [vmem:[#allocation9 + $0xd0] sm:$0xff]
    %v150 = vld [vmem:[#allocation9 + $0xd8] sm:$0xff]
    %v151 = vld [vmem:[#allocation9 + $0xe0] sm:$0xff]
    %v152 = vld [vmem:[#allocation9 + $0xe8] sm:$0xff]
    %v153 = vld [vmem:[#allocation9 + $0xf0] sm:$0xff]
    %v154 = vld [vmem:[#allocation9 + $0xf8] sm:$0xff]
    %v155 = vld [vmem:[#allocation11] sm:$0xff]
    %v156 = vld [vmem:[#allocation11 + $0x8] sm:$0xff]
    %v157 = vld [vmem:[#allocation11 + $0x10] sm:$0xff]
    %v158 = vld [vmem:[#allocation11 + $0x18] sm:$0xff]
    %v159 = vld [vmem:[#allocation11 + $0x20] sm:$0xff]
    %v160 = vld [vmem:[#allocation11 + $0x28] sm:$0xff]
    %v161 = vld [vmem:[#allocation11 + $0x30] sm:$0xff]
    %v162 = vld [vmem:[#allocation11 + $0x38] sm:$0xff]
    %v163 = vld [vmem:[#allocation11 + $0x40] sm:$0xff]
    %v164 = vld [vmem:[#allocation11 + $0x48] sm:$0xff]
    %v165 = vld [vmem:[#allocation11 + $0x50] sm:$0xff]
    %v166 = vld [vmem:[#allocation11 + $0x58] sm:$0xff]
    %v167 = vld [vmem:[#allocation11 + $0x60] sm:$0xff]
    %v168 = vld [vmem:[#allocation11 + $0x68] sm:$0xff]
    %v169 = vld [vmem:[#allocation11 + $0x70] sm:$0xff]
    %v170 = vld [vmem:[#allocation11 + $0x78] sm:$0xff]
    %v171 = vld [vmem:[#allocation11 + $0x80] sm:$0xff]
    %v172 = vld [vmem:[#allocation11 + $0x88] sm:$0xff]
    %v173 = vld [vmem:[#allocation11 + $0x90] sm:$0xff]
    %v174 = vld [vmem:[#allocation11 + $0x98] sm:$0xff]
    %v175 = vld [vmem:[#allocation11 + $0xa0] sm:$0xff]
    %v176 = vld [vmem:[#allocation11 + $0xa8] sm:$0xff]
    %v177 = vld [vmem:[#allocation11 + $0xb0] sm:$0xff]
    %v178 = vld [vmem:[#allocation11 + $0xb8] sm:$0xff]
    %v179 = vld [vmem:[#allocation11 + $0xc0] sm:$0xff]
    %v180 = vld [vmem:[#allocation11 + $0xc8] sm:$0xff]
    %v181 = vld [vmem:[#allocation11 + $0xd0] sm:$0xff]
    %v182 = vld [vmem:[#allocation11 + $0xd8] sm:$0xff]
    %v183 = vld [vmem:[#allocation11 + $0xe0] sm:$0xff]
    %v184 = vld [vmem:[#allocation11 + $0xe8] sm:$0xff]
    %v185 = vld [vmem:[#allocation11 + $0xf0] sm:$0xff]
    %v186 = vld [vmem:[#allocation11 + $0xf8] sm:$0xff]
    %v187 = vld [vmem:[#allocation12] sm:$0xff]
    %v188 = vld [vmem:[#allocation12 + $0x8] sm:$0xff]
    %v189 = vld [vmem:[#allocation12 + $0x10] sm:$0xff]
    %v190 = vld [vmem:[#allocation12 + $0x18] sm:$0xff]
    %v191 = vld [vmem:[#allocation12 + $0x20] sm:$0xff]
    %v192 = vld [vmem:[#allocation12 + $0x28] sm:$0xff]
    %v193 = vld [vmem:[#allocation12 + $0x30] sm:$0xff]
    %v194 = vld [vmem:[#allocation12 + $0x38] sm:$0xff]
    %v195 = vld [vmem:[#allocation12 + $0x40] sm:$0xff]
    %v196 = vld [vmem:[#allocation12 + $0x48] sm:$0xff]
    %v197 = vld [vmem:[#allocation12 + $0x50] sm:$0xff]
    %v198 = vld [vmem:[#allocation12 + $0x58] sm:$0xff]
    %v199 = vld [vmem:[#allocation12 + $0x60] sm:$0xff]
    %v200 = vld [vmem:[#allocation12 + $0x68] sm:$0xff]
    %v201 = vld [vmem:[#allocation12 + $0x70] sm:$0xff]
    %v202 = vld [vmem:[#allocation12 + $0x78] sm:$0xff]
    %v203 = vld [vmem:[#allocation12 + $0x80] sm:$0xff]
    %v204 = vld [vmem:[#allocation12 + $0x88] sm:$0xff]
    %v205 = vld [vmem:[#allocation12 + $0x90] sm:$0xff]
    %v206 = vld [vmem:[#allocation12 + $0x98] sm:$0xff]
    %v207 = vld [vmem:[#allocation12 + $0xa0] sm:$0xff]
    %v208 = vld [vmem:[#allocation12 + $0xa8] sm:$0xff]
    %v209 = vld [vmem:[#allocation12 + $0xb0] sm:$0xff]
    %v210 = vld [vmem:[#allocation12 + $0xb8] sm:$0xff]
    %v211 = vld [vmem:[#allocation12 + $0xc0] sm:$0xff]
    %v212 = vld [vmem:[#allocation12 + $0xc8] sm:$0xff]
    %v213 = vld [vmem:[#allocation12 + $0xd0] sm:$0xff]
    %v214 = vld [vmem:[#allocation12 + $0xd8] sm:$0xff]
    %v215 = vld [vmem:[#allocation12 + $0xe0] sm:$0xff]
    %v216 = vld [vmem:[#allocation12 + $0xe8] sm:$0xff]
    %v217 = vld [vmem:[#allocation12 + $0xf0] sm:$0xff]
    %v218 = vld [vmem:[#allocation12 + $0xf8] sm:$0xff]
    %v219 = vld [vmem:[%s4] sm:$0xf]
    %v221 = vlaneseq
    %v222 = vshrl.u32 %v221, 7
    %v223 = vsub.s32 0, %v222
    %v224 = vrot.slane %v219, %v223
    %v225 = vlaneseq
    %v226 = vshrl.u32 %v225, 7
    %v227 = vsub.s32 1, %v226
    %v228 = vrot.slane %v219, %v227
    %v229 = vlaneseq
    %v230 = vshrl.u32 %v229, 7
    %v231 = vsub.s32 2, %v230
    %v232 = vrot.slane %v219, %v231
    %v233 = vlaneseq
    %v234 = vshrl.u32 %v233, 7
    %v235 = vsub.s32 3, %v234
    %v236 = vrot.slane %v219, %v235
    %v241 = vld [vmem:[%s7] sm:$0xf]
    %v243 = vlaneseq
    %v244 = vshrl.u32 %v243, 7
    %v245 = vsub.s32 0, %v244
    %v246 = vrot.slane %v241, %v245
    %v247 = vlaneseq
    %v248 = vshrl.u32 %v247, 7
    %v249 = vsub.s32 1, %v248
    %v250 = vrot.slane %v241, %v249
    %v251 = vlaneseq
    %v252 = vshrl.u32 %v251, 7
    %v253 = vsub.s32 2, %v252
    %v254 = vrot.slane %v241, %v253
    %v255 = vlaneseq
    %v256 = vshrl.u32 %v255, 7
    %v257 = vsub.s32 3, %v256
    %v258 = vrot.slane %v241, %v257
    %v263 = vld [vmem:[#allocation3] sm:$0x3]
    %v264 = vld [vmem:[#allocation3 + $0x2] sm:$0x3]
    %v265 = vld [vmem:[#allocation3 + $0x4] sm:$0x3]
    %v266 = vld [vmem:[#allocation3 + $0x6] sm:$0x3]
    %v267 = vld [vmem:[#allocation3 + $0x8] sm:$0x3]
    %v268 = vld [vmem:[#allocation3 + $0xa] sm:$0x3]
    %v269 = vld [vmem:[#allocation3 + $0xc] sm:$0x3]
    %v270 = vld [vmem:[#allocation3 + $0xe] sm:$0x3]
    %v271 = vpack.c.bf16 %v263, %v263
    %v272 = vpack.c.bf16 %v264, %v264
    %v273 = vpack.c.bf16 %v265, %v265
    %v274 = vpack.c.bf16 %v266, %v266
    %v275 = vpack.c.bf16 %v267, %v267
    %v276 = vpack.c.bf16 %v268, %v268
    %v277 = vpack.c.bf16 %v269, %v269
    %v278 = vpack.c.bf16 %v270, %v270
    %vm279 = vcmask 122880
    %280 = vst.msk [vmem:[#allocation2] sm:$0x1] %vm279, %v271
    %281 = vst.msk [vmem:[#allocation2 + $0x1] sm:$0x1] %vm279, %v272
    %282 = vst.msk [vmem:[#allocation2 + $0x2] sm:$0x1] %vm279, %v273
    %283 = vst.msk [vmem:[#allocation2 + $0x3] sm:$0x1] %vm279, %v274
    %284 = vst.msk [vmem:[#allocation2 + $0x4] sm:$0x1] %vm279, %v275
    %285 = vst.msk [vmem:[#allocation2 + $0x5] sm:$0x1] %vm279, %v276
    %286 = vst.msk [vmem:[#allocation2 + $0x6] sm:$0x1] %vm279, %v277
    %287 = vst.msk [vmem:[#allocation2 + $0x7] sm:$0x1] %vm279, %v278
    %v288 = vld [vmem:[#allocation2] sm:$0x1]
    %v293 = vunpack.c.l.b16 %v119
    %v294 = vunpack.c.h.b16 %v119
    %v295 = vunpack.c.l.b16 %v120
    %v296 = vunpack.c.h.b16 %v120
    %v297 = vunpack.c.l.b16 %v121
    %v298 = vunpack.c.h.b16 %v121
    %v299 = vunpack.c.l.b16 %v122
    %v300 = vunpack.c.h.b16 %v122
    %v301 = vpack.c.b16 %v297, %v293
    %v302 = vpack.c.b16 %v298, %v294
    %v303 = vpack.c.b16 %v299, %v295
    %v304 = vpack.c.b16 %v300, %v296
    %vm309 = vcmask 130048
    %v311 = vsel %vm309, %v288, 0
    %313 = vmatprep.subr.bf16.mxu0 %v302
    %314 = vmatpush1.bf16.msra.mxu0 %v301
    %315 = vmatprep.subr.bf16.mxu0 0
    %316 = vmatpush1.bf16.msra.mxu0 0
    %317 = vmatprep.subr.bf16.mxu0 0
    %318 = vmatpush1.bf16.msra.mxu0 0
    %319 = vmatprep.subr.bf16.mxu0 0
    %320 = vmatpush1.bf16.msra.mxu0 0
    %321 = vmatprep.subr.bf16.mxu0 0
    %322 = vmatpush1.bf16.msra.mxu0 0
    %323 = vmatprep.subr.bf16.mxu0 0
    %324 = vmatpush1.bf16.msra.mxu0 0
    %325 = vmatprep.subr.bf16.mxu0 0
    %326 = vmatpush1.bf16.msra.mxu0 0
    %327 = vmatprep.subr.bf16.mxu0 0
    %328 = vmatpush1.bf16.msra.mxu0 0
    %329 = vmatprep.subr.bf16.mxu0 0
    %330 = vmatpush1.bf16.msra.mxu0 0
    %331 = vmatprep.subr.bf16.mxu0 0
    %332 = vmatpush1.bf16.msra.mxu0 0
    %333 = vmatprep.subr.bf16.mxu0 0
    %334 = vmatpush1.bf16.msra.mxu0 0
    %335 = vmatprep.subr.bf16.mxu0 0
    %336 = vmatpush1.bf16.msra.mxu0 0
    %337 = vmatprep.subr.bf16.mxu0 0
    %338 = vmatpush1.bf16.msra.mxu0 0
    %339 = vmatprep.subr.bf16.mxu0 0
    %340 = vmatpush1.bf16.msra.mxu0 0
    %341 = vmatprep.subr.bf16.mxu0 0
    %342 = vmatpush1.bf16.msra.mxu0 0
    %343 = vmatprep.subr.bf16.mxu0 0
    %344 = vmatpush1.bf16.msra.mxu0 0
    %345 = vmatprep.mubr.bf16.mxu0 0
    %346 = vmatmul.mubr.bf16.gmra.mrb[0].mxu0 %v311
    %v347 = vpop.f32.mrb[0].mxu0
    %v348 = vadd.f32 0.0, %v347
    %v349 = vpop.f32.mrb[0].mxu0
    %v350 = vadd.f32 0.0, %v349
    %v351 = vpop.f32.mrb[0].mxu0
    %v352 = vpop.f32.mrb[0].mxu0
    %353 = vdwg.mxu0
    %354 = vmatprep.subr.bf16.mxu0 %v304
    %355 = vmatpush1.bf16.msra.mxu0 %v303
    %356 = vmatprep.subr.bf16.mxu0 0
    %357 = vmatpush1.bf16.msra.mxu0 0
    %358 = vmatprep.subr.bf16.mxu0 0
    %359 = vmatpush1.bf16.msra.mxu0 0
    %360 = vmatprep.subr.bf16.mxu0 0
    %361 = vmatpush1.bf16.msra.mxu0 0
    %362 = vmatprep.subr.bf16.mxu0 0
    %363 = vmatpush1.bf16.msra.mxu0 0
    %364 = vmatprep.subr.bf16.mxu0 0
    %365 = vmatpush1.bf16.msra.mxu0 0
    %366 = vmatprep.subr.bf16.mxu0 0
    %367 = vmatpush1.bf16.msra.mxu0 0
    %368 = vmatprep.subr.bf16.mxu0 0
    %369 = vmatpush1.bf16.msra.mxu0 0
    %370 = vmatprep.subr.bf16.mxu0 0
    %371 = vmatpush1.bf16.msra.mxu0 0
    %372 = vmatprep.subr.bf16.mxu0 0
    %373 = vmatpush1.bf16.msra.mxu0 0
    %374 = vmatprep.subr.bf16.mxu0 0
    %375 = vmatpush1.bf16.msra.mxu0 0
    %376 = vmatprep.subr.bf16.mxu0 0
    %377 = vmatpush1.bf16.msra.mxu0 0
    %378 = vmatprep.subr.bf16.mxu0 0
    %379 = vmatpush1.bf16.msra.mxu0 0
    %380 = vmatprep.subr.bf16.mxu0 0
    %381 = vmatpush1.bf16.msra.mxu0 0
    %382 = vmatprep.subr.bf16.mxu0 0
    %383 = vmatpush1.bf16.msra.mxu0 0
    %384 = vmatprep.subr.bf16.mxu0 0
    %385 = vmatpush1.bf16.msra.mxu0 0
    %386 = vmatprep.mubr.bf16.mxu0 0
    %387 = vmatmul.mubr.bf16.gmra.mrb[0].mxu0 %v311
    %v388 = vpop.f32.mrb[0].mxu0
    %v389 = vadd.f32 0.0, %v388
    %v390 = vpop.f32.mrb[0].mxu0
    %v391 = vadd.f32 0.0, %v390
    %v392 = vpop.f32.mrb[0].mxu0
    %v393 = vpop.f32.mrb[0].mxu0
    %394 = vdwg.mxu0
    %v427 = vunpack.c.l.b16 %v123
    %v428 = vunpack.c.h.b16 %v123
    %v429 = vunpack.c.l.b16 %v124
    %v430 = vunpack.c.h.b16 %v124
    %v431 = vunpack.c.l.b16 %v125
    %v432 = vunpack.c.h.b16 %v125
    %v433 = vunpack.c.l.b16 %v126
    %v434 = vunpack.c.h.b16 %v126
    %v435 = vunpack.c.l.b16 %v127
    %v436 = vunpack.c.h.b16 %v127
    %v437 = vunpack.c.l.b16 %v128
    %v438 = vunpack.c.h.b16 %v128
    %v439 = vunpack.c.l.b16 %v129
    %v440 = vunpack.c.h.b16 %v129
    %v441 = vunpack.c.l.b16 %v130
    %v442 = vunpack.c.h.b16 %v130
    %v443 = vunpack.c.l.b16 %v131
    %v444 = vunpack.c.h.b16 %v131
    %v445 = vunpack.c.l.b16 %v132
    %v446 = vunpack.c.h.b16 %v132
    %v447 = vunpack.c.l.b16 %v133
    %v448 = vunpack.c.h.b16 %v133
    %v449 = vunpack.c.l.b16 %v134
    %v450 = vunpack.c.h.b16 %v134
    %v451 = vunpack.c.l.b16 %v135
    %v452 = vunpack.c.h.b16 %v135
    %v453 = vunpack.c.l.b16 %v136
    %v454 = vunpack.c.h.b16 %v136
    %v455 = vunpack.c.l.b16 %v137
    %v456 = vunpack.c.h.b16 %v137
    %v457 = vunpack.c.l.b16 %v138
    %v458 = vunpack.c.h.b16 %v138
    %v459 = vunpack.c.l.b16 %v139
    %v460 = vunpack.c.h.b16 %v139
    %v461 = vunpack.c.l.b16 %v140
    %v462 = vunpack.c.h.b16 %v140
    %v463 = vunpack.c.l.b16 %v141
    %v464 = vunpack.c.h.b16 %v141
    %v465 = vunpack.c.l.b16 %v142
    %v466 = vunpack.c.h.b16 %v142
    %v467 = vunpack.c.l.b16 %v143
    %v468 = vunpack.c.h.b16 %v143
    %v469 = vunpack.c.l.b16 %v144
    %v470 = vunpack.c.h.b16 %v144
    %v471 = vunpack.c.l.b16 %v145
    %v472 = vunpack.c.h.b16 %v145
    %v473 = vunpack.c.l.b16 %v146
    %v474 = vunpack.c.h.b16 %v146
    %v475 = vunpack.c.l.b16 %v147
    %v476 = vunpack.c.h.b16 %v147
    %v477 = vunpack.c.l.b16 %v148
    %v478 = vunpack.c.h.b16 %v148
    %v479 = vunpack.c.l.b16 %v149
    %v480 = vunpack.c.h.b16 %v149
    %v481 = vunpack.c.l.b16 %v150
    %v482 = vunpack.c.h.b16 %v150
    %v483 = vunpack.c.l.b16 %v151
    %v484 = vunpack.c.h.b16 %v151
    %v485 = vunpack.c.l.b16 %v152
    %v486 = vunpack.c.h.b16 %v152
    %v487 = vunpack.c.l.b16 %v153
    %v488 = vunpack.c.h.b16 %v153
    %v489 = vunpack.c.l.b16 %v154
    %v490 = vunpack.c.h.b16 %v154
    %v491 = vpack.c.b16 %v431, %v427
    %v492 = vpack.c.b16 %v432, %v428
    %v493 = vpack.c.b16 %v433, %v429
    %v494 = vpack.c.b16 %v434, %v430
    %v495 = vpack.c.b16 %v439, %v435
    %v496 = vpack.c.b16 %v440, %v436
    %v497 = vpack.c.b16 %v441, %v437
    %v498 = vpack.c.b16 %v442, %v438
    %v499 = vpack.c.b16 %v447, %v443
    %v500 = vpack.c.b16 %v448, %v444
    %v501 = vpack.c.b16 %v449, %v445
    %v502 = vpack.c.b16 %v450, %v446
    %v503 = vpack.c.b16 %v455, %v451
    %v504 = vpack.c.b16 %v456, %v452
    %v505 = vpack.c.b16 %v457, %v453
    %v506 = vpack.c.b16 %v458, %v454
    %v507 = vpack.c.b16 %v463, %v459
    %v508 = vpack.c.b16 %v464, %v460
    %v509 = vpack.c.b16 %v465, %v461
    %v510 = vpack.c.b16 %v466, %v462
    %v511 = vpack.c.b16 %v471, %v467
    %v512 = vpack.c.b16 %v472, %v468
    %v513 = vpack.c.b16 %v473, %v469
    %v514 = vpack.c.b16 %v474, %v470
    %v515 = vpack.c.b16 %v479, %v475
    %v516 = vpack.c.b16 %v480, %v476
    %v517 = vpack.c.b16 %v481, %v477
    %v518 = vpack.c.b16 %v482, %v478
    %v519 = vpack.c.b16 %v487, %v483
    %v520 = vpack.c.b16 %v488, %v484
    %v521 = vpack.c.b16 %v489, %v485
    %v522 = vpack.c.b16 %v490, %v486
    %555 = vmatprep.subr.bf16.mxu0 %v492
    %556 = vmatpush1.bf16.msra.mxu0 %v491
    %557 = vmatprep.subr.bf16.mxu0 %v496
    %558 = vmatpush1.bf16.msra.mxu0 %v495
    %559 = vmatprep.subr.bf16.mxu0 %v500
    %560 = vmatpush1.bf16.msra.mxu0 %v499
    %561 = vmatprep.subr.bf16.mxu0 %v504
    %562 = vmatpush1.bf16.msra.mxu0 %v503
    %563 = vmatprep.subr.bf16.mxu0 %v508
    %564 = vmatpush1.bf16.msra.mxu0 %v507
    %565 = vmatprep.subr.bf16.mxu0 %v512
    %566 = vmatpush1.bf16.msra.mxu0 %v511
    %567 = vmatprep.subr.bf16.mxu0 %v516
    %568 = vmatpush1.bf16.msra.mxu0 %v515
    %569 = vmatprep.subr.bf16.mxu0 %v520
    %570 = vmatpush1.bf16.msra.mxu0 %v519
    %571 = vmatprep.subr.bf16.mxu0 0
    %572 = vmatpush1.bf16.msra.mxu0 0
    %573 = vmatprep.subr.bf16.mxu0 0
    %574 = vmatpush1.bf16.msra.mxu0 0
    %575 = vmatprep.subr.bf16.mxu0 0
    %576 = vmatpush1.bf16.msra.mxu0 0
    %577 = vmatprep.subr.bf16.mxu0 0
    %578 = vmatpush1.bf16.msra.mxu0 0
    %579 = vmatprep.subr.bf16.mxu0 0
    %580 = vmatpush1.bf16.msra.mxu0 0
    %581 = vmatprep.subr.bf16.mxu0 0
    %582 = vmatpush1.bf16.msra.mxu0 0
    %583 = vmatprep.subr.bf16.mxu0 0
    %584 = vmatpush1.bf16.msra.mxu0 0
    %585 = vmatprep.subr.bf16.mxu0 0
    %586 = vmatpush1.bf16.msra.mxu0 0
    %587 = vmatprep.mubr.bf16.mxu0 0
    %588 = vmatmul.mubr.bf16.gmra.mrb[0].mxu0 0
    %v589 = vpop.f32.mrb[0].mxu0
    %v590 = vadd.f32 %v348, %v589
    %v591 = vpop.f32.mrb[0].mxu0
    %v592 = vadd.f32 %v350, %v591
    %v593 = vpop.f32.mrb[0].mxu0
    %v594 = vpop.f32.mrb[0].mxu0
    %595 = vdwg.mxu0
    %596 = vmatprep.subr.bf16.mxu0 %v494
    %597 = vmatpush1.bf16.msra.mxu0 %v493
    %598 = vmatprep.subr.bf16.mxu0 %v498
    %599 = vmatpush1.bf16.msra.mxu0 %v497
    %600 = vmatprep.subr.bf16.mxu0 %v502
    %601 = vmatpush1.bf16.msra.mxu0 %v501
    %602 = vmatprep.subr.bf16.mxu0 %v506
    %603 = vmatpush1.bf16.msra.mxu0 %v505
    %604 = vmatprep.subr.bf16.mxu0 %v510
    %605 = vmatpush1.bf16.msra.mxu0 %v509
    %606 = vmatprep.subr.bf16.mxu0 %v514
    %607 = vmatpush1.bf16.msra.mxu0 %v513
    %608 = vmatprep.subr.bf16.mxu0 %v518
    %609 = vmatpush1.bf16.msra.mxu0 %v517
    %610 = vmatprep.subr.bf16.mxu0 %v522
    %611 = vmatpush1.bf16.msra.mxu0 %v521
    %612 = vmatprep.subr.bf16.mxu0 0
    %613 = vmatpush1.bf16.msra.mxu0 0
    %614 = vmatprep.subr.bf16.mxu0 0
    %615 = vmatpush1.bf16.msra.mxu0 0
    %616 = vmatprep.subr.bf16.mxu0 0
    %617 = vmatpush1.bf16.msra.mxu0 0
    %618 = vmatprep.subr.bf16.mxu0 0
    %619 = vmatpush1.bf16.msra.mxu0 0
    %620 = vmatprep.subr.bf16.mxu0 0
    %621 = vmatpush1.bf16.msra.mxu0 0
    %622 = vmatprep.subr.bf16.mxu0 0
    %623 = vmatpush1.bf16.msra.mxu0 0
    %624 = vmatprep.subr.bf16.mxu0 0
    %625 = vmatpush1.bf16.msra.mxu0 0
    %626 = vmatprep.subr.bf16.mxu0 0
    %627 = vmatpush1.bf16.msra.mxu0 0
    %628 = vmatprep.mubr.bf16.mxu0 0
    %629 = vmatmul.mubr.bf16.gmra.mrb[0].mxu0 0
    %v630 = vpop.f32.mrb[0].mxu0
    %v631 = vadd.f32 %v389, %v630
    %v632 = vpop.f32.mrb[0].mxu0
    %v633 = vadd.f32 %v391, %v632
    %v634 = vpop.f32.mrb[0].mxu0
    %v635 = vpop.f32.mrb[0].mxu0
    %636 = vdwg.mxu0
    %v637 = vadd.f32 %v590, %v224
    %v638 = vadd.f32 %v592, %v228
    %v639 = vadd.f32 %v631, %v232
    %v640 = vadd.f32 %v633, %v236
    %v641 = vmul.f32 %v637, 0.5
    %v642 = vmul.f32 %v638, 0.5
    %v643 = vmul.f32 %v639, 0.5
    %v644 = vtanh.pop %v641
    %v645 = vtanh.pop %v642
    %v646 = vtanh.pop %v643
    %v647 = vmul.f32 %v644, 0.5
    %v648 = vmul.f32 %v645, 0.5
    %v649 = vmul.f32 %v646, 0.5
    %v650 = vadd.f32 %v647, 0.5
    %v651 = vadd.f32 %v648, 0.5
    %v652 = vadd.f32 %v649, 0.5
    %v653 = vtanh.pop %v640
    %v654 = vmul.f32 %v651, 0.0
    %v655 = vmul.f32 %v650, %v653
    %v656 = vadd.f32 %v654, %v655
    %v657 = vtanh.pop %v656
    %v658 = vmul.f32 %v652, %v657
    %v659 = vpack.c.bf16 %v658, %v658
    %v692 = vunpack.c.l.b16 %v155
    %v693 = vunpack.c.h.b16 %v155
    %v694 = vunpack.c.l.b16 %v156
    %v695 = vunpack.c.h.b16 %v156
    %v696 = vunpack.c.l.b16 %v157
    %v697 = vunpack.c.h.b16 %v157
    %v698 = vunpack.c.l.b16 %v158
    %v699 = vunpack.c.h.b16 %v158
    %v700 = vunpack.c.l.b16 %v159
    %v701 = vunpack.c.h.b16 %v159
    %v702 = vunpack.c.l.b16 %v160
    %v703 = vunpack.c.h.b16 %v160
    %v704 = vunpack.c.l.b16 %v161
    %v705 = vunpack.c.h.b16 %v161
    %v706 = vunpack.c.l.b16 %v162
    %v707 = vunpack.c.h.b16 %v162
    %v708 = vunpack.c.l.b16 %v163
    %v709 = vunpack.c.h.b16 %v163
    %v710 = vunpack.c.l.b16 %v164
    %v711 = vunpack.c.h.b16 %v164
    %v712 = vunpack.c.l.b16 %v165
    %v713 = vunpack.c.h.b16 %v165
    %v714 = vunpack.c.l.b16 %v166
    %v715 = vunpack.c.h.b16 %v166
    %v716 = vunpack.c.l.b16 %v167
    %v717 = vunpack.c.h.b16 %v167
    %v718 = vunpack.c.l.b16 %v168
    %v719 = vunpack.c.h.b16 %v168
    %v720 = vunpack.c.l.b16 %v169
    %v721 = vunpack.c.h.b16 %v169
    %v722 = vunpack.c.l.b16 %v170
    %v723 = vunpack.c.h.b16 %v170
    %v724 = vunpack.c.l.b16 %v171
    %v725 = vunpack.c.h.b16 %v171
    %v726 = vunpack.c.l.b16 %v172
    %v727 = vunpack.c.h.b16 %v172
    %v728 = vunpack.c.l.b16 %v173
    %v729 = vunpack.c.h.b16 %v173
    %v730 = vunpack.c.l.b16 %v174
    %v731 = vunpack.c.h.b16 %v174
    %v732 = vunpack.c.l.b16 %v175
    %v733 = vunpack.c.h.b16 %v175
    %v734 = vunpack.c.l.b16 %v176
    %v735 = vunpack.c.h.b16 %v176
    %v736 = vunpack.c.l.b16 %v177
    %v737 = vunpack.c.h.b16 %v177
    %v738 = vunpack.c.l.b16 %v178
    %v739 = vunpack.c.h.b16 %v178
    %v740 = vunpack.c.l.b16 %v179
    %v741 = vunpack.c.h.b16 %v179
    %v742 = vunpack.c.l.b16 %v180
    %v743 = vunpack.c.h.b16 %v180
    %v744 = vunpack.c.l.b16 %v181
    %v745 = vunpack.c.h.b16 %v181
    %v746 = vunpack.c.l.b16 %v182
    %v747 = vunpack.c.h.b16 %v182
    %v748 = vunpack.c.l.b16 %v183
    %v749 = vunpack.c.h.b16 %v183
    %v750 = vunpack.c.l.b16 %v184
    %v751 = vunpack.c.h.b16 %v184
    %v752 = vunpack.c.l.b16 %v185
    %v753 = vunpack.c.h.b16 %v185
    %v754 = vunpack.c.l.b16 %v186
    %v755 = vunpack.c.h.b16 %v186
    %v756 = vpack.c.b16 %v696, %v692
    %v757 = vpack.c.b16 %v697, %v693
    %v758 = vpack.c.b16 %v698, %v694
    %v759 = vpack.c.b16 %v699, %v695
    %v760 = vpack.c.b16 %v704, %v700
    %v761 = vpack.c.b16 %v705, %v701
    %v762 = vpack.c.b16 %v706, %v702
    %v763 = vpack.c.b16 %v707, %v703
    %v764 = vpack.c.b16 %v712, %v708
    %v765 = vpack.c.b16 %v713, %v709
    %v766 = vpack.c.b16 %v714, %v710
    %v767 = vpack.c.b16 %v715, %v711
    %v768 = vpack.c.b16 %v720, %v716
    %v769 = vpack.c.b16 %v721, %v717
    %v770 = vpack.c.b16 %v722, %v718
    %v771 = vpack.c.b16 %v723, %v719
    %v772 = vpack.c.b16 %v728, %v724
    %v773 = vpack.c.b16 %v729, %v725
    %v774 = vpack.c.b16 %v730, %v726
    %v775 = vpack.c.b16 %v731, %v727
    %v776 = vpack.c.b16 %v736, %v732
    %v777 = vpack.c.b16 %v737, %v733
    %v778 = vpack.c.b16 %v738, %v734
    %v779 = vpack.c.b16 %v739, %v735
    %v780 = vpack.c.b16 %v744, %v740
    %v781 = vpack.c.b16 %v745, %v741
    %v782 = vpack.c.b16 %v746, %v742
    %v783 = vpack.c.b16 %v747, %v743
    %v784 = vpack.c.b16 %v752, %v748
    %v785 = vpack.c.b16 %v753, %v749
    %v786 = vpack.c.b16 %v754, %v750
    %v787 = vpack.c.b16 %v755, %v751
    %820 = vmatprep.subr.bf16.mxu0 %v757
    %821 = vmatpush1.bf16.msra.mxu0 %v756
    %822 = vmatprep.subr.bf16.mxu0 %v761
    %823 = vmatpush1.bf16.msra.mxu0 %v760
    %824 = vmatprep.subr.bf16.mxu0 %v765
    %825 = vmatpush1.bf16.msra.mxu0 %v764
    %826 = vmatprep.subr.bf16.mxu0 %v769
    %827 = vmatpush1.bf16.msra.mxu0 %v768
    %828 = vmatprep.subr.bf16.mxu0 %v773
    %829 = vmatpush1.bf16.msra.mxu0 %v772
    %830 = vmatprep.subr.bf16.mxu0 %v777
    %831 = vmatpush1.bf16.msra.mxu0 %v776
    %832 = vmatprep.subr.bf16.mxu0 %v781
    %833 = vmatpush1.bf16.msra.mxu0 %v780
    %834 = vmatprep.subr.bf16.mxu0 %v785
    %835 = vmatpush1.bf16.msra.mxu0 %v784
    %836 = vmatprep.subr.bf16.mxu0 0
    %837 = vmatpush1.bf16.msra.mxu0 0
    %838 = vmatprep.subr.bf16.mxu0 0
    %839 = vmatpush1.bf16.msra.mxu0 0
    %840 = vmatprep.subr.bf16.mxu0 0
    %841 = vmatpush1.bf16.msra.mxu0 0
    %842 = vmatprep.subr.bf16.mxu0 0
    %843 = vmatpush1.bf16.msra.mxu0 0
    %844 = vmatprep.subr.bf16.mxu0 0
    %845 = vmatpush1.bf16.msra.mxu0 0
    %846 = vmatprep.subr.bf16.mxu0 0
    %847 = vmatpush1.bf16.msra.mxu0 0
    %848 = vmatprep.subr.bf16.mxu0 0
    %849 = vmatpush1.bf16.msra.mxu0 0
    %850 = vmatprep.subr.bf16.mxu0 0
    %851 = vmatpush1.bf16.msra.mxu0 0
    %852 = vmatprep.mubr.bf16.mxu0 0
    %853 = vmatmul.mubr.bf16.gmra.mrb[0].mxu0 %v659
    %v854 = vpop.f32.mrb[0].mxu0
    %v855 = vadd.f32 0.0, %v854
    %v856 = vpop.f32.mrb[0].mxu0
    %v857 = vadd.f32 0.0, %v856
    %v858 = vpop.f32.mrb[0].mxu0
    %v859 = vpop.f32.mrb[0].mxu0
    %860 = vdwg.mxu0
    %861 = vmatprep.subr.bf16.mxu0 %v759
    %862 = vmatpush1.bf16.msra.mxu0 %v758
    %863 = vmatprep.subr.bf16.mxu0 %v763
    %864 = vmatpush1.bf16.msra.mxu0 %v762
    %865 = vmatprep.subr.bf16.mxu0 %v767
    %866 = vmatpush1.bf16.msra.mxu0 %v766
    %867 = vmatprep.subr.bf16.mxu0 %v771
    %868 = vmatpush1.bf16.msra.mxu0 %v770
    %869 = vmatprep.subr.bf16.mxu0 %v775
    %870 = vmatpush1.bf16.msra.mxu0 %v774
    %871 = vmatprep.subr.bf16.mxu0 %v779
    %872 = vmatpush1.bf16.msra.mxu0 %v778
    %873 = vmatprep.subr.bf16.mxu0 %v783
    %874 = vmatpush1.bf16.msra.mxu0 %v782
    %875 = vmatprep.subr.bf16.mxu0 %v787
    %876 = vmatpush1.bf16.msra.mxu0 %v786
    %877 = vmatprep.subr.bf16.mxu0 0
    %878 = vmatpush1.bf16.msra.mxu0 0
    %879 = vmatprep.subr.bf16.mxu0 0
    %880 = vmatpush1.bf16.msra.mxu0 0
    %881 = vmatprep.subr.bf16.mxu0 0
    %882 = vmatpush1.bf16.msra.mxu0 0
    %883 = vmatprep.subr.bf16.mxu0 0
    %884 = vmatpush1.bf16.msra.mxu0 0
    %885 = vmatprep.subr.bf16.mxu0 0
    %886 = vmatpush1.bf16.msra.mxu0 0
    %887 = vmatprep.subr.bf16.mxu0 0
    %888 = vmatpush1.bf16.msra.mxu0 0
    %889 = vmatprep.subr.bf16.mxu0 0
    %890 = vmatpush1.bf16.msra.mxu0 0
    %891 = vmatprep.subr.bf16.mxu0 0
    %892 = vmatpush1.bf16.msra.mxu0 0
    %893 = vmatprep.mubr.bf16.mxu0 0
    %894 = vmatmul.mubr.bf16.gmra.mrb[0].mxu0 %v659
    %v895 = vpop.f32.mrb[0].mxu0
    %v896 = vadd.f32 0.0, %v895
    %v897 = vpop.f32.mrb[0].mxu0
    %v898 = vadd.f32 0.0, %v897
    %v899 = vpop.f32.mrb[0].mxu0
    %v900 = vpop.f32.mrb[0].mxu0
    %901 = vdwg.mxu0
    %v934 = vunpack.c.l.b16 %v187
    %v935 = vunpack.c.h.b16 %v187
    %v936 = vunpack.c.l.b16 %v188
    %v937 = vunpack.c.h.b16 %v188
    %v938 = vunpack.c.l.b16 %v189
    %v939 = vunpack.c.h.b16 %v189
    %v940 = vunpack.c.l.b16 %v190
    %v941 = vunpack.c.h.b16 %v190
    %v942 = vunpack.c.l.b16 %v191
    %v943 = vunpack.c.h.b16 %v191
    %v944 = vunpack.c.l.b16 %v192
    %v945 = vunpack.c.h.b16 %v192
    %v946 = vunpack.c.l.b16 %v193
    %v947 = vunpack.c.h.b16 %v193
    %v948 = vunpack.c.l.b16 %v194
    %v949 = vunpack.c.h.b16 %v194
    %v950 = vunpack.c.l.b16 %v195
    %v951 = vunpack.c.h.b16 %v195
    %v952 = vunpack.c.l.b16 %v196
    %v953 = vunpack.c.h.b16 %v196
    %v954 = vunpack.c.l.b16 %v197
    %v955 = vunpack.c.h.b16 %v197
    %v956 = vunpack.c.l.b16 %v198
    %v957 = vunpack.c.h.b16 %v198
    %v958 = vunpack.c.l.b16 %v199
    %v959 = vunpack.c.h.b16 %v199
    %v960 = vunpack.c.l.b16 %v200
    %v961 = vunpack.c.h.b16 %v200
    %v962 = vunpack.c.l.b16 %v201
    %v963 = vunpack.c.h.b16 %v201
    %v964 = vunpack.c.l.b16 %v202
    %v965 = vunpack.c.h.b16 %v202
    %v966 = vunpack.c.l.b16 %v203
    %v967 = vunpack.c.h.b16 %v203
    %v968 = vunpack.c.l.b16 %v204
    %v969 = vunpack.c.h.b16 %v204
    %v970 = vunpack.c.l.b16 %v205
    %v971 = vunpack.c.h.b16 %v205
    %v972 = vunpack.c.l.b16 %v206
    %v973 = vunpack.c.h.b16 %v206
    %v974 = vunpack.c.l.b16 %v207
    %v975 = vunpack.c.h.b16 %v207
    %v976 = vunpack.c.l.b16 %v208
    %v977 = vunpack.c.h.b16 %v208
    %v978 = vunpack.c.l.b16 %v209
    %v979 = vunpack.c.h.b16 %v209
    %v980 = vunpack.c.l.b16 %v210
    %v981 = vunpack.c.h.b16 %v210
    %v982 = vunpack.c.l.b16 %v211
    %v983 = vunpack.c.h.b16 %v211
    %v984 = vunpack.c.l.b16 %v212
    %v985 = vunpack.c.h.b16 %v212
    %v986 = vunpack.c.l.b16 %v213
    %v987 = vunpack.c.h.b16 %v213
    %v988 = vunpack.c.l.b16 %v214
    %v989 = vunpack.c.h.b16 %v214
    %v990 = vunpack.c.l.b16 %v215
    %v991 = vunpack.c.h.b16 %v215
    %v992 = vunpack.c.l.b16 %v216
    %v993 = vunpack.c.h.b16 %v216
    %v994 = vunpack.c.l.b16 %v217
    %v995 = vunpack.c.h.b16 %v217
    %v996 = vunpack.c.l.b16 %v218
    %v997 = vunpack.c.h.b16 %v218
    %v998 = vpack.c.b16 %v938, %v934
    %v999 = vpack.c.b16 %v939, %v935
    %v1000 = vpack.c.b16 %v940, %v936
    %v1001 = vpack.c.b16 %v941, %v937
    %v1002 = vpack.c.b16 %v946, %v942
    %v1003 = vpack.c.b16 %v947, %v943
    %v1004 = vpack.c.b16 %v948, %v944
    %v1005 = vpack.c.b16 %v949, %v945
    %v1006 = vpack.c.b16 %v954, %v950
    %v1007 = vpack.c.b16 %v955, %v951
    %v1008 = vpack.c.b16 %v956, %v952
    %v1009 = vpack.c.b16 %v957, %v953
    %v1010 = vpack.c.b16 %v962, %v958
    %v1011 = vpack.c.b16 %v963, %v959
    %v1012 = vpack.c.b16 %v964, %v960
    %v1013 = vpack.c.b16 %v965, %v961
    %v1014 = vpack.c.b16 %v970, %v966
    %v1015 = vpack.c.b16 %v971, %v967
    %v1016 = vpack.c.b16 %v972, %v968
    %v1017 = vpack.c.b16 %v973, %v969
    %v1018 = vpack.c.b16 %v978, %v974
    %v1019 = vpack.c.b16 %v979, %v975
    %v1020 = vpack.c.b16 %v980, %v976
    %v1021 = vpack.c.b16 %v981, %v977
    %v1022 = vpack.c.b16 %v986, %v982
    %v1023 = vpack.c.b16 %v987, %v983
    %v1024 = vpack.c.b16 %v988, %v984
    %v1025 = vpack.c.b16 %v989, %v985
    %v1026 = vpack.c.b16 %v994, %v990
    %v1027 = vpack.c.b16 %v995, %v991
    %v1028 = vpack.c.b16 %v996, %v992
    %v1029 = vpack.c.b16 %v997, %v993
    %1062 = vmatprep.subr.bf16.mxu0 %v999
    %1063 = vmatpush1.bf16.msra.mxu0 %v998
    %1064 = vmatprep.subr.bf16.mxu0 %v1003
    %1065 = vmatpush1.bf16.msra.mxu0 %v1002
    %1066 = vmatprep.subr.bf16.mxu0 %v1007
    %1067 = vmatpush1.bf16.msra.mxu0 %v1006
    %1068 = vmatprep.subr.bf16.mxu0 %v1011
    %1069 = vmatpush1.bf16.msra.mxu0 %v1010
    %1070 = vmatprep.subr.bf16.mxu0 %v1015
    %1071 = vmatpush1.bf16.msra.mxu0 %v1014
    %1072 = vmatprep.subr.bf16.mxu0 %v1019
    %1073 = vmatpush1.bf16.msra.mxu0 %v1018
    %1074 = vmatprep.subr.bf16.mxu0 %v1023
    %1075 = vmatpush1.bf16.msra.mxu0 %v1022
    %1076 = vmatprep.subr.bf16.mxu0 %v1027
    %1077 = vmatpush1.bf16.msra.mxu0 %v1026
    %1078 = vmatprep.subr.bf16.mxu0 0
    %1079 = vmatpush1.bf16.msra.mxu0 0
    %1080 = vmatprep.subr.bf16.mxu0 0
    %1081 = vmatpush1.bf16.msra.mxu0 0
    %1082 = vmatprep.subr.bf16.mxu0 0
    %1083 = vmatpush1.bf16.msra.mxu0 0
    %1084 = vmatprep.subr.bf16.mxu0 0
    %1085 = vmatpush1.bf16.msra.mxu0 0
    %1086 = vmatprep.subr.bf16.mxu0 0
    %1087 = vmatpush1.bf16.msra.mxu0 0
    %1088 = vmatprep.subr.bf16.mxu0 0
    %1089 = vmatpush1.bf16.msra.mxu0 0
    %1090 = vmatprep.subr.bf16.mxu0 0
    %1091 = vmatpush1.bf16.msra.mxu0 0
    %1092 = vmatprep.subr.bf16.mxu0 0
    %1093 = vmatpush1.bf16.msra.mxu0 0
    %1094 = vmatprep.mubr.bf16.mxu0 0
    %1095 = vmatmul.mubr.bf16.gmra.mrb[0].mxu0 0
    %v1096 = vpop.f32.mrb[0].mxu0
    %v1097 = vadd.f32 %v855, %v1096
    %v1098 = vpop.f32.mrb[0].mxu0
    %v1099 = vadd.f32 %v857, %v1098
    %v1100 = vpop.f32.mrb[0].mxu0
    %v1101 = vpop.f32.mrb[0].mxu0
    %1102 = vdwg.mxu0
    %1103 = vmatprep.subr.bf16.mxu0 %v1001
    %1104 = vmatpush1.bf16.msra.mxu0 %v1000
    %1105 = vmatprep.subr.bf16.mxu0 %v1005
    %1106 = vmatpush1.bf16.msra.mxu0 %v1004
    %1107 = vmatprep.subr.bf16.mxu0 %v1009
    %1108 = vmatpush1.bf16.msra.mxu0 %v1008
    %1109 = vmatprep.subr.bf16.mxu0 %v1013
    %1110 = vmatpush1.bf16.msra.mxu0 %v1012
    %1111 = vmatprep.subr.bf16.mxu0 %v1017
    %1112 = vmatpush1.bf16.msra.mxu0 %v1016
    %1113 = vmatprep.subr.bf16.mxu0 %v1021
    %1114 = vmatpush1.bf16.msra.mxu0 %v1020
    %1115 = vmatprep.subr.bf16.mxu0 %v1025
    %1116 = vmatpush1.bf16.msra.mxu0 %v1024
    %1117 = vmatprep.subr.bf16.mxu0 %v1029
    %1118 = vmatpush1.bf16.msra.mxu0 %v1028
    %1119 = vmatprep.subr.bf16.mxu0 0
    %1120 = vmatpush1.bf16.msra.mxu0 0
    %1121 = vmatprep.subr.bf16.mxu0 0
    %1122 = vmatpush1.bf16.msra.mxu0 0
    %1123 = vmatprep.subr.bf16.mxu0 0
    %1124 = vmatpush1.bf16.msra.mxu0 0
    %1125 = vmatprep.subr.bf16.mxu0 0
    %1126 = vmatpush1.bf16.msra.mxu0 0
    %1127 = vmatprep.subr.bf16.mxu0 0
    %1128 = vmatpush1.bf16.msra.mxu0 0
    %1129 = vmatprep.subr.bf16.mxu0 0
    %1130 = vmatpush1.bf16.msra.mxu0 0
    %1131 = vmatprep.subr.bf16.mxu0 0
    %1132 = vmatpush1.bf16.msra.mxu0 0
    %1133 = vmatprep.subr.bf16.mxu0 0
    %1134 = vmatpush1.bf16.msra.mxu0 0
    %1135 = vmatprep.mubr.bf16.mxu0 0
    %1136 = vmatmul.mubr.bf16.gmra.mrb[0].mxu0 0
    %v1137 = vpop.f32.mrb[0].mxu0
    %v1138 = vadd.f32 %v896, %v1137
    %v1139 = vpop.f32.mrb[0].mxu0
    %v1140 = vadd.f32 %v898, %v1139
    %v1141 = vpop.f32.mrb[0].mxu0
    %v1142 = vpop.f32.mrb[0].mxu0
    %1143 = vdwg.mxu0
    %v1144 = vadd.f32 %v1097, %v246
    %v1145 = vadd.f32 %v1099, %v250
    %v1146 = vadd.f32 %v1138, %v254
    %v1147 = vadd.f32 %v1140, %v258
    %v1148 = vmul.f32 %v1144, 0.5
    %v1149 = vmul.f32 %v1145, 0.5
    %v1150 = vmul.f32 %v1146, 0.5
    %v1151 = vtanh.pop %v1148
    %v1152 = vtanh.pop %v1149
    %v1153 = vtanh.pop %v1150
    %v1154 = vmul.f32 %v1151, 0.5
    %v1155 = vmul.f32 %v1152, 0.5
    %v1156 = vmul.f32 %v1153, 0.5
    %v1157 = vadd.f32 %v1154, 0.5
    %v1158 = vadd.f32 %v1155, 0.5
    %v1159 = vadd.f32 %v1156, 0.5
    %v1160 = vtanh.pop %v1147
    %v1161 = vmul.f32 %v1158, 0.0
    %v1162 = vmul.f32 %v1157, %v1160
    %v1163 = vadd.f32 %v1161, %v1162
    %v1164 = vtanh.pop %v1163
    %v1165 = vmul.f32 %v1159, %v1164
    %s1166 = scalar_lea.vmem [#allocation2], 1
    %v1167 = vld [vmem:[%s1166] sm:$0x1]
    %v1169 = vsel %vm309, %v1167, 0
    %1171 = vmatprep.subr.bf16.mxu0 %v302
    %1172 = vmatpush1.bf16.msra.mxu0 %v301
    %1173 = vmatprep.subr.bf16.mxu0 0
    %1174 = vmatpush1.bf16.msra.mxu0 0
    %1175 = vmatprep.subr.bf16.mxu0 0
    %1176 = vmatpush1.bf16.msra.mxu0 0
    %1177 = vmatprep.subr.bf16.mxu0 0
    %1178 = vmatpush1.bf16.msra.mxu0 0
    %1179 = vmatprep.subr.bf16.mxu0 0
    %1180 = vmatpush1.bf16.msra.mxu0 0
    %1181 = vmatprep.subr.bf16.mxu0 0
    %1182 = vmatpush1.bf16.msra.mxu0 0
    %1183 = vmatprep.subr.bf16.mxu0 0
    %1184 = vmatpush1.bf16.msra.mxu0 0
    %1185 = vmatprep.subr.bf16.mxu0 0
    %1186 = vmatpush1.bf16.msra.mxu0 0
    %1187 = vmatprep.subr.bf16.mxu0 0
    %1188 = vmatpush1.bf16.msra.mxu0 0
    %1189 = vmatprep.subr.bf16.mxu0 0
    %1190 = vmatpush1.bf16.msra.mxu0 0
    %1191 = vmatprep.subr.bf16.mxu0 0
    %1192 = vmatpush1.bf16.msra.mxu0 0
    %1193 = vmatprep.subr.bf16.mxu0 0
    %1194 = vmatpush1.bf16.msra.mxu0 0
    %1195 = vmatprep.subr.bf16.mxu0 0
    %1196 = vmatpush1.bf16.msra.mxu0 0
    %1197 = vmatprep.subr.bf16.mxu0 0
    %1198 = vmatpush1.bf16.msra.mxu0 0
    %1199 = vmatprep.subr.bf16.mxu0 0
    %1200 = vmatpush1.bf16.msra.mxu0 0
    %1201 = vmatprep.subr.bf16.mxu0 0
    %1202 = vmatpush1.bf16.msra.mxu0 0
    %1203 = vmatprep.mubr.bf16.mxu0 0
    %1204 = vmatmul.mubr.bf16.gmra.mrb[0].mxu0 %v1169
    %v1205 = vpop.f32.mrb[0].mxu0
    %v1206 = vadd.f32 0.0, %v1205
    %v1207 = vpop.f32.mrb[0].mxu0
    %v1208 = vadd.f32 0.0, %v1207
    %v1209 = vpop.f32.mrb[0].mxu0
    %v1210 = vpop.f32.mrb[0].mxu0
    %1211 = vdwg.mxu0
    %1212 = vmatprep.subr.bf16.mxu0 %v304
    %1213 = vmatpush1.bf16.msra.mxu0 %v303
    %1214 = vmatprep.subr.bf16.mxu0 0
    %1215 = vmatpush1.bf16.msra.mxu0 0
    %1216 = vmatprep.subr.bf16.mxu0 0
    %1217 = vmatpush1.bf16.msra.mxu0 0
    %1218 = vmatprep.subr.bf16.mxu0 0
    %1219 = vmatpush1.bf16.msra.mxu0 0
    %1220 = vmatprep.subr.bf16.mxu0 0
    %1221 = vmatpush1.bf16.msra.mxu0 0
    %1222 = vmatprep.subr.bf16.mxu0 0
    %1223 = vmatpush1.bf16.msra.mxu0 0
    %1224 = vmatprep.subr.bf16.mxu0 0
    %1225 = vmatpush1.bf16.msra.mxu0 0
    %1226 = vmatprep.subr.bf16.mxu0 0
    %1227 = vmatpush1.bf16.msra.mxu0 0
    %1228 = vmatprep.subr.bf16.mxu0 0
    %1229 = vmatpush1.bf16.msra.mxu0 0
    %1230 = vmatprep.subr.bf16.mxu0 0
    %1231 = vmatpush1.bf16.msra.mxu0 0
    %1232 = vmatprep.subr.bf16.mxu0 0
    %1233 = vmatpush1.bf16.msra.mxu0 0
    %1234 = vmatprep.subr.bf16.mxu0 0
    %1235 = vmatpush1.bf16.msra.mxu0 0
    %1236 = vmatprep.subr.bf16.mxu0 0
    %1237 = vmatpush1.bf16.msra.mxu0 0
    %1238 = vmatprep.subr.bf16.mxu0 0
    %1239 = vmatpush1.bf16.msra.mxu0 0
    %1240 = vmatprep.subr.bf16.mxu0 0
    %1241 = vmatpush1.bf16.msra.mxu0 0
    %1242 = vmatprep.subr.bf16.mxu0 0
    %1243 = vmatpush1.bf16.msra.mxu0 0
    %1244 = vmatprep.mubr.bf16.mxu0 0
    %1245 = vmatmul.mubr.bf16.gmra.mrb[0].mxu0 %v1169
    %v1246 = vpop.f32.mrb[0].mxu0
    %v1247 = vadd.f32 0.0, %v1246
    %v1248 = vpop.f32.mrb[0].mxu0
    %v1249 = vadd.f32 0.0, %v1248
    %v1250 = vpop.f32.mrb[0].mxu0
    %v1251 = vpop.f32.mrb[0].mxu0
    %1252 = vdwg.mxu0
    %1253 = vmatprep.subr.bf16.mxu0 %v492
    %1254 = vmatpush1.bf16.msra.mxu0 %v491
    %1255 = vmatprep.subr.bf16.mxu0 %v496
    %1256 = vmatpush1.bf16.msra.mxu0 %v495
    %1257 = vmatprep.subr.bf16.mxu0 %v500
    %1258 = vmatpush1.bf16.msra.mxu0 %v499
    %1259 = vmatprep.subr.bf16.mxu0 %v504
    %1260 = vmatpush1.bf16.msra.mxu0 %v503
    %1261 = vmatprep.subr.bf16.mxu0 %v508
    %1262 = vmatpush1.bf16.msra.mxu0 %v507
    %1263 = vmatprep.subr.bf16.mxu0 %v512
    %1264 = vmatpush1.bf16.msra.mxu0 %v511
    %1265 = vmatprep.subr.bf16.mxu0 %v516
    %1266 = vmatpush1.bf16.msra.mxu0 %v515
    %1267 = vmatprep.subr.bf16.mxu0 %v520
    %1268 = vmatpush1.bf16.msra.mxu0 %v519
    %1269 = vmatprep.subr.bf16.mxu0 0
    %1270 = vmatpush1.bf16.msra.mxu0 0
    %1271 = vmatprep.subr.bf16.mxu0 0
    %1272 = vmatpush1.bf16.msra.mxu0 0
    %1273 = vmatprep.subr.bf16.mxu0 0
    %1274 = vmatpush1.bf16.msra.mxu0 0
    %1275 = vmatprep.subr.bf16.mxu0 0
    %1276 = vmatpush1.bf16.msra.mxu0 0
    %1277 = vmatprep.subr.bf16.mxu0 0
    %1278 = vmatpush1.bf16.msra.mxu0 0
    %1279 = vmatprep.subr.bf16.mxu0 0
    %1280 = vmatpush1.bf16.msra.mxu0 0
    %1281 = vmatprep.subr.bf16.mxu0 0
    %1282 = vmatpush1.bf16.msra.mxu0 0
    %1283 = vmatprep.subr.bf16.mxu0 0
    %1284 = vmatpush1.bf16.msra.mxu0 0
    %1285 = vmatprep.mubr.bf16.mxu0 0
    %1286 = vmatmul.mubr.bf16.gmra.mrb[0].mxu0 %v659
    %v1287 = vpop.f32.mrb[0].mxu0
    %v1288 = vadd.f32 %v1206, %v1287
    %v1289 = vpop.f32.mrb[0].mxu0
    %v1290 = vadd.f32 %v1208, %v1289
    %v1291 = vpop.f32.mrb[0].mxu0
    %v1292 = vpop.f32.mrb[0].mxu0
    %1293 = vdwg.mxu0
    %1294 = vmatprep.subr.bf16.mxu0 %v494
    %1295 = vmatpush1.bf16.msra.mxu0 %v493
    %1296 = vmatprep.subr.bf16.mxu0 %v498
    %1297 = vmatpush1.bf16.msra.mxu0 %v497
    %1298 = vmatprep.subr.bf16.mxu0 %v502
    %1299 = vmatpush1.bf16.msra.mxu0 %v501
    %1300 = vmatprep.subr.bf16.mxu0 %v506
    %1301 = vmatpush1.bf16.msra.mxu0 %v505
    %1302 = vmatprep.subr.bf16.mxu0 %v510
    %1303 = vmatpush1.bf16.msra.mxu0 %v509
    %1304 = vmatprep.subr.bf16.mxu0 %v514
    %1305 = vmatpush1.bf16.msra.mxu0 %v513
    %1306 = vmatprep.subr.bf16.mxu0 %v518
    %1307 = vmatpush1.bf16.msra.mxu0 %v517
    %1308 = vmatprep.subr.bf16.mxu0 %v522
    %1309 = vmatpush1.bf16.msra.mxu0 %v521
    %1310 = vmatprep.subr.bf16.mxu0 0
    %1311 = vmatpush1.bf16.msra.mxu0 0
    %1312 = vmatprep.subr.bf16.mxu0 0
    %1313 = vmatpush1.bf16.msra.mxu0 0
    %1314 = vmatprep.subr.bf16.mxu0 0
    %1315 = vmatpush1.bf16.msra.mxu0 0
    %1316 = vmatprep.subr.bf16.mxu0 0
    %1317 = vmatpush1.bf16.msra.mxu0 0
    %1318 = vmatprep.subr.bf16.mxu0 0
    %1319 = vmatpush1.bf16.msra.mxu0 0
    %1320 = vmatprep.subr.bf16.mxu0 0
    %1321 = vmatpush1.bf16.msra.mxu0 0
    %1322 = vmatprep.subr.bf16.mxu0 0
    %1323 = vmatpush1.bf16.msra.mxu0 0
    %1324 = vmatprep.subr.bf16.mxu0 0
    %1325 = vmatpush1.bf16.msra.mxu0 0
    %1326 = vmatprep.mubr.bf16.mxu0 0
    %1327 = vmatmul.mubr.bf16.gmra.mrb[0].mxu0 %v659
    %v1328 = vpop.f32.mrb[0].mxu0
    %v1329 = vadd.f32 %v1247, %v1328
    %v1330 = vpop.f32.mrb[0].mxu0
    %v1331 = vadd.f32 %v1249, %v1330
    %v1332 = vpop.f32.mrb[0].mxu0
    %v1333 = vpop.f32.mrb[0].mxu0
    %1334 = vdwg.mxu0
    %v1335 = vadd.f32 %v1288, %v224
    %v1336 = vadd.f32 %v1290, %v228
    %v1337 = vadd.f32 %v1329, %v232
    %v1338 = vadd.f32 %v1331, %v236
    %v1339 = vmul.f32 %v1335, 0.5
    %v1340 = vmul.f32 %v1336, 0.5
    %v1341 = vmul.f32 %v1337, 0.5
    %v1342 = vtanh.pop %v1339
    %v1343 = vtanh.pop %v1340
    %v1344 = vtanh.pop %v1341
    %v1345 = vmul.f32 %v1342, 0.5
    %v1346 = vmul.f32 %v1343, 0.5
    %v1347 = vmul.f32 %v1344, 0.5
    %v1348 = vadd.f32 %v1345, 0.5
    %v1349 = vadd.f32 %v1346, 0.5
    %v1350 = vadd.f32 %v1347, 0.5
    %v1351 = vtanh.pop %v1338
    %v1352 = vmul.f32 %v1349, %v656
    %v1353 = vmul.f32 %v1348, %v1351
    %v1354 = vadd.f32 %v1352, %v1353
    %v1355 = vtanh.pop %v1354
    %v1356 = vmul.f32 %v1350, %v1355
    %v1357 = vpack.c.bf16 %v1165, %v1165
    %v1358 = vpack.c.bf16 %v1356, %v1356
    %1359 = vmatprep.subr.bf16.mxu0 %v757
    %1360 = vmatpush1.bf16.msra.mxu0 %v756
    %1361 = vmatprep.subr.bf16.mxu0 %v761
    %1362 = vmatpush1.bf16.msra.mxu0 %v760
    %1363 = vmatprep.subr.bf16.mxu0 %v765
    %1364 = vmatpush1.bf16.msra.mxu0 %v764
    %1365 = vmatprep.subr.bf16.mxu0 %v769
    %1366 = vmatpush1.bf16.msra.mxu0 %v768
    %1367 = vmatprep.subr.bf16.mxu0 %v773
    %1368 = vmatpush1.bf16.msra.mxu0 %v772
    %1369 = vmatprep.subr.bf16.mxu0 %v777
    %1370 = vmatpush1.bf16.msra.mxu0 %v776
    %1371 = vmatprep.subr.bf16.mxu0 %v781
    %1372 = vmatpush1.bf16.msra.mxu0 %v780
    %1373 = vmatprep.subr.bf16.mxu0 %v785
    %1374 = vmatpush1.bf16.msra.mxu0 %v784
    %1375 = vmatprep.subr.bf16.mxu0 0
    %1376 = vmatpush1.bf16.msra.mxu0 0
    %1377 = vmatprep.subr.bf16.mxu0 0
    %1378 = vmatpush1.bf16.msra.mxu0 0
    %1379 = vmatprep.subr.bf16.mxu0 0
    %1380 = vmatpush1.bf16.msra.mxu0 0
    %1381 = vmatprep.subr.bf16.mxu0 0
    %1382 = vmatpush1.bf16.msra.mxu0 0
    %1383 = vmatprep.subr.bf16.mxu0 0
    %1384 = vmatpush1.bf16.msra.mxu0 0
    %1385 = vmatprep.subr.bf16.mxu0 0
    %1386 = vmatpush1.bf16.msra.mxu0 0
    %1387 = vmatprep.subr.bf16.mxu0 0
    %1388 = vmatpush1.bf16.msra.mxu0 0
    %1389 = vmatprep.subr.bf16.mxu0 0
    %1390 = vmatpush1.bf16.msra.mxu0 0
    %1391 = vmatprep.mubr.bf16.mxu0 0
    %1392 = vmatmul.mubr.bf16.gmra.mrb[0].mxu0 %v1358
    %v1393 = vpop.f32.mrb[0].mxu0
    %v1394 = vadd.f32 0.0, %v1393
    %v1395 = vpop.f32.mrb[0].mxu0
    %v1396 = vadd.f32 0.0, %v1395
    %v1397 = vpop.f32.mrb[0].mxu0
    %v1398 = vpop.f32.mrb[0].mxu0
    %1399 = vdwg.mxu0
    %1400 = vmatprep.subr.bf16.mxu0 %v759
    %1401 = vmatpush1.bf16.msra.mxu0 %v758
    %1402 = vmatprep.subr.bf16.mxu0 %v763
    %1403 = vmatpush1.bf16.msra.mxu0 %v762
    %1404 = vmatprep.subr.bf16.mxu0 %v767
    %1405 = vmatpush1.bf16.msra.mxu0 %v766
    %1406 = vmatprep.subr.bf16.mxu0 %v771
    %1407 = vmatpush1.bf16.msra.mxu0 %v770
    %1408 = vmatprep.subr.bf16.mxu0 %v775
    %1409 = vmatpush1.bf16.msra.mxu0 %v774
    %1410 = vmatprep.subr.bf16.mxu0 %v779
    %1411 = vmatpush1.bf16.msra.mxu0 %v778
    %1412 = vmatprep.subr.bf16.mxu0 %v783
    %1413 = vmatpush1.bf16.msra.mxu0 %v782
    %1414 = vmatprep.subr.bf16.mxu0 %v787
    %1415 = vmatpush1.bf16.msra.mxu0 %v786
    %1416 = vmatprep.subr.bf16.mxu0 0
    %1417 = vmatpush1.bf16.msra.mxu0 0
    %1418 = vmatprep.subr.bf16.mxu0 0
    %1419 = vmatpush1.bf16.msra.mxu0 0
    %1420 = vmatprep.subr.bf16.mxu0 0
    %1421 = vmatpush1.bf16.msra.mxu0 0
    %1422 = vmatprep.subr.bf16.mxu0 0
    %1423 = vmatpush1.bf16.msra.mxu0 0
    %1424 = vmatprep.subr.bf16.mxu0 0
    %1425 = vmatpush1.bf16.msra.mxu0 0
    %1426 = vmatprep.subr.bf16.mxu0 0
    %1427 = vmatpush1.bf16.msra.mxu0 0
    %1428 = vmatprep.subr.bf16.mxu0 0
    %1429 = vmatpush1.bf16.msra.mxu0 0
    %1430 = vmatprep.subr.bf16.mxu0 0
    %1431 = vmatpush1.bf16.msra.mxu0 0
    %1432 = vmatprep.mubr.bf16.mxu0 0
    %1433 = vmatmul.mubr.bf16.gmra.mrb[0].mxu0 %v1358
    %v1434 = vpop.f32.mrb[0].mxu0
    %v1435 = vadd.f32 0.0, %v1434
    %v1436 = vpop.f32.mrb[0].mxu0
    %v1437 = vadd.f32 0.0, %v1436
    %v1438 = vpop.f32.mrb[0].mxu0
    %v1439 = vpop.f32.mrb[0].mxu0
    %1440 = vdwg.mxu0
    %1441 = vmatprep.subr.bf16.mxu0 %v999
    %1442 = vmatpush1.bf16.msra.mxu0 %v998
    %1443 = vmatprep.subr.bf16.mxu0 %v1003
    %1444 = vmatpush1.bf16.msra.mxu0 %v1002
    %1445 = vmatprep.subr.bf16.mxu0 %v1007
    %1446 = vmatpush1.bf16.msra.mxu0 %v1006
    %1447 = vmatprep.subr.bf16.mxu0 %v1011
    %1448 = vmatpush1.bf16.msra.mxu0 %v1010
    %1449 = vmatprep.subr.bf16.mxu0 %v1015
    %1450 = vmatpush1.bf16.msra.mxu0 %v1014
    %1451 = vmatprep.subr.bf16.mxu0 %v1019
    %1452 = vmatpush1.bf16.msra.mxu0 %v1018
    %1453 = vmatprep.subr.bf16.mxu0 %v1023
    %1454 = vmatpush1.bf16.msra.mxu0 %v1022
    %1455 = vmatprep.subr.bf16.mxu0 %v1027
    %1456 = vmatpush1.bf16.msra.mxu0 %v1026
    %1457 = vmatprep.subr.bf16.mxu0 0
    %1458 = vmatpush1.bf16.msra.mxu0 0
    %1459 = vmatprep.subr.bf16.mxu0 0
    %1460 = vmatpush1.bf16.msra.mxu0 0
    %1461 = vmatprep.subr.bf16.mxu0 0
    %1462 = vmatpush1.bf16.msra.mxu0 0
    %1463 = vmatprep.subr.bf16.mxu0 0
    %1464 = vmatpush1.bf16.msra.mxu0 0
    %1465 = vmatprep.subr.bf16.mxu0 0
    %1466 = vmatpush1.bf16.msra.mxu0 0
    %1467 = vmatprep.subr.bf16.mxu0 0
    %1468 = vmatpush1.bf16.msra.mxu0 0
    %1469 = vmatprep.subr.bf16.mxu0 0
    %1470 = vmatpush1.bf16.msra.mxu0 0
    %1471 = vmatprep.subr.bf16.mxu0 0
    %1472 = vmatpush1.bf16.msra.mxu0 0
    %1473 = vmatprep.mubr.bf16.mxu0 0
    %1474 = vmatmul.mubr.bf16.gmra.mrb[0].mxu0 %v1357
    %v1475 = vpop.f32.mrb[0].mxu0
    %v1476 = vadd.f32 %v1394, %v1475
    %v1477 = vpop.f32.mrb[0].mxu0
    %v1478 = vadd.f32 %v1396, %v1477
    %v1479 = vpop.f32.mrb[0].mxu0
    %v1480 = vpop.f32.mrb[0].mxu0
    %1481 = vdwg.mxu0
    %1482 = vmatprep.subr.bf16.mxu0 %v1001
    %1483 = vmatpush1.bf16.msra.mxu0 %v1000
    %1484 = vmatprep.subr.bf16.mxu0 %v1005
    %1485 = vmatpush1.bf16.msra.mxu0 %v1004
    %1486 = vmatprep.subr.bf16.mxu0 %v1009
    %1487 = vmatpush1.bf16.msra.mxu0 %v1008
    %1488 = vmatprep.subr.bf16.mxu0 %v1013
    %1489 = vmatpush1.bf16.msra.mxu0 %v1012
    %1490 = vmatprep.subr.bf16.mxu0 %v1017
    %1491 = vmatpush1.bf16.msra.mxu0 %v1016
    %1492 = vmatprep.subr.bf16.mxu0 %v1021
    %1493 = vmatpush1.bf16.msra.mxu0 %v1020
    %1494 = vmatprep.subr.bf16.mxu0 %v1025
    %1495 = vmatpush1.bf16.msra.mxu0 %v1024
    %1496 = vmatprep.subr.bf16.mxu0 %v1029
    %1497 = vmatpush1.bf16.msra.mxu0 %v1028
    %1498 = vmatprep.subr.bf16.mxu0 0
    %1499 = vmatpush1.bf16.msra.mxu0 0
    %1500 = vmatprep.subr.bf16.mxu0 0
    %1501 = vmatpush1.bf16.msra.mxu0 0
    %1502 = vmatprep.subr.bf16.mxu0 0
    %1503 = vmatpush1.bf16.msra.mxu0 0
    %1504 = vmatprep.subr.bf16.mxu0 0
    %1505 = vmatpush1.bf16.msra.mxu0 0
    %1506 = vmatprep.subr.bf16.mxu0 0
    %1507 = vmatpush1.bf16.msra.mxu0 0
    %1508 = vmatprep.subr.bf16.mxu0 0
    %1509 = vmatpush1.bf16.msra.mxu0 0
    %1510 = vmatprep.subr.bf16.mxu0 0
    %1511 = vmatpush1.bf16.msra.mxu0 0
    %1512 = vmatprep.subr.bf16.mxu0 0
    %1513 = vmatpush1.bf16.msra.mxu0 0
    %1514 = vmatprep.mubr.bf16.mxu0 0
    %1515 = vmatmul.mubr.bf16.gmra.mrb[0].mxu0 %v1357
    %v1516 = vpop.f32.mrb[0].mxu0
    %v1517 = vadd.f32 %v1435, %v1516
    %v1518 = vpop.f32.mrb[0].mxu0
    %v1519 = vadd.f32 %v1437, %v1518
    %v1520 = vpop.f32.mrb[0].mxu0
    %v1521 = vpop.f32.mrb[0].mxu0
    %1522 = vdwg.mxu0
    %v1523 = vadd.f32 %v1476, %v246
    %v1524 = vadd.f32 %v1478, %v250
    %v1525 = vadd.f32 %v1517, %v254
    %v1526 = vadd.f32 %v1519, %v258
    %v1527 = vmul.f32 %v1523, 0.5
    %v1528 = vmul.f32 %v1524, 0.5
    %v1529 = vmul.f32 %v1525, 0.5
    %v1530 = vtanh.pop %v1527
    %v1531 = vtanh.pop %v1528
    %v1532 = vtanh.pop %v1529
    %v1533 = vmul.f32 %v1530, 0.5
    %v1534 = vmul.f32 %v1531, 0.5
    %v1535 = vmul.f32 %v1532, 0.5
    %v1536 = vadd.f32 %v1533, 0.5
    %v1537 = vadd.f32 %v1534, 0.5
    %v1538 = vadd.f32 %v1535, 0.5
    %v1539 = vtanh.pop %v1526
    %v1540 = vmul.f32 %v1537, %v1163
    %v1541 = vmul.f32 %v1536, %v1539
    %v1542 = vadd.f32 %v1540, %v1541
    %v1543 = vtanh.pop %v1542
    %v1544 = vmul.f32 %v1538, %v1543
    %s1545 = scalar_lea.vmem [#allocation2], 2
    %v1546 = vld [vmem:[%s1545] sm:$0x1]
    %v1548 = vsel %vm309, %v1546, 0
    %1550 = vmatprep.subr.bf16.mxu0 %v302
    %1551 = vmatpush1.bf16.msra.mxu0 %v301
    %1552 = vmatprep.subr.bf16.mxu0 0
    %1553 = vmatpush1.bf16.msra.mxu0 0
    %1554 = vmatprep.subr.bf16.mxu0 0
    %1555 = vmatpush1.bf16.msra.mxu0 0
    %1556 = vmatprep.subr.bf16.mxu0 0
    %1557 = vmatpush1.bf16.msra.mxu0 0
    %1558 = vmatprep.subr.bf16.mxu0 0
    %1559 = vmatpush1.bf16.msra.mxu0 0
    %1560 = vmatprep.subr.bf16.mxu0 0
    %1561 = vmatpush1.bf16.msra.mxu0 0
    %1562 = vmatprep.subr.bf16.mxu0 0
    %1563 = vmatpush1.bf16.msra.mxu0 0
    %1564 = vmatprep.subr.bf16.mxu0 0
    %1565 = vmatpush1.bf16.msra.mxu0 0
    %1566 = vmatprep.subr.bf16.mxu0 0
    %1567 = vmatpush1.bf16.msra.mxu0 0
    %1568 = vmatprep.subr.bf16.mxu0 0
    %1569 = vmatpush1.bf16.msra.mxu0 0
    %1570 = vmatprep.subr.bf16.mxu0 0
    %1571 = vmatpush1.bf16.msra.mxu0 0
    %1572 = vmatprep.subr.bf16.mxu0 0
    %1573 = vmatpush1.bf16.msra.mxu0 0
    %1574 = vmatprep.subr.bf16.mxu0 0
    %1575 = vmatpush1.bf16.msra.mxu0 0
    %1576 = vmatprep.subr.bf16.mxu0 0
    %1577 = vmatpush1.bf16.msra.mxu0 0
    %1578 = vmatprep.subr.bf16.mxu0 0
    %1579 = vmatpush1.bf16.msra.mxu0 0
    %1580 = vmatprep.subr.bf16.mxu0 0
    %1581 = vmatpush1.bf16.msra.mxu0 0
    %1582 = vmatprep.mubr.bf16.mxu0 0
    %1583 = vmatmul.mubr.bf16.gmra.mrb[0].mxu0 %v1548
    %v1584 = vpop.f32.mrb[0].mxu0
    %v1585 = vadd.f32 0.0, %v1584
    %v1586 = vpop.f32.mrb[0].mxu0
    %v1587 = vadd.f32 0.0, %v1586
    %v1588 = vpop.f32.mrb[0].mxu0
    %v1589 = vpop.f32.mrb[0].mxu0
    %1590 = vdwg.mxu0
    %1591 = vmatprep.subr.bf16.mxu0 %v304
    %1592 = vmatpush1.bf16.msra.mxu0 %v303
    %1593 = vmatprep.subr.bf16.mxu0 0
    %1594 = vmatpush1.bf16.msra.mxu0 0
    %1595 = vmatprep.subr.bf16.mxu0 0
    %1596 = vmatpush1.bf16.msra.mxu0 0
    %1597 = vmatprep.subr.bf16.mxu0 0
    %1598 = vmatpush1.bf16.msra.mxu0 0
    %1599 = vmatprep.subr.bf16.mxu0 0
    %1600 = vmatpush1.bf16.msra.mxu0 0
    %1601 = vmatprep.subr.bf16.mxu0 0
    %1602 = vmatpush1.bf16.msra.mxu0 0
    %1603 = vmatprep.subr.bf16.mxu0 0
    %1604 = vmatpush1.bf16.msra.mxu0 0
    %1605 = vmatprep.subr.bf16.mxu0 0
    %1606 = vmatpush1.bf16.msra.mxu0 0
    %1607 = vmatprep.subr.bf16.mxu0 0
    %1608 = vmatpush1.bf16.msra.mxu0 0
    %1609 = vmatprep.subr.bf16.mxu0 0
    %1610 = vmatpush1.bf16.msra.mxu0 0
    %1611 = vmatprep.subr.bf16.mxu0 0
    %1612 = vmatpush1.bf16.msra.mxu0 0
    %1613 = vmatprep.subr.bf16.mxu0 0
    %1614 = vmatpush1.bf16.msra.mxu0 0
    %1615 = vmatprep.subr.bf16.mxu0 0
    %1616 = vmatpush1.bf16.msra.mxu0 0
    %1617 = vmatprep.subr.bf16.mxu0 0
    %1618 = vmatpush1.bf16.msra.mxu0 0
    %1619 = vmatprep.subr.bf16.mxu0 0
    %1620 = vmatpush1.bf16.msra.mxu0 0
    %1621 = vmatprep.subr.bf16.mxu0 0
    %1622 = vmatpush1.bf16.msra.mxu0 0
    %1623 = vmatprep.mubr.bf16.mxu0 0
    %1624 = vmatmul.mubr.bf16.gmra.mrb[0].mxu0 %v1548
    %v1625 = vpop.f32.mrb[0].mxu0
    %v1626 = vadd.f32 0.0, %v1625
    %v1627 = vpop.f32.mrb[0].mxu0
    %v1628 = vadd.f32 0.0, %v1627
    %v1629 = vpop.f32.mrb[0].mxu0
    %v1630 = vpop.f32.mrb[0].mxu0
    %1631 = vdwg.mxu0
    %1632 = vmatprep.subr.bf16.mxu0 %v492
    %1633 = vmatpush1.bf16.msra.mxu0 %v491
    %1634 = vmatprep.subr.bf16.mxu0 %v496
    %1635 = vmatpush1.bf16.msra.mxu0 %v495
    %1636 = vmatprep.subr.bf16.mxu0 %v500
    %1637 = vmatpush1.bf16.msra.mxu0 %v499
    %1638 = vmatprep.subr.bf16.mxu0 %v504
    %1639 = vmatpush1.bf16.msra.mxu0 %v503
    %1640 = vmatprep.subr.bf16.mxu0 %v508
    %1641 = vmatpush1.bf16.msra.mxu0 %v507
    %1642 = vmatprep.subr.bf16.mxu0 %v512
    %1643 = vmatpush1.bf16.msra.mxu0 %v511
    %1644 = vmatprep.subr.bf16.mxu0 %v516
    %1645 = vmatpush1.bf16.msra.mxu0 %v515
    %1646 = vmatprep.subr.bf16.mxu0 %v520
    %1647 = vmatpush1.bf16.msra.mxu0 %v519
    %1648 = vmatprep.subr.bf16.mxu0 0
    %1649 = vmatpush1.bf16.msra.mxu0 0
    %1650 = vmatprep.subr.bf16.mxu0 0
    %1651 = vmatpush1.bf16.msra.mxu0 0
    %1652 = vmatprep.subr.bf16.mxu0 0
    %1653 = vmatpush1.bf16.msra.mxu0 0
    %1654 = vmatprep.subr.bf16.mxu0 0
    %1655 = vmatpush1.bf16.msra.mxu0 0
    %1656 = vmatprep.subr.bf16.mxu0 0
    %1657 = vmatpush1.bf16.msra.mxu0 0
    %1658 = vmatprep.subr.bf16.mxu0 0
    %1659 = vmatpush1.bf16.msra.mxu0 0
    %1660 = vmatprep.subr.bf16.mxu0 0
    %1661 = vmatpush1.bf16.msra.mxu0 0
    %1662 = vmatprep.subr.bf16.mxu0 0
    %1663 = vmatpush1.bf16.msra.mxu0 0
    %1664 = vmatprep.mubr.bf16.mxu0 0
    %1665 = vmatmul.mubr.bf16.gmra.mrb[0].mxu0 %v1358
    %v1666 = vpop.f32.mrb[0].mxu0
    %v1667 = vadd.f32 %v1585, %v1666
    %v1668 = vpop.f32.mrb[0].mxu0
    %v1669 = vadd.f32 %v1587, %v1668
    %v1670 = vpop.f32.mrb[0].mxu0
    %v1671 = vpop.f32.mrb[0].mxu0
    %1672 = vdwg.mxu0
    %1673 = vmatprep.subr.bf16.mxu0 %v494
    %1674 = vmatpush1.bf16.msra.mxu0 %v493
    %1675 = vmatprep.subr.bf16.mxu0 %v498
    %1676 = vmatpush1.bf16.msra.mxu0 %v497
    %1677 = vmatprep.subr.bf16.mxu0 %v502
    %1678 = vmatpush1.bf16.msra.mxu0 %v501
    %1679 = vmatprep.subr.bf16.mxu0 %v506
    %1680 = vmatpush1.bf16.msra.mxu0 %v505
    %1681 = vmatprep.subr.bf16.mxu0 %v510
    %1682 = vmatpush1.bf16.msra.mxu0 %v509
    %1683 = vmatprep.subr.bf16.mxu0 %v514
    %1684 = vmatpush1.bf16.msra.mxu0 %v513
    %1685 = vmatprep.subr.bf16.mxu0 %v518
    %1686 = vmatpush1.bf16.msra.mxu0 %v517
    %1687 = vmatprep.subr.bf16.mxu0 %v522
    %1688 = vmatpush1.bf16.msra.mxu0 %v521
    %1689 = vmatprep.subr.bf16.mxu0 0
    %1690 = vmatpush1.bf16.msra.mxu0 0
    %1691 = vmatprep.subr.bf16.mxu0 0
    %1692 = vmatpush1.bf16.msra.mxu0 0
    %1693 = vmatprep.subr.bf16.mxu0 0
    %1694 = vmatpush1.bf16.msra.mxu0 0
    %1695 = vmatprep.subr.bf16.mxu0 0
    %1696 = vmatpush1.bf16.msra.mxu0 0
    %1697 = vmatprep.subr.bf16.mxu0 0
    %1698 = vmatpush1.bf16.msra.mxu0 0
    %1699 = vmatprep.subr.bf16.mxu0 0
    %1700 = vmatpush1.bf16.msra.mxu0 0
    %1701 = vmatprep.subr.bf16.mxu0 0
    %1702 = vmatpush1.bf16.msra.mxu0 0
    %1703 = vmatprep.subr.bf16.mxu0 0
    %1704 = vmatpush1.bf16.msra.mxu0 0
    %1705 = vmatprep.mubr.bf16.mxu0 0
    %1706 = vmatmul.mubr.bf16.gmra.mrb[0].mxu0 %v1358
    %v1707 = vpop.f32.mrb[0].mxu0
    %v1708 = vadd.f32 %v1626, %v1707
    %v1709 = vpop.f32.mrb[0].mxu0
    %v1710 = vadd.f32 %v1628, %v1709
    %v1711 = vpop.f32.mrb[0].mxu0
    %v1712 = vpop.f32.mrb[0].mxu0
    %1713 = vdwg.mxu0
    %v1714 = vadd.f32 %v1667, %v224
    %v1715 = vadd.f32 %v1669, %v228
    %v1716 = vadd.f32 %v1708, %v232
    %v1717 = vadd.f32 %v1710, %v236
    %v1718 = vmul.f32 %v1714, 0.5
    %v1719 = vmul.f32 %v1715, 0.5
    %v1720 = vmul.f32 %v1716, 0.5
    %v1721 = vtanh.pop %v1718
    %v1722 = vtanh.pop %v1719
    %v1723 = vtanh.pop %v1720
    %v1724 = vmul.f32 %v1721, 0.5
    %v1725 = vmul.f32 %v1722, 0.5
    %v1726 = vmul.f32 %v1723, 0.5
    %v1727 = vadd.f32 %v1724, 0.5
    %v1728 = vadd.f32 %v1725, 0.5
    %v1729 = vadd.f32 %v1726, 0.5
    %v1730 = vtanh.pop %v1717
    %v1731 = vmul.f32 %v1728, %v1354
    %v1732 = vmul.f32 %v1727, %v1730
    %v1733 = vadd.f32 %v1731, %v1732
    %v1734 = vtanh.pop %v1733
    %v1735 = vmul.f32 %v1729, %v1734
    %v1736 = vpack.c.bf16 %v1544, %v1544
    %v1737 = vpack.c.bf16 %v1735, %v1735
    %1738 = vmatprep.subr.bf16.mxu0 %v757
    %1739 = vmatpush1.bf16.msra.mxu0 %v756
    %1740 = vmatprep.subr.bf16.mxu0 %v761
    %1741 = vmatpush1.bf16.msra.mxu0 %v760
    %1742 = vmatprep.subr.bf16.mxu0 %v765
    %1743 = vmatpush1.bf16.msra.mxu0 %v764
    %1744 = vmatprep.subr.bf16.mxu0 %v769
    %1745 = vmatpush1.bf16.msra.mxu0 %v768
    %1746 = vmatprep.subr.bf16.mxu0 %v773
    %1747 = vmatpush1.bf16.msra.mxu0 %v772
    %1748 = vmatprep.subr.bf16.mxu0 %v777
    %1749 = vmatpush1.bf16.msra.mxu0 %v776
    %1750 = vmatprep.subr.bf16.mxu0 %v781
    %1751 = vmatpush1.bf16.msra.mxu0 %v780
    %1752 = vmatprep.subr.bf16.mxu0 %v785
    %1753 = vmatpush1.bf16.msra.mxu0 %v784
    %1754 = vmatprep.subr.bf16.mxu0 0
    %1755 = vmatpush1.bf16.msra.mxu0 0
    %1756 = vmatprep.subr.bf16.mxu0 0
    %1757 = vmatpush1.bf16.msra.mxu0 0
    %1758 = vmatprep.subr.bf16.mxu0 0
    %1759 = vmatpush1.bf16.msra.mxu0 0
    %1760 = vmatprep.subr.bf16.mxu0 0
    %1761 = vmatpush1.bf16.msra.mxu0 0
    %1762 = vmatprep.subr.bf16.mxu0 0
    %1763 = vmatpush1.bf16.msra.mxu0 0
    %1764 = vmatprep.subr.bf16.mxu0 0
    %1765 = vmatpush1.bf16.msra.mxu0 0
    %1766 = vmatprep.subr.bf16.mxu0 0
    %1767 = vmatpush1.bf16.msra.mxu0 0
    %1768 = vmatprep.subr.bf16.mxu0 0
    %1769 = vmatpush1.bf16.msra.mxu0 0
    %1770 = vmatprep.mubr.bf16.mxu0 0
    %1771 = vmatmul.mubr.bf16.gmra.mrb[0].mxu0 %v1737
    %v1772 = vpop.f32.mrb[0].mxu0
    %v1773 = vadd.f32 0.0, %v1772
    %v1774 = vpop.f32.mrb[0].mxu0
    %v1775 = vadd.f32 0.0, %v1774
    %v1776 = vpop.f32.mrb[0].mxu0
    %v1777 = vpop.f32.mrb[0].mxu0
    %1778 = vdwg.mxu0
    %1779 = vmatprep.subr.bf16.mxu0 %v759
    %1780 = vmatpush1.bf16.msra.mxu0 %v758
    %1781 = vmatprep.subr.bf16.mxu0 %v763
    %1782 = vmatpush1.bf16.msra.mxu0 %v762
    %1783 = vmatprep.subr.bf16.mxu0 %v767
    %1784 = vmatpush1.bf16.msra.mxu0 %v766
    %1785 = vmatprep.subr.bf16.mxu0 %v771
    %1786 = vmatpush1.bf16.msra.mxu0 %v770
    %1787 = vmatprep.subr.bf16.mxu0 %v775
    %1788 = vmatpush1.bf16.msra.mxu0 %v774
    %1789 = vmatprep.subr.bf16.mxu0 %v779
    %1790 = vmatpush1.bf16.msra.mxu0 %v778
    %1791 = vmatprep.subr.bf16.mxu0 %v783
    %1792 = vmatpush1.bf16.msra.mxu0 %v782
    %1793 = vmatprep.subr.bf16.mxu0 %v787
    %1794 = vmatpush1.bf16.msra.mxu0 %v786
    %1795 = vmatprep.subr.bf16.mxu0 0
    %1796 = vmatpush1.bf16.msra.mxu0 0
    %1797 = vmatprep.subr.bf16.mxu0 0
    %1798 = vmatpush1.bf16.msra.mxu0 0
    %1799 = vmatprep.subr.bf16.mxu0 0
    %1800 = vmatpush1.bf16.msra.mxu0 0
    %1801 = vmatprep.subr.bf16.mxu0 0
    %1802 = vmatpush1.bf16.msra.mxu0 0
    %1803 = vmatprep.subr.bf16.mxu0 0
    %1804 = vmatpush1.bf16.msra.mxu0 0
    %1805 = vmatprep.subr.bf16.mxu0 0
    %1806 = vmatpush1.bf16.msra.mxu0 0
    %1807 = vmatprep.subr.bf16.mxu0 0
    %1808 = vmatpush1.bf16.msra.mxu0 0
    %1809 = vmatprep.subr.bf16.mxu0 0
    %1810 = vmatpush1.bf16.msra.mxu0 0
    %1811 = vmatprep.mubr.bf16.mxu0 0
    %1812 = vmatmul.mubr.bf16.gmra.mrb[0].mxu0 %v1737
    %v1813 = vpop.f32.mrb[0].mxu0
    %v1814 = vadd.f32 0.0, %v1813
    %v1815 = vpop.f32.mrb[0].mxu0
    %v1816 = vadd.f32 0.0, %v1815
    %v1817 = vpop.f32.mrb[0].mxu0
    %v1818 = vpop.f32.mrb[0].mxu0
    %1819 = vdwg.mxu0
    %1820 = vmatprep.subr.bf16.mxu0 %v999
    %1821 = vmatpush1.bf16.msra.mxu0 %v998
    %1822 = vmatprep.subr.bf16.mxu0 %v1003
    %1823 = vmatpush1.bf16.msra.mxu0 %v1002
    %1824 = vmatprep.subr.bf16.mxu0 %v1007
    %1825 = vmatpush1.bf16.msra.mxu0 %v1006
    %1826 = vmatprep.subr.bf16.mxu0 %v1011
    %1827 = vmatpush1.bf16.msra.mxu0 %v1010
    %1828 = vmatprep.subr.bf16.mxu0 %v1015
    %1829 = vmatpush1.bf16.msra.mxu0 %v1014
    %1830 = vmatprep.subr.bf16.mxu0 %v1019
    %1831 = vmatpush1.bf16.msra.mxu0 %v1018
    %1832 = vmatprep.subr.bf16.mxu0 %v1023
    %1833 = vmatpush1.bf16.msra.mxu0 %v1022
    %1834 = vmatprep.subr.bf16.mxu0 %v1027
    %1835 = vmatpush1.bf16.msra.mxu0 %v1026
    %1836 = vmatprep.subr.bf16.mxu0 0
    %1837 = vmatpush1.bf16.msra.mxu0 0
    %1838 = vmatprep.subr.bf16.mxu0 0
    %1839 = vmatpush1.bf16.msra.mxu0 0
    %1840 = vmatprep.subr.bf16.mxu0 0
    %1841 = vmatpush1.bf16.msra.mxu0 0
    %1842 = vmatprep.subr.bf16.mxu0 0
    %1843 = vmatpush1.bf16.msra.mxu0 0
    %1844 = vmatprep.subr.bf16.mxu0 0
    %1845 = vmatpush1.bf16.msra.mxu0 0
    %1846 = vmatprep.subr.bf16.mxu0 0
    %1847 = vmatpush1.bf16.msra.mxu0 0
    %1848 = vmatprep.subr.bf16.mxu0 0
    %1849 = vmatpush1.bf16.msra.mxu0 0
    %1850 = vmatprep.subr.bf16.mxu0 0
    %1851 = vmatpush1.bf16.msra.mxu0 0
    %1852 = vmatprep.mubr.bf16.mxu0 0
    %1853 = vmatmul.mubr.bf16.gmra.mrb[0].mxu0 %v1736
    %v1854 = vpop.f32.mrb[0].mxu0
    %v1855 = vadd.f32 %v1773, %v1854
    %v1856 = vpop.f32.mrb[0].mxu0
    %v1857 = vadd.f32 %v1775, %v1856
    %v1858 = vpop.f32.mrb[0].mxu0
    %v1859 = vpop.f32.mrb[0].mxu0
    %1860 = vdwg.mxu0
    %1861 = vmatprep.subr.bf16.mxu0 %v1001
    %1862 = vmatpush1.bf16.msra.mxu0 %v1000
    %1863 = vmatprep.subr.bf16.mxu0 %v1005
    %1864 = vmatpush1.bf16.msra.mxu0 %v1004
    %1865 = vmatprep.subr.bf16.mxu0 %v1009
    %1866 = vmatpush1.bf16.msra.mxu0 %v1008
    %1867 = vmatprep.subr.bf16.mxu0 %v1013
    %1868 = vmatpush1.bf16.msra.mxu0 %v1012
    %1869 = vmatprep.subr.bf16.mxu0 %v1017
    %1870 = vmatpush1.bf16.msra.mxu0 %v1016
    %1871 = vmatprep.subr.bf16.mxu0 %v1021
    %1872 = vmatpush1.bf16.msra.mxu0 %v1020
    %1873 = vmatprep.subr.bf16.mxu0 %v1025
    %1874 = vmatpush1.bf16.msra.mxu0 %v1024
    %1875 = vmatprep.subr.bf16.mxu0 %v1029
    %1876 = vmatpush1.bf16.msra.mxu0 %v1028
    %1877 = vmatprep.subr.bf16.mxu0 0
    %1878 = vmatpush1.bf16.msra.mxu0 0
    %1879 = vmatprep.subr.bf16.mxu0 0
    %1880 = vmatpush1.bf16.msra.mxu0 0
    %1881 = vmatprep.subr.bf16.mxu0 0
    %1882 = vmatpush1.bf16.msra.mxu0 0
    %1883 = vmatprep.subr.bf16.mxu0 0
    %1884 = vmatpush1.bf16.msra.mxu0 0
    %1885 = vmatprep.subr.bf16.mxu0 0
    %1886 = vmatpush1.bf16.msra.mxu0 0
    %1887 = vmatprep.subr.bf16.mxu0 0
    %1888 = vmatpush1.bf16.msra.mxu0 0
    %1889 = vmatprep.subr.bf16.mxu0 0
    %1890 = vmatpush1.bf16.msra.mxu0 0
    %1891 = vmatprep.subr.bf16.mxu0 0
    %1892 = vmatpush1.bf16.msra.mxu0 0
    %1893 = vmatprep.mubr.bf16.mxu0 0
    %1894 = vmatmul.mubr.bf16.gmra.mrb[0].mxu0 %v1736
    %v1895 = vpop.f32.mrb[0].mxu0
    %v1896 = vadd.f32 %v1814, %v1895
    %v1897 = vpop.f32.mrb[0].mxu0
    %v1898 = vadd.f32 %v1816, %v1897
    %v1899 = vpop.f32.mrb[0].mxu0
    %v1900 = vpop.f32.mrb[0].mxu0
    %1901 = vdwg.mxu0
    %v1902 = vadd.f32 %v1855, %v246
    %v1903 = vadd.f32 %v1857, %v250
    %v1904 = vadd.f32 %v1896, %v254
    %v1905 = vadd.f32 %v1898, %v258
    %v1906 = vmul.f32 %v1902, 0.5
    %v1907 = vmul.f32 %v1903, 0.5
    %v1908 = vmul.f32 %v1904, 0.5
    %v1909 = vtanh.pop %v1906
    %v1910 = vtanh.pop %v1907
    %v1911 = vtanh.pop %v1908
    %v1912 = vmul.f32 %v1909, 0.5
    %v1913 = vmul.f32 %v1910, 0.5
    %v1914 = vmul.f32 %v1911, 0.5
    %v1915 = vadd.f32 %v1912, 0.5
    %v1916 = vadd.f32 %v1913, 0.5
    %v1917 = vadd.f32 %v1914, 0.5
    %v1918 = vtanh.pop %v1905
    %v1919 = vmul.f32 %v1916, %v1542
    %v1920 = vmul.f32 %v1915, %v1918
    %v1921 = vadd.f32 %v1919, %v1920
    %v1922 = vtanh.pop %v1921
    %v1923 = vmul.f32 %v1917, %v1922
    %s1924 = scalar_lea.vmem [#allocation2], 3
    %v1925 = vld [vmem:[%s1924] sm:$0x1]
    %v1927 = vsel %vm309, %v1925, 0
    %1929 = vmatprep.subr.bf16.mxu0 %v302
    %1930 = vmatpush1.bf16.msra.mxu0 %v301
    %1931 = vmatprep.subr.bf16.mxu0 0
    %1932 = vmatpush1.bf16.msra.mxu0 0
    %1933 = vmatprep.subr.bf16.mxu0 0
    %1934 = vmatpush1.bf16.msra.mxu0 0
    %1935 = vmatprep.subr.bf16.mxu0 0
    %1936 = vmatpush1.bf16.msra.mxu0 0
    %1937 = vmatprep.subr.bf16.mxu0 0
    %1938 = vmatpush1.bf16.msra.mxu0 0
    %1939 = vmatprep.subr.bf16.mxu0 0
    %1940 = vmatpush1.bf16.msra.mxu0 0
    %1941 = vmatprep.subr.bf16.mxu0 0
    %1942 = vmatpush1.bf16.msra.mxu0 0
    %1943 = vmatprep.subr.bf16.mxu0 0
    %1944 = vmatpush1.bf16.msra.mxu0 0
    %1945 = vmatprep.subr.bf16.mxu0 0
    %1946 = vmatpush1.bf16.msra.mxu0 0
    %1947 = vmatprep.subr.bf16.mxu0 0
    %1948 = vmatpush1.bf16.msra.mxu0 0
    %1949 = vmatprep.subr.bf16.mxu0 0
    %1950 = vmatpush1.bf16.msra.mxu0 0
    %1951 = vmatprep.subr.bf16.mxu0 0
    %1952 = vmatpush1.bf16.msra.mxu0 0
    %1953 = vmatprep.subr.bf16.mxu0 0
    %1954 = vmatpush1.bf16.msra.mxu0 0
    %1955 = vmatprep.subr.bf16.mxu0 0
    %1956 = vmatpush1.bf16.msra.mxu0 0
    %1957 = vmatprep.subr.bf16.mxu0 0
    %1958 = vmatpush1.bf16.msra.mxu0 0
    %1959 = vmatprep.subr.bf16.mxu0 0
    %1960 = vmatpush1.bf16.msra.mxu0 0
    %1961 = vmatprep.mubr.bf16.mxu0 0
    %1962 = vmatmul.mubr.bf16.gmra.mrb[0].mxu0 %v1927
    %v1963 = vpop.f32.mrb[0].mxu0
    %v1964 = vadd.f32 0.0, %v1963
    %v1965 = vpop.f32.mrb[0].mxu0
    %v1966 = vadd.f32 0.0, %v1965
    %v1967 = vpop.f32.mrb[0].mxu0
    %v1968 = vpop.f32.mrb[0].mxu0
    %1969 = vdwg.mxu0
    %1970 = vmatprep.subr.bf16.mxu0 %v304
    %1971 = vmatpush1.bf16.msra.mxu0 %v303
    %1972 = vmatprep.subr.bf16.mxu0 0
    %1973 = vmatpush1.bf16.msra.mxu0 0
    %1974 = vmatprep.subr.bf16.mxu0 0
    %1975 = vmatpush1.bf16.msra.mxu0 0
    %1976 = vmatprep.subr.bf16.mxu0 0
    %1977 = vmatpush1.bf16.msra.mxu0 0
    %1978 = vmatprep.subr.bf16.mxu0 0
    %1979 = vmatpush1.bf16.msra.mxu0 0
    %1980 = vmatprep.subr.bf16.mxu0 0
    %1981 = vmatpush1.bf16.msra.mxu0 0
    %1982 = vmatprep.subr.bf16.mxu0 0
    %1983 = vmatpush1.bf16.msra.mxu0 0
    %1984 = vmatprep.subr.bf16.mxu0 0
    %1985 = vmatpush1.bf16.msra.mxu0 0
    %1986 = vmatprep.subr.bf16.mxu0 0
    %1987 = vmatpush1.bf16.msra.mxu0 0
    %1988 = vmatprep.subr.bf16.mxu0 0
    %1989 = vmatpush1.bf16.msra.mxu0 0
    %1990 = vmatprep.subr.bf16.mxu0 0
    %1991 = vmatpush1.bf16.msra.mxu0 0
    %1992 = vmatprep.subr.bf16.mxu0 0
    %1993 = vmatpush1.bf16.msra.mxu0 0
    %1994 = vmatprep.subr.bf16.mxu0 0
    %1995 = vmatpush1.bf16.msra.mxu0 0
    %1996 = vmatprep.subr.bf16.mxu0 0
    %1997 = vmatpush1.bf16.msra.mxu0 0
    %1998 = vmatprep.subr.bf16.mxu0 0
    %1999 = vmatpush1.bf16.msra.mxu0 0
    %2000 = vmatprep.subr.bf16.mxu0 0
    %2001 = vmatpush1.bf16.msra.mxu0 0
    %2002 = vmatprep.mubr.bf16.mxu0 0
    %2003 = vmatmul.mubr.bf16.gmra.mrb[0].mxu0 %v1927
    %v2004 = vpop.f32.mrb[0].mxu0
    %v2005 = vadd.f32 0.0, %v2004
    %v2006 = vpop.f32.mrb[0].mxu0
    %v2007 = vadd.f32 0.0, %v2006
    %v2008 = vpop.f32.mrb[0].mxu0
    %v2009 = vpop.f32.mrb[0].mxu0
    %2010 = vdwg.mxu0
    %2011 = vmatprep.subr.bf16.mxu0 %v492
    %2012 = vmatpush1.bf16.msra.mxu0 %v491
    %2013 = vmatprep.subr.bf16.mxu0 %v496
    %2014 = vmatpush1.bf16.msra.mxu0 %v495
    %2015 = vmatprep.subr.bf16.mxu0 %v500
    %2016 = vmatpush1.bf16.msra.mxu0 %v499
    %2017 = vmatprep.subr.bf16.mxu0 %v504
    %2018 = vmatpush1.bf16.msra.mxu0 %v503
    %2019 = vmatprep.subr.bf16.mxu0 %v508
    %2020 = vmatpush1.bf16.msra.mxu0 %v507
    %2021 = vmatprep.subr.bf16.mxu0 %v512
    %2022 = vmatpush1.bf16.msra.mxu0 %v511
    %2023 = vmatprep.subr.bf16.mxu0 %v516
    %2024 = vmatpush1.bf16.msra.mxu0 %v515
    %2025 = vmatprep.subr.bf16.mxu0 %v520
    %2026 = vmatpush1.bf16.msra.mxu0 %v519
    %2027 = vmatprep.subr.bf16.mxu0 0
    %2028 = vmatpush1.bf16.msra.mxu0 0
    %2029 = vmatprep.subr.bf16.mxu0 0
    %2030 = vmatpush1.bf16.msra.mxu0 0
    %2031 = vmatprep.subr.bf16.mxu0 0
    %2032 = vmatpush1.bf16.msra.mxu0 0
    %2033 = vmatprep.subr.bf16.mxu0 0
    %2034 = vmatpush1.bf16.msra.mxu0 0
    %2035 = vmatprep.subr.bf16.mxu0 0
    %2036 = vmatpush1.bf16.msra.mxu0 0
    %2037 = vmatprep.subr.bf16.mxu0 0
    %2038 = vmatpush1.bf16.msra.mxu0 0
    %2039 = vmatprep.subr.bf16.mxu0 0
    %2040 = vmatpush1.bf16.msra.mxu0 0
    %2041 = vmatprep.subr.bf16.mxu0 0
    %2042 = vmatpush1.bf16.msra.mxu0 0
    %2043 = vmatprep.mubr.bf16.mxu0 0
    %2044 = vmatmul.mubr.bf16.gmra.mrb[0].mxu0 %v1737
    %v2045 = vpop.f32.mrb[0].mxu0
    %v2046 = vadd.f32 %v1964, %v2045
    %v2047 = vpop.f32.mrb[0].mxu0
    %v2048 = vadd.f32 %v1966, %v2047
    %v2049 = vpop.f32.mrb[0].mxu0
    %v2050 = vpop.f32.mrb[0].mxu0
    %2051 = vdwg.mxu0
    %2052 = vmatprep.subr.bf16.mxu0 %v494
    %2053 = vmatpush1.bf16.msra.mxu0 %v493
    %2054 = vmatprep.subr.bf16.mxu0 %v498
    %2055 = vmatpush1.bf16.msra.mxu0 %v497
    %2056 = vmatprep.subr.bf16.mxu0 %v502
    %2057 = vmatpush1.bf16.msra.mxu0 %v501
    %2058 = vmatprep.subr.bf16.mxu0 %v506
    %2059 = vmatpush1.bf16.msra.mxu0 %v505
    %2060 = vmatprep.subr.bf16.mxu0 %v510
    %2061 = vmatpush1.bf16.msra.mxu0 %v509
    %2062 = vmatprep.subr.bf16.mxu0 %v514
    %2063 = vmatpush1.bf16.msra.mxu0 %v513
    %2064 = vmatprep.subr.bf16.mxu0 %v518
    %2065 = vmatpush1.bf16.msra.mxu0 %v517
    %2066 = vmatprep.subr.bf16.mxu0 %v522
    %2067 = vmatpush1.bf16.msra.mxu0 %v521
    %2068 = vmatprep.subr.bf16.mxu0 0
    %2069 = vmatpush1.bf16.msra.mxu0 0
    %2070 = vmatprep.subr.bf16.mxu0 0
    %2071 = vmatpush1.bf16.msra.mxu0 0
    %2072 = vmatprep.subr.bf16.mxu0 0
    %2073 = vmatpush1.bf16.msra.mxu0 0
    %2074 = vmatprep.subr.bf16.mxu0 0
    %2075 = vmatpush1.bf16.msra.mxu0 0
    %2076 = vmatprep.subr.bf16.mxu0 0
    %2077 = vmatpush1.bf16.msra.mxu0 0
    %2078 = vmatprep.subr.bf16.mxu0 0
    %2079 = vmatpush1.bf16.msra.mxu0 0
    %2080 = vmatprep.subr.bf16.mxu0 0
    %2081 = vmatpush1.bf16.msra.mxu0 0
    %2082 = vmatprep.subr.bf16.mxu0 0
    %2083 = vmatpush1.bf16.msra.mxu0 0
    %2084 = vmatprep.mubr.bf16.mxu0 0
    %2085 = vmatmul.mubr.bf16.gmra.mrb[0].mxu0 %v1737
    %v2086 = vpop.f32.mrb[0].mxu0
    %v2087 = vadd.f32 %v2005, %v2086
    %v2088 = vpop.f32.mrb[0].mxu0
    %v2089 = vadd.f32 %v2007, %v2088
    %v2090 = vpop.f32.mrb[0].mxu0
    %v2091 = vpop.f32.mrb[0].mxu0
    %2092 = vdwg.mxu0
    %v2093 = vadd.f32 %v2046, %v224
    %v2094 = vadd.f32 %v2048, %v228
    %v2095 = vadd.f32 %v2087, %v232
    %v2096 = vadd.f32 %v2089, %v236
    %v2097 = vmul.f32 %v2093, 0.5
    %v2098 = vmul.f32 %v2094, 0.5
    %v2099 = vmul.f32 %v2095, 0.5
    %v2100 = vtanh.pop %v2097
    %v2101 = vtanh.pop %v2098
    %v2102 = vtanh.pop %v2099
    %v2103 = vmul.f32 %v2100, 0.5
    %v2104 = vmul.f32 %v2101, 0.5
    %v2105 = vmul.f32 %v2102, 0.5
    %v2106 = vadd.f32 %v2103, 0.5
    %v2107 = vadd.f32 %v2104, 0.5
    %v2108 = vadd.f32 %v2105, 0.5
    %v2109 = vtanh.pop %v2096
    %v2110 = vmul.f32 %v2107, %v1733
    %v2111 = vmul.f32 %v2106, %v2109
    %v2112 = vadd.f32 %v2110, %v2111
    %v2113 = vtanh.pop %v2112
    %v2114 = vmul.f32 %v2108, %v2113
    %v2115 = vpack.c.bf16 %v1923, %v1923
    %v2116 = vpack.c.bf16 %v2114, %v2114
    %2117 = vmatprep.subr.bf16.mxu0 %v757
    %2118 = vmatpush1.bf16.msra.mxu0 %v756
    %2119 = vmatprep.subr.bf16.mxu0 %v761
    %2120 = vmatpush1.bf16.msra.mxu0 %v760
    %2121 = vmatprep.subr.bf16.mxu0 %v765
    %2122 = vmatpush1.bf16.msra.mxu0 %v764
    %2123 = vmatprep.subr.bf16.mxu0 %v769
    %2124 = vmatpush1.bf16.msra.mxu0 %v768
    %2125 = vmatprep.subr.bf16.mxu0 %v773
    %2126 = vmatpush1.bf16.msra.mxu0 %v772
    %2127 = vmatprep.subr.bf16.mxu0 %v777
    %2128 = vmatpush1.bf16.msra.mxu0 %v776
    %2129 = vmatprep.subr.bf16.mxu0 %v781
    %2130 = vmatpush1.bf16.msra.mxu0 %v780
    %2131 = vmatprep.subr.bf16.mxu0 %v785
    %2132 = vmatpush1.bf16.msra.mxu0 %v784
    %2133 = vmatprep.subr.bf16.mxu0 0
    %2134 = vmatpush1.bf16.msra.mxu0 0
    %2135 = vmatprep.subr.bf16.mxu0 0
    %2136 = vmatpush1.bf16.msra.mxu0 0
    %2137 = vmatprep.subr.bf16.mxu0 0
    %2138 = vmatpush1.bf16.msra.mxu0 0
    %2139 = vmatprep.subr.bf16.mxu0 0
    %2140 = vmatpush1.bf16.msra.mxu0 0
    %2141 = vmatprep.subr.bf16.mxu0 0
    %2142 = vmatpush1.bf16.msra.mxu0 0
    %2143 = vmatprep.subr.bf16.mxu0 0
    %2144 = vmatpush1.bf16.msra.mxu0 0
    %2145 = vmatprep.subr.bf16.mxu0 0
    %2146 = vmatpush1.bf16.msra.mxu0 0
    %2147 = vmatprep.subr.bf16.mxu0 0
    %2148 = vmatpush1.bf16.msra.mxu0 0
    %2149 = vmatprep.mubr.bf16.mxu0 0
    %2150 = vmatmul.mubr.bf16.gmra.mrb[0].mxu0 %v2116
    %v2151 = vpop.f32.mrb[0].mxu0
    %v2152 = vadd.f32 0.0, %v2151
    %v2153 = vpop.f32.mrb[0].mxu0
    %v2154 = vadd.f32 0.0, %v2153
    %v2155 = vpop.f32.mrb[0].mxu0
    %v2156 = vpop.f32.mrb[0].mxu0
    %2157 = vdwg.mxu0
    %2158 = vmatprep.subr.bf16.mxu0 %v759
    %2159 = vmatpush1.bf16.msra.mxu0 %v758
    %2160 = vmatprep.subr.bf16.mxu0 %v763
    %2161 = vmatpush1.bf16.msra.mxu0 %v762
    %2162 = vmatprep.subr.bf16.mxu0 %v767
    %2163 = vmatpush1.bf16.msra.mxu0 %v766
    %2164 = vmatprep.subr.bf16.mxu0 %v771
    %2165 = vmatpush1.bf16.msra.mxu0 %v770
    %2166 = vmatprep.subr.bf16.mxu0 %v775
    %2167 = vmatpush1.bf16.msra.mxu0 %v774
    %2168 = vmatprep.subr.bf16.mxu0 %v779
    %2169 = vmatpush1.bf16.msra.mxu0 %v778
    %2170 = vmatprep.subr.bf16.mxu0 %v783
    %2171 = vmatpush1.bf16.msra.mxu0 %v782
    %2172 = vmatprep.subr.bf16.mxu0 %v787
    %2173 = vmatpush1.bf16.msra.mxu0 %v786
    %2174 = vmatprep.subr.bf16.mxu0 0
    %2175 = vmatpush1.bf16.msra.mxu0 0
    %2176 = vmatprep.subr.bf16.mxu0 0
    %2177 = vmatpush1.bf16.msra.mxu0 0
    %2178 = vmatprep.subr.bf16.mxu0 0
    %2179 = vmatpush1.bf16.msra.mxu0 0
    %2180 = vmatprep.subr.bf16.mxu0 0
    %2181 = vmatpush1.bf16.msra.mxu0 0
    %2182 = vmatprep.subr.bf16.mxu0 0
    %2183 = vmatpush1.bf16.msra.mxu0 0
    %2184 = vmatprep.subr.bf16.mxu0 0
    %2185 = vmatpush1.bf16.msra.mxu0 0
    %2186 = vmatprep.subr.bf16.mxu0 0
    %2187 = vmatpush1.bf16.msra.mxu0 0
    %2188 = vmatprep.subr.bf16.mxu0 0
    %2189 = vmatpush1.bf16.msra.mxu0 0
    %2190 = vmatprep.mubr.bf16.mxu0 0
    %2191 = vmatmul.mubr.bf16.gmra.mrb[0].mxu0 %v2116
    %v2192 = vpop.f32.mrb[0].mxu0
    %v2193 = vadd.f32 0.0, %v2192
    %v2194 = vpop.f32.mrb[0].mxu0
    %v2195 = vadd.f32 0.0, %v2194
    %v2196 = vpop.f32.mrb[0].mxu0
    %v2197 = vpop.f32.mrb[0].mxu0
    %2198 = vdwg.mxu0
    %2199 = vmatprep.subr.bf16.mxu0 %v999
    %2200 = vmatpush1.bf16.msra.mxu0 %v998
    %2201 = vmatprep.subr.bf16.mxu0 %v1003
    %2202 = vmatpush1.bf16.msra.mxu0 %v1002
    %2203 = vmatprep.subr.bf16.mxu0 %v1007
    %2204 = vmatpush1.bf16.msra.mxu0 %v1006
    %2205 = vmatprep.subr.bf16.mxu0 %v1011
    %2206 = vmatpush1.bf16.msra.mxu0 %v1010
    %2207 = vmatprep.subr.bf16.mxu0 %v1015
    %2208 = vmatpush1.bf16.msra.mxu0 %v1014
    %2209 = vmatprep.subr.bf16.mxu0 %v1019
    %2210 = vmatpush1.bf16.msra.mxu0 %v1018
    %2211 = vmatprep.subr.bf16.mxu0 %v1023
    %2212 = vmatpush1.bf16.msra.mxu0 %v1022
    %2213 = vmatprep.subr.bf16.mxu0 %v1027
    %2214 = vmatpush1.bf16.msra.mxu0 %v1026
    %2215 = vmatprep.subr.bf16.mxu0 0
    %2216 = vmatpush1.bf16.msra.mxu0 0
    %2217 = vmatprep.subr.bf16.mxu0 0
    %2218 = vmatpush1.bf16.msra.mxu0 0
    %2219 = vmatprep.subr.bf16.mxu0 0
    %2220 = vmatpush1.bf16.msra.mxu0 0
    %2221 = vmatprep.subr.bf16.mxu0 0
    %2222 = vmatpush1.bf16.msra.mxu0 0
    %2223 = vmatprep.subr.bf16.mxu0 0
    %2224 = vmatpush1.bf16.msra.mxu0 0
    %2225 = vmatprep.subr.bf16.mxu0 0
    %2226 = vmatpush1.bf16.msra.mxu0 0
    %2227 = vmatprep.subr.bf16.mxu0 0
    %2228 = vmatpush1.bf16.msra.mxu0 0
    %2229 = vmatprep.subr.bf16.mxu0 0
    %2230 = vmatpush1.bf16.msra.mxu0 0
    %2231 = vmatprep.mubr.bf16.mxu0 0
    %2232 = vmatmul.mubr.bf16.gmra.mrb[0].mxu0 %v2115
    %v2233 = vpop.f32.mrb[0].mxu0
    %v2234 = vadd.f32 %v2152, %v2233
    %v2235 = vpop.f32.mrb[0].mxu0
    %v2236 = vadd.f32 %v2154, %v2235
    %v2237 = vpop.f32.mrb[0].mxu0
    %v2238 = vpop.f32.mrb[0].mxu0
    %2239 = vdwg.mxu0
    %2240 = vmatprep.subr.bf16.mxu0 %v1001
    %2241 = vmatpush1.bf16.msra.mxu0 %v1000
    %2242 = vmatprep.subr.bf16.mxu0 %v1005
    %2243 = vmatpush1.bf16.msra.mxu0 %v1004
    %2244 = vmatprep.subr.bf16.mxu0 %v1009
    %2245 = vmatpush1.bf16.msra.mxu0 %v1008
    %2246 = vmatprep.subr.bf16.mxu0 %v1013
    %2247 = vmatpush1.bf16.msra.mxu0 %v1012
    %2248 = vmatprep.subr.bf16.mxu0 %v1017
    %2249 = vmatpush1.bf16.msra.mxu0 %v1016
    %2250 = vmatprep.subr.bf16.mxu0 %v1021
    %2251 = vmatpush1.bf16.msra.mxu0 %v1020
    %2252 = vmatprep.subr.bf16.mxu0 %v1025
    %2253 = vmatpush1.bf16.msra.mxu0 %v1024
    %2254 = vmatprep.subr.bf16.mxu0 %v1029
    %2255 = vmatpush1.bf16.msra.mxu0 %v1028
    %2256 = vmatprep.subr.bf16.mxu0 0
    %2257 = vmatpush1.bf16.msra.mxu0 0
    %2258 = vmatprep.subr.bf16.mxu0 0
    %2259 = vmatpush1.bf16.msra.mxu0 0
    %2260 = vmatprep.subr.bf16.mxu0 0
    %2261 = vmatpush1.bf16.msra.mxu0 0
    %2262 = vmatprep.subr.bf16.mxu0 0
    %2263 = vmatpush1.bf16.msra.mxu0 0
    %2264 = vmatprep.subr.bf16.mxu0 0
    %2265 = vmatpush1.bf16.msra.mxu0 0
    %2266 = vmatprep.subr.bf16.mxu0 0
    %2267 = vmatpush1.bf16.msra.mxu0 0
    %2268 = vmatprep.subr.bf16.mxu0 0
    %2269 = vmatpush1.bf16.msra.mxu0 0
    %2270 = vmatprep.subr.bf16.mxu0 0
    %2271 = vmatpush1.bf16.msra.mxu0 0
    %2272 = vmatprep.mubr.bf16.mxu0 0
    %2273 = vmatmul.mubr.bf16.gmra.mrb[0].mxu0 %v2115
    %v2274 = vpop.f32.mrb[0].mxu0
    %v2275 = vadd.f32 %v2193, %v2274
    %v2276 = vpop.f32.mrb[0].mxu0
    %v2277 = vadd.f32 %v2195, %v2276
    %v2278 = vpop.f32.mrb[0].mxu0
    %v2279 = vpop.f32.mrb[0].mxu0
    %2280 = vdwg.mxu0
    %v2281 = vadd.f32 %v2234, %v246
    %v2282 = vadd.f32 %v2236, %v250
    %v2283 = vadd.f32 %v2275, %v254
    %v2284 = vadd.f32 %v2277, %v258
    %v2285 = vmul.f32 %v2281, 0.5
    %v2286 = vmul.f32 %v2282, 0.5
    %v2287 = vmul.f32 %v2283, 0.5
    %v2288 = vtanh.pop %v2285
    %v2289 = vtanh.pop %v2286
    %v2290 = vtanh.pop %v2287
    %v2291 = vmul.f32 %v2288, 0.5
    %v2292 = vmul.f32 %v2289, 0.5
    %v2293 = vmul.f32 %v2290, 0.5
    %v2294 = vadd.f32 %v2291, 0.5
    %v2295 = vadd.f32 %v2292, 0.5
    %v2296 = vadd.f32 %v2293, 0.5
    %v2297 = vtanh.pop %v2284
    %v2298 = vmul.f32 %v2295, %v1921
    %v2299 = vmul.f32 %v2294, %v2297
    %v2300 = vadd.f32 %v2298, %v2299
    %v2301 = vtanh.pop %v2300
    %v2302 = vmul.f32 %v2296, %v2301
    %s2303 = scalar_lea.vmem [#allocation2], 4
    %v2304 = vld [vmem:[%s2303] sm:$0x1]
    %v2306 = vsel %vm309, %v2304, 0
    %2308 = vmatprep.subr.bf16.mxu0 %v302
    %2309 = vmatpush1.bf16.msra.mxu0 %v301
    %2310 = vmatprep.subr.bf16.mxu0 0
    %2311 = vmatpush1.bf16.msra.mxu0 0
    %2312 = vmatprep.subr.bf16.mxu0 0
    %2313 = vmatpush1.bf16.msra.mxu0 0
    %2314 = vmatprep.subr.bf16.mxu0 0
    %2315 = vmatpush1.bf16.msra.mxu0 0
    %2316 = vmatprep.subr.bf16.mxu0 0
    %2317 = vmatpush1.bf16.msra.mxu0 0
    %2318 = vmatprep.subr.bf16.mxu0 0
    %2319 = vmatpush1.bf16.msra.mxu0 0
    %2320 = vmatprep.subr.bf16.mxu0 0
    %2321 = vmatpush1.bf16.msra.mxu0 0
    %2322 = vmatprep.subr.bf16.mxu0 0
    %2323 = vmatpush1.bf16.msra.mxu0 0
    %2324 = vmatprep.subr.bf16.mxu0 0
    %2325 = vmatpush1.bf16.msra.mxu0 0
    %2326 = vmatprep.subr.bf16.mxu0 0
    %2327 = vmatpush1.bf16.msra.mxu0 0
    %2328 = vmatprep.subr.bf16.mxu0 0
    %2329 = vmatpush1.bf16.msra.mxu0 0
    %2330 = vmatprep.subr.bf16.mxu0 0
    %2331 = vmatpush1.bf16.msra.mxu0 0
    %2332 = vmatprep.subr.bf16.mxu0 0
    %2333 = vmatpush1.bf16.msra.mxu0 0
    %2334 = vmatprep.subr.bf16.mxu0 0
    %2335 = vmatpush1.bf16.msra.mxu0 0
    %2336 = vmatprep.subr.bf16.mxu0 0
    %2337 = vmatpush1.bf16.msra.mxu0 0
    %2338 = vmatprep.subr.bf16.mxu0 0
    %2339 = vmatpush1.bf16.msra.mxu0 0
    %2340 = vmatprep.mubr.bf16.mxu0 0
    %2341 = vmatmul.mubr.bf16.gmra.mrb[0].mxu0 %v2306
    %v2342 = vpop.f32.mrb[0].mxu0
    %v2343 = vadd.f32 0.0, %v2342
    %v2344 = vpop.f32.mrb[0].mxu0
    %v2345 = vadd.f32 0.0, %v2344
    %v2346 = vpop.f32.mrb[0].mxu0
    %v2347 = vpop.f32.mrb[0].mxu0
    %2348 = vdwg.mxu0
    %2349 = vmatprep.subr.bf16.mxu0 %v304
    %2350 = vmatpush1.bf16.msra.mxu0 %v303
    %2351 = vmatprep.subr.bf16.mxu0 0
    %2352 = vmatpush1.bf16.msra.mxu0 0
    %2353 = vmatprep.subr.bf16.mxu0 0
    %2354 = vmatpush1.bf16.msra.mxu0 0
    %2355 = vmatprep.subr.bf16.mxu0 0
    %2356 = vmatpush1.bf16.msra.mxu0 0
    %2357 = vmatprep.subr.bf16.mxu0 0
    %2358 = vmatpush1.bf16.msra.mxu0 0
    %2359 = vmatprep.subr.bf16.mxu0 0
    %2360 = vmatpush1.bf16.msra.mxu0 0
    %2361 = vmatprep.subr.bf16.mxu0 0
    %2362 = vmatpush1.bf16.msra.mxu0 0
    %2363 = vmatprep.subr.bf16.mxu0 0
    %2364 = vmatpush1.bf16.msra.mxu0 0
    %2365 = vmatprep.subr.bf16.mxu0 0
    %2366 = vmatpush1.bf16.msra.mxu0 0
    %2367 = vmatprep.subr.bf16.mxu0 0
    %2368 = vmatpush1.bf16.msra.mxu0 0
    %2369 = vmatprep.subr.bf16.mxu0 0
    %2370 = vmatpush1.bf16.msra.mxu0 0
    %2371 = vmatprep.subr.bf16.mxu0 0
    %2372 = vmatpush1.bf16.msra.mxu0 0
    %2373 = vmatprep.subr.bf16.mxu0 0
    %2374 = vmatpush1.bf16.msra.mxu0 0
    %2375 = vmatprep.subr.bf16.mxu0 0
    %2376 = vmatpush1.bf16.msra.mxu0 0
    %2377 = vmatprep.subr.bf16.mxu0 0
    %2378 = vmatpush1.bf16.msra.mxu0 0
    %2379 = vmatprep.subr.bf16.mxu0 0
    %2380 = vmatpush1.bf16.msra.mxu0 0
    %2381 = vmatprep.mubr.bf16.mxu0 0
    %2382 = vmatmul.mubr.bf16.gmra.mrb[0].mxu0 %v2306
    %v2383 = vpop.f32.mrb[0].mxu0
    %v2384 = vadd.f32 0.0, %v2383
    %v2385 = vpop.f32.mrb[0].mxu0
    %v2386 = vadd.f32 0.0, %v2385
    %v2387 = vpop.f32.mrb[0].mxu0
    %v2388 = vpop.f32.mrb[0].mxu0
    %2389 = vdwg.mxu0
    %2390 = vmatprep.subr.bf16.mxu0 %v492
    %2391 = vmatpush1.bf16.msra.mxu0 %v491
    %2392 = vmatprep.subr.bf16.mxu0 %v496
    %2393 = vmatpush1.bf16.msra.mxu0 %v495
    %2394 = vmatprep.subr.bf16.mxu0 %v500
    %2395 = vmatpush1.bf16.msra.mxu0 %v499
    %2396 = vmatprep.subr.bf16.mxu0 %v504
    %2397 = vmatpush1.bf16.msra.mxu0 %v503
    %2398 = vmatprep.subr.bf16.mxu0 %v508
    %2399 = vmatpush1.bf16.msra.mxu0 %v507
    %2400 = vmatprep.subr.bf16.mxu0 %v512
    %2401 = vmatpush1.bf16.msra.mxu0 %v511
    %2402 = vmatprep.subr.bf16.mxu0 %v516
    %2403 = vmatpush1.bf16.msra.mxu0 %v515
    %2404 = vmatprep.subr.bf16.mxu0 %v520
    %2405 = vmatpush1.bf16.msra.mxu0 %v519
    %2406 = vmatprep.subr.bf16.mxu0 0
    %2407 = vmatpush1.bf16.msra.mxu0 0
    %2408 = vmatprep.subr.bf16.mxu0 0
    %2409 = vmatpush1.bf16.msra.mxu0 0
    %2410 = vmatprep.subr.bf16.mxu0 0
    %2411 = vmatpush1.bf16.msra.mxu0 0
    %2412 = vmatprep.subr.bf16.mxu0 0
    %2413 = vmatpush1.bf16.msra.mxu0 0
    %2414 = vmatprep.subr.bf16.mxu0 0
    %2415 = vmatpush1.bf16.msra.mxu0 0
    %2416 = vmatprep.subr.bf16.mxu0 0
    %2417 = vmatpush1.bf16.msra.mxu0 0
    %2418 = vmatprep.subr.bf16.mxu0 0
    %2419 = vmatpush1.bf16.msra.mxu0 0
    %2420 = vmatprep.subr.bf16.mxu0 0
    %2421 = vmatpush1.bf16.msra.mxu0 0
    %2422 = vmatprep.mubr.bf16.mxu0 0
    %2423 = vmatmul.mubr.bf16.gmra.mrb[0].mxu0 %v2116
    %v2424 = vpop.f32.mrb[0].mxu0
    %v2425 = vadd.f32 %v2343, %v2424
    %v2426 = vpop.f32.mrb[0].mxu0
    %v2427 = vadd.f32 %v2345, %v2426
    %v2428 = vpop.f32.mrb[0].mxu0
    %v2429 = vpop.f32.mrb[0].mxu0
    %2430 = vdwg.mxu0
    %2431 = vmatprep.subr.bf16.mxu0 %v494
    %2432 = vmatpush1.bf16.msra.mxu0 %v493
    %2433 = vmatprep.subr.bf16.mxu0 %v498
    %2434 = vmatpush1.bf16.msra.mxu0 %v497
    %2435 = vmatprep.subr.bf16.mxu0 %v502
    %2436 = vmatpush1.bf16.msra.mxu0 %v501
    %2437 = vmatprep.subr.bf16.mxu0 %v506
    %2438 = vmatpush1.bf16.msra.mxu0 %v505
    %2439 = vmatprep.subr.bf16.mxu0 %v510
    %2440 = vmatpush1.bf16.msra.mxu0 %v509
    %2441 = vmatprep.subr.bf16.mxu0 %v514
    %2442 = vmatpush1.bf16.msra.mxu0 %v513
    %2443 = vmatprep.subr.bf16.mxu0 %v518
    %2444 = vmatpush1.bf16.msra.mxu0 %v517
    %2445 = vmatprep.subr.bf16.mxu0 %v522
    %2446 = vmatpush1.bf16.msra.mxu0 %v521
    %2447 = vmatprep.subr.bf16.mxu0 0
    %2448 = vmatpush1.bf16.msra.mxu0 0
    %2449 = vmatprep.subr.bf16.mxu0 0
    %2450 = vmatpush1.bf16.msra.mxu0 0
    %2451 = vmatprep.subr.bf16.mxu0 0
    %2452 = vmatpush1.bf16.msra.mxu0 0
    %2453 = vmatprep.subr.bf16.mxu0 0
    %2454 = vmatpush1.bf16.msra.mxu0 0
    %2455 = vmatprep.subr.bf16.mxu0 0
    %2456 = vmatpush1.bf16.msra.mxu0 0
    %2457 = vmatprep.subr.bf16.mxu0 0
    %2458 = vmatpush1.bf16.msra.mxu0 0
    %2459 = vmatprep.subr.bf16.mxu0 0
    %2460 = vmatpush1.bf16.msra.mxu0 0
    %2461 = vmatprep.subr.bf16.mxu0 0
    %2462 = vmatpush1.bf16.msra.mxu0 0
    %2463 = vmatprep.mubr.bf16.mxu0 0
    %2464 = vmatmul.mubr.bf16.gmra.mrb[0].mxu0 %v2116
    %v2465 = vpop.f32.mrb[0].mxu0
    %v2466 = vadd.f32 %v2384, %v2465
    %v2467 = vpop.f32.mrb[0].mxu0
    %v2468 = vadd.f32 %v2386, %v2467
    %v2469 = vpop.f32.mrb[0].mxu0
    %v2470 = vpop.f32.mrb[0].mxu0
    %2471 = vdwg.mxu0
    %v2472 = vadd.f32 %v2425, %v224
    %v2473 = vadd.f32 %v2427, %v228
    %v2474 = vadd.f32 %v2466, %v232
    %v2475 = vadd.f32 %v2468, %v236
    %v2476 = vmul.f32 %v2472, 0.5
    %v2477 = vmul.f32 %v2473, 0.5
    %v2478 = vmul.f32 %v2474, 0.5
    %v2479 = vtanh.pop %v2476
    %v2480 = vtanh.pop %v2477
    %v2481 = vtanh.pop %v2478
    %v2482 = vmul.f32 %v2479, 0.5
    %v2483 = vmul.f32 %v2480, 0.5
    %v2484 = vmul.f32 %v2481, 0.5
    %v2485 = vadd.f32 %v2482, 0.5
    %v2486 = vadd.f32 %v2483, 0.5
    %v2487 = vadd.f32 %v2484, 0.5
    %v2488 = vtanh.pop %v2475
    %v2489 = vmul.f32 %v2486, %v2112
    %v2490 = vmul.f32 %v2485, %v2488
    %v2491 = vadd.f32 %v2489, %v2490
    %v2492 = vtanh.pop %v2491
    %v2493 = vmul.f32 %v2487, %v2492
    %v2494 = vpack.c.bf16 %v2302, %v2302
    %v2495 = vpack.c.bf16 %v2493, %v2493
    %2496 = vmatprep.subr.bf16.mxu0 %v757
    %2497 = vmatpush1.bf16.msra.mxu0 %v756
    %2498 = vmatprep.subr.bf16.mxu0 %v761
    %2499 = vmatpush1.bf16.msra.mxu0 %v760
    %2500 = vmatprep.subr.bf16.mxu0 %v765
    %2501 = vmatpush1.bf16.msra.mxu0 %v764
    %2502 = vmatprep.subr.bf16.mxu0 %v769
    %2503 = vmatpush1.bf16.msra.mxu0 %v768
    %2504 = vmatprep.subr.bf16.mxu0 %v773
    %2505 = vmatpush1.bf16.msra.mxu0 %v772
    %2506 = vmatprep.subr.bf16.mxu0 %v777
    %2507 = vmatpush1.bf16.msra.mxu0 %v776
    %2508 = vmatprep.subr.bf16.mxu0 %v781
    %2509 = vmatpush1.bf16.msra.mxu0 %v780
    %2510 = vmatprep.subr.bf16.mxu0 %v785
    %2511 = vmatpush1.bf16.msra.mxu0 %v784
    %2512 = vmatprep.subr.bf16.mxu0 0
    %2513 = vmatpush1.bf16.msra.mxu0 0
    %2514 = vmatprep.subr.bf16.mxu0 0
    %2515 = vmatpush1.bf16.msra.mxu0 0
    %2516 = vmatprep.subr.bf16.mxu0 0
    %2517 = vmatpush1.bf16.msra.mxu0 0
    %2518 = vmatprep.subr.bf16.mxu0 0
    %2519 = vmatpush1.bf16.msra.mxu0 0
    %2520 = vmatprep.subr.bf16.mxu0 0
    %2521 = vmatpush1.bf16.msra.mxu0 0
    %2522 = vmatprep.subr.bf16.mxu0 0
    %2523 = vmatpush1.bf16.msra.mxu0 0
    %2524 = vmatprep.subr.bf16.mxu0 0
    %2525 = vmatpush1.bf16.msra.mxu0 0
    %2526 = vmatprep.subr.bf16.mxu0 0
    %2527 = vmatpush1.bf16.msra.mxu0 0
    %2528 = vmatprep.mubr.bf16.mxu0 0
    %2529 = vmatmul.mubr.bf16.gmra.mrb[0].mxu0 %v2495
    %v2530 = vpop.f32.mrb[0].mxu0
    %v2531 = vadd.f32 0.0, %v2530
    %v2532 = vpop.f32.mrb[0].mxu0
    %v2533 = vadd.f32 0.0, %v2532
    %v2534 = vpop.f32.mrb[0].mxu0
    %v2535 = vpop.f32.mrb[0].mxu0
    %2536 = vdwg.mxu0
    %2537 = vmatprep.subr.bf16.mxu0 %v759
    %2538 = vmatpush1.bf16.msra.mxu0 %v758
    %2539 = vmatprep.subr.bf16.mxu0 %v763
    %2540 = vmatpush1.bf16.msra.mxu0 %v762
    %2541 = vmatprep.subr.bf16.mxu0 %v767
    %2542 = vmatpush1.bf16.msra.mxu0 %v766
    %2543 = vmatprep.subr.bf16.mxu0 %v771
    %2544 = vmatpush1.bf16.msra.mxu0 %v770
    %2545 = vmatprep.subr.bf16.mxu0 %v775
    %2546 = vmatpush1.bf16.msra.mxu0 %v774
    %2547 = vmatprep.subr.bf16.mxu0 %v779
    %2548 = vmatpush1.bf16.msra.mxu0 %v778
    %2549 = vmatprep.subr.bf16.mxu0 %v783
    %2550 = vmatpush1.bf16.msra.mxu0 %v782
    %2551 = vmatprep.subr.bf16.mxu0 %v787
    %2552 = vmatpush1.bf16.msra.mxu0 %v786
    %2553 = vmatprep.subr.bf16.mxu0 0
    %2554 = vmatpush1.bf16.msra.mxu0 0
    %2555 = vmatprep.subr.bf16.mxu0 0
    %2556 = vmatpush1.bf16.msra.mxu0 0
    %2557 = vmatprep.subr.bf16.mxu0 0
    %2558 = vmatpush1.bf16.msra.mxu0 0
    %2559 = vmatprep.subr.bf16.mxu0 0
    %2560 = vmatpush1.bf16.msra.mxu0 0
    %2561 = vmatprep.subr.bf16.mxu0 0
    %2562 = vmatpush1.bf16.msra.mxu0 0
    %2563 = vmatprep.subr.bf16.mxu0 0
    %2564 = vmatpush1.bf16.msra.mxu0 0
    %2565 = vmatprep.subr.bf16.mxu0 0
    %2566 = vmatpush1.bf16.msra.mxu0 0
    %2567 = vmatprep.subr.bf16.mxu0 0
    %2568 = vmatpush1.bf16.msra.mxu0 0
    %2569 = vmatprep.mubr.bf16.mxu0 0
    %2570 = vmatmul.mubr.bf16.gmra.mrb[0].mxu0 %v2495
    %v2571 = vpop.f32.mrb[0].mxu0
    %v2572 = vadd.f32 0.0, %v2571
    %v2573 = vpop.f32.mrb[0].mxu0
    %v2574 = vadd.f32 0.0, %v2573
    %v2575 = vpop.f32.mrb[0].mxu0
    %v2576 = vpop.f32.mrb[0].mxu0
    %2577 = vdwg.mxu0
    %2578 = vmatprep.subr.bf16.mxu0 %v999
    %2579 = vmatpush1.bf16.msra.mxu0 %v998
    %2580 = vmatprep.subr.bf16.mxu0 %v1003
    %2581 = vmatpush1.bf16.msra.mxu0 %v1002
    %2582 = vmatprep.subr.bf16.mxu0 %v1007
    %2583 = vmatpush1.bf16.msra.mxu0 %v1006
    %2584 = vmatprep.subr.bf16.mxu0 %v1011
    %2585 = vmatpush1.bf16.msra.mxu0 %v1010
    %2586 = vmatprep.subr.bf16.mxu0 %v1015
    %2587 = vmatpush1.bf16.msra.mxu0 %v1014
    %2588 = vmatprep.subr.bf16.mxu0 %v1019
    %2589 = vmatpush1.bf16.msra.mxu0 %v1018
    %2590 = vmatprep.subr.bf16.mxu0 %v1023
    %2591 = vmatpush1.bf16.msra.mxu0 %v1022
    %2592 = vmatprep.subr.bf16.mxu0 %v1027
    %2593 = vmatpush1.bf16.msra.mxu0 %v1026
    %2594 = vmatprep.subr.bf16.mxu0 0
    %2595 = vmatpush1.bf16.msra.mxu0 0
    %2596 = vmatprep.subr.bf16.mxu0 0
    %2597 = vmatpush1.bf16.msra.mxu0 0
    %2598 = vmatprep.subr.bf16.mxu0 0
    %2599 = vmatpush1.bf16.msra.mxu0 0
    %2600 = vmatprep.subr.bf16.mxu0 0
    %2601 = vmatpush1.bf16.msra.mxu0 0
    %2602 = vmatprep.subr.bf16.mxu0 0
    %2603 = vmatpush1.bf16.msra.mxu0 0
    %2604 = vmatprep.subr.bf16.mxu0 0
    %2605 = vmatpush1.bf16.msra.mxu0 0
    %2606 = vmatprep.subr.bf16.mxu0 0
    %2607 = vmatpush1.bf16.msra.mxu0 0
    %2608 = vmatprep.subr.bf16.mxu0 0
    %2609 = vmatpush1.bf16.msra.mxu0 0
    %2610 = vmatprep.mubr.bf16.mxu0 0
    %2611 = vmatmul.mubr.bf16.gmra.mrb[0].mxu0 %v2494
    %v2612 = vpop.f32.mrb[0].mxu0
    %v2613 = vadd.f32 %v2531, %v2612
    %v2614 = vpop.f32.mrb[0].mxu0
    %v2615 = vadd.f32 %v2533, %v2614
    %v2616 = vpop.f32.mrb[0].mxu0
    %v2617 = vpop.f32.mrb[0].mxu0
    %2618 = vdwg.mxu0
    %2619 = vmatprep.subr.bf16.mxu0 %v1001
    %2620 = vmatpush1.bf16.msra.mxu0 %v1000
    %2621 = vmatprep.subr.bf16.mxu0 %v1005
    %2622 = vmatpush1.bf16.msra.mxu0 %v1004
    %2623 = vmatprep.subr.bf16.mxu0 %v1009
    %2624 = vmatpush1.bf16.msra.mxu0 %v1008
    %2625 = vmatprep.subr.bf16.mxu0 %v1013
    %2626 = vmatpush1.bf16.msra.mxu0 %v1012
    %2627 = vmatprep.subr.bf16.mxu0 %v1017
    %2628 = vmatpush1.bf16.msra.mxu0 %v1016
    %2629 = vmatprep.subr.bf16.mxu0 %v1021
    %2630 = vmatpush1.bf16.msra.mxu0 %v1020
    %2631 = vmatprep.subr.bf16.mxu0 %v1025
    %2632 = vmatpush1.bf16.msra.mxu0 %v1024
    %2633 = vmatprep.subr.bf16.mxu0 %v1029
    %2634 = vmatpush1.bf16.msra.mxu0 %v1028
    %2635 = vmatprep.subr.bf16.mxu0 0
    %2636 = vmatpush1.bf16.msra.mxu0 0
    %2637 = vmatprep.subr.bf16.mxu0 0
    %2638 = vmatpush1.bf16.msra.mxu0 0
    %2639 = vmatprep.subr.bf16.mxu0 0
    %2640 = vmatpush1.bf16.msra.mxu0 0
    %2641 = vmatprep.subr.bf16.mxu0 0
    %2642 = vmatpush1.bf16.msra.mxu0 0
    %2643 = vmatprep.subr.bf16.mxu0 0
    %2644 = vmatpush1.bf16.msra.mxu0 0
    %2645 = vmatprep.subr.bf16.mxu0 0
    %2646 = vmatpush1.bf16.msra.mxu0 0
    %2647 = vmatprep.subr.bf16.mxu0 0
    %2648 = vmatpush1.bf16.msra.mxu0 0
    %2649 = vmatprep.subr.bf16.mxu0 0
    %2650 = vmatpush1.bf16.msra.mxu0 0
    %2651 = vmatprep.mubr.bf16.mxu0 0
    %2652 = vmatmul.mubr.bf16.gmra.mrb[0].mxu0 %v2494
    %v2653 = vpop.f32.mrb[0].mxu0
    %v2654 = vadd.f32 %v2572, %v2653
    %v2655 = vpop.f32.mrb[0].mxu0
    %v2656 = vadd.f32 %v2574, %v2655
    %v2657 = vpop.f32.mrb[0].mxu0
    %v2658 = vpop.f32.mrb[0].mxu0
    %2659 = vdwg.mxu0
    %v2660 = vadd.f32 %v2613, %v246
    %v2661 = vadd.f32 %v2615, %v250
    %v2662 = vadd.f32 %v2654, %v254
    %v2663 = vadd.f32 %v2656, %v258
    %v2664 = vmul.f32 %v2660, 0.5
    %v2665 = vmul.f32 %v2661, 0.5
    %v2666 = vmul.f32 %v2662, 0.5
    %v2667 = vtanh.pop %v2664
    %v2668 = vtanh.pop %v2665
    %v2669 = vtanh.pop %v2666
    %v2670 = vmul.f32 %v2667, 0.5
    %v2671 = vmul.f32 %v2668, 0.5
    %v2672 = vmul.f32 %v2669, 0.5
    %v2673 = vadd.f32 %v2670, 0.5
    %v2674 = vadd.f32 %v2671, 0.5
    %v2675 = vadd.f32 %v2672, 0.5
    %v2676 = vtanh.pop %v2663
    %v2677 = vmul.f32 %v2674, %v2300
    %v2678 = vmul.f32 %v2673, %v2676
    %v2679 = vadd.f32 %v2677, %v2678
    %v2680 = vtanh.pop %v2679
    %v2681 = vmul.f32 %v2675, %v2680
    %s2682 = scalar_lea.vmem [#allocation2], 5
    %v2683 = vld [vmem:[%s2682] sm:$0x1]
    %v2685 = vsel %vm309, %v2683, 0
    %2687 = vmatprep.subr.bf16.mxu0 %v302
    %2688 = vmatpush1.bf16.msra.mxu0 %v301
    %2689 = vmatprep.subr.bf16.mxu0 0
    %2690 = vmatpush1.bf16.msra.mxu0 0
    %2691 = vmatprep.subr.bf16.mxu0 0
    %2692 = vmatpush1.bf16.msra.mxu0 0
    %2693 = vmatprep.subr.bf16.mxu0 0
    %2694 = vmatpush1.bf16.msra.mxu0 0
    %2695 = vmatprep.subr.bf16.mxu0 0
    %2696 = vmatpush1.bf16.msra.mxu0 0
    %2697 = vmatprep.subr.bf16.mxu0 0
    %2698 = vmatpush1.bf16.msra.mxu0 0
    %2699 = vmatprep.subr.bf16.mxu0 0
    %2700 = vmatpush1.bf16.msra.mxu0 0
    %2701 = vmatprep.subr.bf16.mxu0 0
    %2702 = vmatpush1.bf16.msra.mxu0 0
    %2703 = vmatprep.subr.bf16.mxu0 0
    %2704 = vmatpush1.bf16.msra.mxu0 0
    %2705 = vmatprep.subr.bf16.mxu0 0
    %2706 = vmatpush1.bf16.msra.mxu0 0
    %2707 = vmatprep.subr.bf16.mxu0 0
    %2708 = vmatpush1.bf16.msra.mxu0 0
    %2709 = vmatprep.subr.bf16.mxu0 0
    %2710 = vmatpush1.bf16.msra.mxu0 0
    %2711 = vmatprep.subr.bf16.mxu0 0
    %2712 = vmatpush1.bf16.msra.mxu0 0
    %2713 = vmatprep.subr.bf16.mxu0 0
    %2714 = vmatpush1.bf16.msra.mxu0 0
    %2715 = vmatprep.subr.bf16.mxu0 0
    %2716 = vmatpush1.bf16.msra.mxu0 0
    %2717 = vmatprep.subr.bf16.mxu0 0
    %2718 = vmatpush1.bf16.msra.mxu0 0
    %2719 = vmatprep.mubr.bf16.mxu0 0
    %2720 = vmatmul.mubr.bf16.gmra.mrb[0].mxu0 %v2685
    %v2721 = vpop.f32.mrb[0].mxu0
    %v2722 = vadd.f32 0.0, %v2721
    %v2723 = vpop.f32.mrb[0].mxu0
    %v2724 = vadd.f32 0.0, %v2723
    %v2725 = vpop.f32.mrb[0].mxu0
    %v2726 = vpop.f32.mrb[0].mxu0
    %2727 = vdwg.mxu0
    %2728 = vmatprep.subr.bf16.mxu0 %v304
    %2729 = vmatpush1.bf16.msra.mxu0 %v303
    %2730 = vmatprep.subr.bf16.mxu0 0
    %2731 = vmatpush1.bf16.msra.mxu0 0
    %2732 = vmatprep.subr.bf16.mxu0 0
    %2733 = vmatpush1.bf16.msra.mxu0 0
    %2734 = vmatprep.subr.bf16.mxu0 0
    %2735 = vmatpush1.bf16.msra.mxu0 0
    %2736 = vmatprep.subr.bf16.mxu0 0
    %2737 = vmatpush1.bf16.msra.mxu0 0
    %2738 = vmatprep.subr.bf16.mxu0 0
    %2739 = vmatpush1.bf16.msra.mxu0 0
    %2740 = vmatprep.subr.bf16.mxu0 0
    %2741 = vmatpush1.bf16.msra.mxu0 0
    %2742 = vmatprep.subr.bf16.mxu0 0
    %2743 = vmatpush1.bf16.msra.mxu0 0
    %2744 = vmatprep.subr.bf16.mxu0 0
    %2745 = vmatpush1.bf16.msra.mxu0 0
    %2746 = vmatprep.subr.bf16.mxu0 0
    %2747 = vmatpush1.bf16.msra.mxu0 0
    %2748 = vmatprep.subr.bf16.mxu0 0
    %2749 = vmatpush1.bf16.msra.mxu0 0
    %2750 = vmatprep.subr.bf16.mxu0 0
    %2751 = vmatpush1.bf16.msra.mxu0 0
    %2752 = vmatprep.subr.bf16.mxu0 0
    %2753 = vmatpush1.bf16.msra.mxu0 0
    %2754 = vmatprep.subr.bf16.mxu0 0
    %2755 = vmatpush1.bf16.msra.mxu0 0
    %2756 = vmatprep.subr.bf16.mxu0 0
    %2757 = vmatpush1.bf16.msra.mxu0 0
    %2758 = vmatprep.subr.bf16.mxu0 0
    %2759 = vmatpush1.bf16.msra.mxu0 0
    %2760 = vmatprep.mubr.bf16.mxu0 0
    %2761 = vmatmul.mubr.bf16.gmra.mrb[0].mxu0 %v2685
    %v2762 = vpop.f32.mrb[0].mxu0
    %v2763 = vadd.f32 0.0, %v2762
    %v2764 = vpop.f32.mrb[0].mxu0
    %v2765 = vadd.f32 0.0, %v2764
    %v2766 = vpop.f32.mrb[0].mxu0
    %v2767 = vpop.f32.mrb[0].mxu0
    %2768 = vdwg.mxu0
    %2769 = vmatprep.subr.bf16.mxu0 %v492
    %2770 = vmatpush1.bf16.msra.mxu0 %v491
    %2771 = vmatprep.subr.bf16.mxu0 %v496
    %2772 = vmatpush1.bf16.msra.mxu0 %v495
    %2773 = vmatprep.subr.bf16.mxu0 %v500
    %2774 = vmatpush1.bf16.msra.mxu0 %v499
    %2775 = vmatprep.subr.bf16.mxu0 %v504
    %2776 = vmatpush1.bf16.msra.mxu0 %v503
    %2777 = vmatprep.subr.bf16.mxu0 %v508
    %2778 = vmatpush1.bf16.msra.mxu0 %v507
    %2779 = vmatprep.subr.bf16.mxu0 %v512
    %2780 = vmatpush1.bf16.msra.mxu0 %v511
    %2781 = vmatprep.subr.bf16.mxu0 %v516
    %2782 = vmatpush1.bf16.msra.mxu0 %v515
    %2783 = vmatprep.subr.bf16.mxu0 %v520
    %2784 = vmatpush1.bf16.msra.mxu0 %v519
    %2785 = vmatprep.subr.bf16.mxu0 0
    %2786 = vmatpush1.bf16.msra.mxu0 0
    %2787 = vmatprep.subr.bf16.mxu0 0
    %2788 = vmatpush1.bf16.msra.mxu0 0
    %2789 = vmatprep.subr.bf16.mxu0 0
    %2790 = vmatpush1.bf16.msra.mxu0 0
    %2791 = vmatprep.subr.bf16.mxu0 0
    %2792 = vmatpush1.bf16.msra.mxu0 0
    %2793 = vmatprep.subr.bf16.mxu0 0
    %2794 = vmatpush1.bf16.msra.mxu0 0
    %2795 = vmatprep.subr.bf16.mxu0 0
    %2796 = vmatpush1.bf16.msra.mxu0 0
    %2797 = vmatprep.subr.bf16.mxu0 0
    %2798 = vmatpush1.bf16.msra.mxu0 0
    %2799 = vmatprep.subr.bf16.mxu0 0
    %2800 = vmatpush1.bf16.msra.mxu0 0
    %2801 = vmatprep.mubr.bf16.mxu0 0
    %2802 = vmatmul.mubr.bf16.gmra.mrb[0].mxu0 %v2495
    %v2803 = vpop.f32.mrb[0].mxu0
    %v2804 = vadd.f32 %v2722, %v2803
    %v2805 = vpop.f32.mrb[0].mxu0
    %v2806 = vadd.f32 %v2724, %v2805
    %v2807 = vpop.f32.mrb[0].mxu0
    %v2808 = vpop.f32.mrb[0].mxu0
    %2809 = vdwg.mxu0
    %2810 = vmatprep.subr.bf16.mxu0 %v494
    %2811 = vmatpush1.bf16.msra.mxu0 %v493
    %2812 = vmatprep.subr.bf16.mxu0 %v498
    %2813 = vmatpush1.bf16.msra.mxu0 %v497
    %2814 = vmatprep.subr.bf16.mxu0 %v502
    %2815 = vmatpush1.bf16.msra.mxu0 %v501
    %2816 = vmatprep.subr.bf16.mxu0 %v506
    %2817 = vmatpush1.bf16.msra.mxu0 %v505
    %2818 = vmatprep.subr.bf16.mxu0 %v510
    %2819 = vmatpush1.bf16.msra.mxu0 %v509
    %2820 = vmatprep.subr.bf16.mxu0 %v514
    %2821 = vmatpush1.bf16.msra.mxu0 %v513
    %2822 = vmatprep.subr.bf16.mxu0 %v518
    %2823 = vmatpush1.bf16.msra.mxu0 %v517
    %2824 = vmatprep.subr.bf16.mxu0 %v522
    %2825 = vmatpush1.bf16.msra.mxu0 %v521
    %2826 = vmatprep.subr.bf16.mxu0 0
    %2827 = vmatpush1.bf16.msra.mxu0 0
    %2828 = vmatprep.subr.bf16.mxu0 0
    %2829 = vmatpush1.bf16.msra.mxu0 0
    %2830 = vmatprep.subr.bf16.mxu0 0
    %2831 = vmatpush1.bf16.msra.mxu0 0
    %2832 = vmatprep.subr.bf16.mxu0 0
    %2833 = vmatpush1.bf16.msra.mxu0 0
    %2834 = vmatprep.subr.bf16.mxu0 0
    %2835 = vmatpush1.bf16.msra.mxu0 0
    %2836 = vmatprep.subr.bf16.mxu0 0
    %2837 = vmatpush1.bf16.msra.mxu0 0
    %2838 = vmatprep.subr.bf16.mxu0 0
    %2839 = vmatpush1.bf16.msra.mxu0 0
    %2840 = vmatprep.subr.bf16.mxu0 0
    %2841 = vmatpush1.bf16.msra.mxu0 0
    %2842 = vmatprep.mubr.bf16.mxu0 0
    %2843 = vmatmul.mubr.bf16.gmra.mrb[0].mxu0 %v2495
    %v2844 = vpop.f32.mrb[0].mxu0
    %v2845 = vadd.f32 %v2763, %v2844
    %v2846 = vpop.f32.mrb[0].mxu0
    %v2847 = vadd.f32 %v2765, %v2846
    %v2848 = vpop.f32.mrb[0].mxu0
    %v2849 = vpop.f32.mrb[0].mxu0
    %2850 = vdwg.mxu0
    %v2851 = vadd.f32 %v2804, %v224
    %v2852 = vadd.f32 %v2806, %v228
    %v2853 = vadd.f32 %v2845, %v232
    %v2854 = vadd.f32 %v2847, %v236
    %v2855 = vmul.f32 %v2851, 0.5
    %v2856 = vmul.f32 %v2852, 0.5
    %v2857 = vmul.f32 %v2853, 0.5
    %v2858 = vtanh.pop %v2855
    %v2859 = vtanh.pop %v2856
    %v2860 = vtanh.pop %v2857
    %v2861 = vmul.f32 %v2858, 0.5
    %v2862 = vmul.f32 %v2859, 0.5
    %v2863 = vmul.f32 %v2860, 0.5
    %v2864 = vadd.f32 %v2861, 0.5
    %v2865 = vadd.f32 %v2862, 0.5
    %v2866 = vadd.f32 %v2863, 0.5
    %v2867 = vtanh.pop %v2854
    %v2868 = vmul.f32 %v2865, %v2491
    %v2869 = vmul.f32 %v2864, %v2867
    %v2870 = vadd.f32 %v2868, %v2869
    %v2871 = vtanh.pop %v2870
    %v2872 = vmul.f32 %v2866, %v2871
    %v2873 = vpack.c.bf16 %v2681, %v2681
    %v2874 = vpack.c.bf16 %v2872, %v2872
    %2875 = vmatprep.subr.bf16.mxu0 %v757
    %2876 = vmatpush1.bf16.msra.mxu0 %v756
    %2877 = vmatprep.subr.bf16.mxu0 %v761
    %2878 = vmatpush1.bf16.msra.mxu0 %v760
    %2879 = vmatprep.subr.bf16.mxu0 %v765
    %2880 = vmatpush1.bf16.msra.mxu0 %v764
    %2881 = vmatprep.subr.bf16.mxu0 %v769
    %2882 = vmatpush1.bf16.msra.mxu0 %v768
    %2883 = vmatprep.subr.bf16.mxu0 %v773
    %2884 = vmatpush1.bf16.msra.mxu0 %v772
    %2885 = vmatprep.subr.bf16.mxu0 %v777
    %2886 = vmatpush1.bf16.msra.mxu0 %v776
    %2887 = vmatprep.subr.bf16.mxu0 %v781
    %2888 = vmatpush1.bf16.msra.mxu0 %v780
    %2889 = vmatprep.subr.bf16.mxu0 %v785
    %2890 = vmatpush1.bf16.msra.mxu0 %v784
    %2891 = vmatprep.subr.bf16.mxu0 0
    %2892 = vmatpush1.bf16.msra.mxu0 0
    %2893 = vmatprep.subr.bf16.mxu0 0
    %2894 = vmatpush1.bf16.msra.mxu0 0
    %2895 = vmatprep.subr.bf16.mxu0 0
    %2896 = vmatpush1.bf16.msra.mxu0 0
    %2897 = vmatprep.subr.bf16.mxu0 0
    %2898 = vmatpush1.bf16.msra.mxu0 0
    %2899 = vmatprep.subr.bf16.mxu0 0
    %2900 = vmatpush1.bf16.msra.mxu0 0
    %2901 = vmatprep.subr.bf16.mxu0 0
    %2902 = vmatpush1.bf16.msra.mxu0 0
    %2903 = vmatprep.subr.bf16.mxu0 0
    %2904 = vmatpush1.bf16.msra.mxu0 0
    %2905 = vmatprep.subr.bf16.mxu0 0
    %2906 = vmatpush1.bf16.msra.mxu0 0
    %2907 = vmatprep.mubr.bf16.mxu0 0
    %2908 = vmatmul.mubr.bf16.gmra.mrb[0].mxu0 %v2874
    %v2909 = vpop.f32.mrb[0].mxu0
    %v2910 = vadd.f32 0.0, %v2909
    %v2911 = vpop.f32.mrb[0].mxu0
    %v2912 = vadd.f32 0.0, %v2911
    %v2913 = vpop.f32.mrb[0].mxu0
    %v2914 = vpop.f32.mrb[0].mxu0
    %2915 = vdwg.mxu0
    %2916 = vmatprep.subr.bf16.mxu0 %v759
    %2917 = vmatpush1.bf16.msra.mxu0 %v758
    %2918 = vmatprep.subr.bf16.mxu0 %v763
    %2919 = vmatpush1.bf16.msra.mxu0 %v762
    %2920 = vmatprep.subr.bf16.mxu0 %v767
    %2921 = vmatpush1.bf16.msra.mxu0 %v766
    %2922 = vmatprep.subr.bf16.mxu0 %v771
    %2923 = vmatpush1.bf16.msra.mxu0 %v770
    %2924 = vmatprep.subr.bf16.mxu0 %v775
    %2925 = vmatpush1.bf16.msra.mxu0 %v774
    %2926 = vmatprep.subr.bf16.mxu0 %v779
    %2927 = vmatpush1.bf16.msra.mxu0 %v778
    %2928 = vmatprep.subr.bf16.mxu0 %v783
    %2929 = vmatpush1.bf16.msra.mxu0 %v782
    %2930 = vmatprep.subr.bf16.mxu0 %v787
    %2931 = vmatpush1.bf16.msra.mxu0 %v786
    %2932 = vmatprep.subr.bf16.mxu0 0
    %2933 = vmatpush1.bf16.msra.mxu0 0
    %2934 = vmatprep.subr.bf16.mxu0 0
    %2935 = vmatpush1.bf16.msra.mxu0 0
    %2936 = vmatprep.subr.bf16.mxu0 0
    %2937 = vmatpush1.bf16.msra.mxu0 0
    %2938 = vmatprep.subr.bf16.mxu0 0
    %2939 = vmatpush1.bf16.msra.mxu0 0
    %2940 = vmatprep.subr.bf16.mxu0 0
    %2941 = vmatpush1.bf16.msra.mxu0 0
    %2942 = vmatprep.subr.bf16.mxu0 0
    %2943 = vmatpush1.bf16.msra.mxu0 0
    %2944 = vmatprep.subr.bf16.mxu0 0
    %2945 = vmatpush1.bf16.msra.mxu0 0
    %2946 = vmatprep.subr.bf16.mxu0 0
    %2947 = vmatpush1.bf16.msra.mxu0 0
    %2948 = vmatprep.mubr.bf16.mxu0 0
    %2949 = vmatmul.mubr.bf16.gmra.mrb[0].mxu0 %v2874
    %v2950 = vpop.f32.mrb[0].mxu0
    %v2951 = vadd.f32 0.0, %v2950
    %v2952 = vpop.f32.mrb[0].mxu0
    %v2953 = vadd.f32 0.0, %v2952
    %v2954 = vpop.f32.mrb[0].mxu0
    %v2955 = vpop.f32.mrb[0].mxu0
    %2956 = vdwg.mxu0
    %2957 = vmatprep.subr.bf16.mxu0 %v999
    %2958 = vmatpush1.bf16.msra.mxu0 %v998
    %2959 = vmatprep.subr.bf16.mxu0 %v1003
    %2960 = vmatpush1.bf16.msra.mxu0 %v1002
    %2961 = vmatprep.subr.bf16.mxu0 %v1007
    %2962 = vmatpush1.bf16.msra.mxu0 %v1006
    %2963 = vmatprep.subr.bf16.mxu0 %v1011
    %2964 = vmatpush1.bf16.msra.mxu0 %v1010
    %2965 = vmatprep.subr.bf16.mxu0 %v1015
    %2966 = vmatpush1.bf16.msra.mxu0 %v1014
    %2967 = vmatprep.subr.bf16.mxu0 %v1019
    %2968 = vmatpush1.bf16.msra.mxu0 %v1018
    %2969 = vmatprep.subr.bf16.mxu0 %v1023
    %2970 = vmatpush1.bf16.msra.mxu0 %v1022
    %2971 = vmatprep.subr.bf16.mxu0 %v1027
    %2972 = vmatpush1.bf16.msra.mxu0 %v1026
    %2973 = vmatprep.subr.bf16.mxu0 0
    %2974 = vmatpush1.bf16.msra.mxu0 0
    %2975 = vmatprep.subr.bf16.mxu0 0
    %2976 = vmatpush1.bf16.msra.mxu0 0
    %2977 = vmatprep.subr.bf16.mxu0 0
    %2978 = vmatpush1.bf16.msra.mxu0 0
    %2979 = vmatprep.subr.bf16.mxu0 0
    %2980 = vmatpush1.bf16.msra.mxu0 0
    %2981 = vmatprep.subr.bf16.mxu0 0
    %2982 = vmatpush1.bf16.msra.mxu0 0
    %2983 = vmatprep.subr.bf16.mxu0 0
    %2984 = vmatpush1.bf16.msra.mxu0 0
    %2985 = vmatprep.subr.bf16.mxu0 0
    %2986 = vmatpush1.bf16.msra.mxu0 0
    %2987 = vmatprep.subr.bf16.mxu0 0
    %2988 = vmatpush1.bf16.msra.mxu0 0
    %2989 = vmatprep.mubr.bf16.mxu0 0
    %2990 = vmatmul.mubr.bf16.gmra.mrb[0].mxu0 %v2873
    %v2991 = vpop.f32.mrb[0].mxu0
    %v2992 = vadd.f32 %v2910, %v2991
    %v2993 = vpop.f32.mrb[0].mxu0
    %v2994 = vadd.f32 %v2912, %v2993
    %v2995 = vpop.f32.mrb[0].mxu0
    %v2996 = vpop.f32.mrb[0].mxu0
    %2997 = vdwg.mxu0
    %2998 = vmatprep.subr.bf16.mxu0 %v1001
    %2999 = vmatpush1.bf16.msra.mxu0 %v1000
    %3000 = vmatprep.subr.bf16.mxu0 %v1005
    %3001 = vmatpush1.bf16.msra.mxu0 %v1004
    %3002 = vmatprep.subr.bf16.mxu0 %v1009
    %3003 = vmatpush1.bf16.msra.mxu0 %v1008
    %3004 = vmatprep.subr.bf16.mxu0 %v1013
    %3005 = vmatpush1.bf16.msra.mxu0 %v1012
    %3006 = vmatprep.subr.bf16.mxu0 %v1017
    %3007 = vmatpush1.bf16.msra.mxu0 %v1016
    %3008 = vmatprep.subr.bf16.mxu0 %v1021
    %3009 = vmatpush1.bf16.msra.mxu0 %v1020
    %3010 = vmatprep.subr.bf16.mxu0 %v1025
    %3011 = vmatpush1.bf16.msra.mxu0 %v1024
    %3012 = vmatprep.subr.bf16.mxu0 %v1029
    %3013 = vmatpush1.bf16.msra.mxu0 %v1028
    %3014 = vmatprep.subr.bf16.mxu0 0
    %3015 = vmatpush1.bf16.msra.mxu0 0
    %3016 = vmatprep.subr.bf16.mxu0 0
    %3017 = vmatpush1.bf16.msra.mxu0 0
    %3018 = vmatprep.subr.bf16.mxu0 0
    %3019 = vmatpush1.bf16.msra.mxu0 0
    %3020 = vmatprep.subr.bf16.mxu0 0
    %3021 = vmatpush1.bf16.msra.mxu0 0
    %3022 = vmatprep.subr.bf16.mxu0 0
    %3023 = vmatpush1.bf16.msra.mxu0 0
    %3024 = vmatprep.subr.bf16.mxu0 0
    %3025 = vmatpush1.bf16.msra.mxu0 0
    %3026 = vmatprep.subr.bf16.mxu0 0
    %3027 = vmatpush1.bf16.msra.mxu0 0
    %3028 = vmatprep.subr.bf16.mxu0 0
    %3029 = vmatpush1.bf16.msra.mxu0 0
    %3030 = vmatprep.mubr.bf16.mxu0 0
    %3031 = vmatmul.mubr.bf16.gmra.mrb[0].mxu0 %v2873
    %v3032 = vpop.f32.mrb[0].mxu0
    %v3033 = vadd.f32 %v2951, %v3032
    %v3034 = vpop.f32.mrb[0].mxu0
    %v3035 = vadd.f32 %v2953, %v3034
    %v3036 = vpop.f32.mrb[0].mxu0
    %v3037 = vpop.f32.mrb[0].mxu0
    %3038 = vdwg.mxu0
    %v3039 = vadd.f32 %v2992, %v246
    %v3040 = vadd.f32 %v2994, %v250
    %v3041 = vadd.f32 %v3033, %v254
    %v3042 = vadd.f32 %v3035, %v258
    %v3043 = vmul.f32 %v3039, 0.5
    %v3044 = vmul.f32 %v3040, 0.5
    %v3045 = vmul.f32 %v3041, 0.5
    %v3046 = vtanh.pop %v3043
    %v3047 = vtanh.pop %v3044
    %v3048 = vtanh.pop %v3045
    %v3049 = vmul.f32 %v3046, 0.5
    %v3050 = vmul.f32 %v3047, 0.5
    %v3051 = vmul.f32 %v3048, 0.5
    %v3052 = vadd.f32 %v3049, 0.5
    %v3053 = vadd.f32 %v3050, 0.5
    %v3054 = vadd.f32 %v3051, 0.5
    %v3055 = vtanh.pop %v3042
    %v3056 = vmul.f32 %v3053, %v2679
    %v3057 = vmul.f32 %v3052, %v3055
    %v3058 = vadd.f32 %v3056, %v3057
    %v3059 = vtanh.pop %v3058
    %v3060 = vmul.f32 %v3054, %v3059
    %s3061 = scalar_lea.vmem [#allocation2], 6
    %v3062 = vld [vmem:[%s3061] sm:$0x1]
    %v3064 = vsel %vm309, %v3062, 0
    %3066 = vmatprep.subr.bf16.mxu0 %v302
    %3067 = vmatpush1.bf16.msra.mxu0 %v301
    %3068 = vmatprep.subr.bf16.mxu0 0
    %3069 = vmatpush1.bf16.msra.mxu0 0
    %3070 = vmatprep.subr.bf16.mxu0 0
    %3071 = vmatpush1.bf16.msra.mxu0 0
    %3072 = vmatprep.subr.bf16.mxu0 0
    %3073 = vmatpush1.bf16.msra.mxu0 0
    %3074 = vmatprep.subr.bf16.mxu0 0
    %3075 = vmatpush1.bf16.msra.mxu0 0
    %3076 = vmatprep.subr.bf16.mxu0 0
    %3077 = vmatpush1.bf16.msra.mxu0 0
    %3078 = vmatprep.subr.bf16.mxu0 0
    %3079 = vmatpush1.bf16.msra.mxu0 0
    %3080 = vmatprep.subr.bf16.mxu0 0
    %3081 = vmatpush1.bf16.msra.mxu0 0
    %3082 = vmatprep.subr.bf16.mxu0 0
    %3083 = vmatpush1.bf16.msra.mxu0 0
    %3084 = vmatprep.subr.bf16.mxu0 0
    %3085 = vmatpush1.bf16.msra.mxu0 0
    %3086 = vmatprep.subr.bf16.mxu0 0
    %3087 = vmatpush1.bf16.msra.mxu0 0
    %3088 = vmatprep.subr.bf16.mxu0 0
    %3089 = vmatpush1.bf16.msra.mxu0 0
    %3090 = vmatprep.subr.bf16.mxu0 0
    %3091 = vmatpush1.bf16.msra.mxu0 0
    %3092 = vmatprep.subr.bf16.mxu0 0
    %3093 = vmatpush1.bf16.msra.mxu0 0
    %3094 = vmatprep.subr.bf16.mxu0 0
    %3095 = vmatpush1.bf16.msra.mxu0 0
    %3096 = vmatprep.subr.bf16.mxu0 0
    %3097 = vmatpush1.bf16.msra.mxu0 0
    %3098 = vmatprep.mubr.bf16.mxu0 0
    %3099 = vmatmul.mubr.bf16.gmra.mrb[0].mxu0 %v3064
    %v3100 = vpop.f32.mrb[0].mxu0
    %v3101 = vadd.f32 0.0, %v3100
    %v3102 = vpop.f32.mrb[0].mxu0
    %v3103 = vadd.f32 0.0, %v3102
    %v3104 = vpop.f32.mrb[0].mxu0
    %v3105 = vpop.f32.mrb[0].mxu0
    %3106 = vdwg.mxu0
    %3107 = vmatprep.subr.bf16.mxu0 %v304
    %3108 = vmatpush1.bf16.msra.mxu0 %v303
    %3109 = vmatprep.subr.bf16.mxu0 0
    %3110 = vmatpush1.bf16.msra.mxu0 0
    %3111 = vmatprep.subr.bf16.mxu0 0
    %3112 = vmatpush1.bf16.msra.mxu0 0
    %3113 = vmatprep.subr.bf16.mxu0 0
    %3114 = vmatpush1.bf16.msra.mxu0 0
    %3115 = vmatprep.subr.bf16.mxu0 0
    %3116 = vmatpush1.bf16.msra.mxu0 0
    %3117 = vmatprep.subr.bf16.mxu0 0
    %3118 = vmatpush1.bf16.msra.mxu0 0
    %3119 = vmatprep.subr.bf16.mxu0 0
    %3120 = vmatpush1.bf16.msra.mxu0 0
    %3121 = vmatprep.subr.bf16.mxu0 0
    %3122 = vmatpush1.bf16.msra.mxu0 0
    %3123 = vmatprep.subr.bf16.mxu0 0
    %3124 = vmatpush1.bf16.msra.mxu0 0
    %3125 = vmatprep.subr.bf16.mxu0 0
    %3126 = vmatpush1.bf16.msra.mxu0 0
    %3127 = vmatprep.subr.bf16.mxu0 0
    %3128 = vmatpush1.bf16.msra.mxu0 0
    %3129 = vmatprep.subr.bf16.mxu0 0
    %3130 = vmatpush1.bf16.msra.mxu0 0
    %3131 = vmatprep.subr.bf16.mxu0 0
    %3132 = vmatpush1.bf16.msra.mxu0 0
    %3133 = vmatprep.subr.bf16.mxu0 0
    %3134 = vmatpush1.bf16.msra.mxu0 0
    %3135 = vmatprep.subr.bf16.mxu0 0
    %3136 = vmatpush1.bf16.msra.mxu0 0
    %3137 = vmatprep.subr.bf16.mxu0 0
    %3138 = vmatpush1.bf16.msra.mxu0 0
    %3139 = vmatprep.mubr.bf16.mxu0 0
    %3140 = vmatmul.mubr.bf16.gmra.mrb[0].mxu0 %v3064
    %v3141 = vpop.f32.mrb[0].mxu0
    %v3142 = vadd.f32 0.0, %v3141
    %v3143 = vpop.f32.mrb[0].mxu0
    %v3144 = vadd.f32 0.0, %v3143
    %v3145 = vpop.f32.mrb[0].mxu0
    %v3146 = vpop.f32.mrb[0].mxu0
    %3147 = vdwg.mxu0
    %3148 = vmatprep.subr.bf16.mxu0 %v492
    %3149 = vmatpush1.bf16.msra.mxu0 %v491
    %3150 = vmatprep.subr.bf16.mxu0 %v496
    %3151 = vmatpush1.bf16.msra.mxu0 %v495
    %3152 = vmatprep.subr.bf16.mxu0 %v500
    %3153 = vmatpush1.bf16.msra.mxu0 %v499
    %3154 = vmatprep.subr.bf16.mxu0 %v504
    %3155 = vmatpush1.bf16.msra.mxu0 %v503
    %3156 = vmatprep.subr.bf16.mxu0 %v508
    %3157 = vmatpush1.bf16.msra.mxu0 %v507
    %3158 = vmatprep.subr.bf16.mxu0 %v512
    %3159 = vmatpush1.bf16.msra.mxu0 %v511
    %3160 = vmatprep.subr.bf16.mxu0 %v516
    %3161 = vmatpush1.bf16.msra.mxu0 %v515
    %3162 = vmatprep.subr.bf16.mxu0 %v520
    %3163 = vmatpush1.bf16.msra.mxu0 %v519
    %3164 = vmatprep.subr.bf16.mxu0 0
    %3165 = vmatpush1.bf16.msra.mxu0 0
    %3166 = vmatprep.subr.bf16.mxu0 0
    %3167 = vmatpush1.bf16.msra.mxu0 0
    %3168 = vmatprep.subr.bf16.mxu0 0
    %3169 = vmatpush1.bf16.msra.mxu0 0
    %3170 = vmatprep.subr.bf16.mxu0 0
    %3171 = vmatpush1.bf16.msra.mxu0 0
    %3172 = vmatprep.subr.bf16.mxu0 0
    %3173 = vmatpush1.bf16.msra.mxu0 0
    %3174 = vmatprep.subr.bf16.mxu0 0
    %3175 = vmatpush1.bf16.msra.mxu0 0
    %3176 = vmatprep.subr.bf16.mxu0 0
    %3177 = vmatpush1.bf16.msra.mxu0 0
    %3178 = vmatprep.subr.bf16.mxu0 0
    %3179 = vmatpush1.bf16.msra.mxu0 0
    %3180 = vmatprep.mubr.bf16.mxu0 0
    %3181 = vmatmul.mubr.bf16.gmra.mrb[0].mxu0 %v2874
    %v3182 = vpop.f32.mrb[0].mxu0
    %v3183 = vadd.f32 %v3101, %v3182
    %v3184 = vpop.f32.mrb[0].mxu0
    %v3185 = vadd.f32 %v3103, %v3184
    %v3186 = vpop.f32.mrb[0].mxu0
    %v3187 = vpop.f32.mrb[0].mxu0
    %3188 = vdwg.mxu0
    %3189 = vmatprep.subr.bf16.mxu0 %v494
    %3190 = vmatpush1.bf16.msra.mxu0 %v493
    %3191 = vmatprep.subr.bf16.mxu0 %v498
    %3192 = vmatpush1.bf16.msra.mxu0 %v497
    %3193 = vmatprep.subr.bf16.mxu0 %v502
    %3194 = vmatpush1.bf16.msra.mxu0 %v501
    %3195 = vmatprep.subr.bf16.mxu0 %v506
    %3196 = vmatpush1.bf16.msra.mxu0 %v505
    %3197 = vmatprep.subr.bf16.mxu0 %v510
    %3198 = vmatpush1.bf16.msra.mxu0 %v509
    %3199 = vmatprep.subr.bf16.mxu0 %v514
    %3200 = vmatpush1.bf16.msra.mxu0 %v513
    %3201 = vmatprep.subr.bf16.mxu0 %v518
    %3202 = vmatpush1.bf16.msra.mxu0 %v517
    %3203 = vmatprep.subr.bf16.mxu0 %v522
    %3204 = vmatpush1.bf16.msra.mxu0 %v521
    %3205 = vmatprep.subr.bf16.mxu0 0
    %3206 = vmatpush1.bf16.msra.mxu0 0
    %3207 = vmatprep.subr.bf16.mxu0 0
    %3208 = vmatpush1.bf16.msra.mxu0 0
    %3209 = vmatprep.subr.bf16.mxu0 0
    %3210 = vmatpush1.bf16.msra.mxu0 0
    %3211 = vmatprep.subr.bf16.mxu0 0
    %3212 = vmatpush1.bf16.msra.mxu0 0
    %3213 = vmatprep.subr.bf16.mxu0 0
    %3214 = vmatpush1.bf16.msra.mxu0 0
    %3215 = vmatprep.subr.bf16.mxu0 0
    %3216 = vmatpush1.bf16.msra.mxu0 0
    %3217 = vmatprep.subr.bf16.mxu0 0
    %3218 = vmatpush1.bf16.msra.mxu0 0
    %3219 = vmatprep.subr.bf16.mxu0 0
    %3220 = vmatpush1.bf16.msra.mxu0 0
    %3221 = vmatprep.mubr.bf16.mxu0 0
    %3222 = vmatmul.mubr.bf16.gmra.mrb[0].mxu0 %v2874
    %v3223 = vpop.f32.mrb[0].mxu0
    %v3224 = vadd.f32 %v3142, %v3223
    %v3225 = vpop.f32.mrb[0].mxu0
    %v3226 = vadd.f32 %v3144, %v3225
    %v3227 = vpop.f32.mrb[0].mxu0
    %v3228 = vpop.f32.mrb[0].mxu0
    %3229 = vdwg.mxu0
    %v3230 = vadd.f32 %v3183, %v224
    %v3231 = vadd.f32 %v3185, %v228
    %v3232 = vadd.f32 %v3224, %v232
    %v3233 = vadd.f32 %v3226, %v236
    %v3234 = vmul.f32 %v3230, 0.5
    %v3235 = vmul.f32 %v3231, 0.5
    %v3236 = vmul.f32 %v3232, 0.5
    %v3237 = vtanh.pop %v3234
    %v3238 = vtanh.pop %v3235
    %v3239 = vtanh.pop %v3236
    %v3240 = vmul.f32 %v3237, 0.5
    %v3241 = vmul.f32 %v3238, 0.5
    %v3242 = vmul.f32 %v3239, 0.5
    %v3243 = vadd.f32 %v3240, 0.5
    %v3244 = vadd.f32 %v3241, 0.5
    %v3245 = vadd.f32 %v3242, 0.5
    %v3246 = vtanh.pop %v3233
    %v3247 = vmul.f32 %v3244, %v2870
    %v3248 = vmul.f32 %v3243, %v3246
    %v3249 = vadd.f32 %v3247, %v3248
    %v3250 = vtanh.pop %v3249
    %v3251 = vmul.f32 %v3245, %v3250
    %v3252 = vpack.c.bf16 %v3060, %v3060
    %v3253 = vpack.c.bf16 %v3251, %v3251
    %3254 = vmatprep.subr.bf16.mxu0 %v757
    %3255 = vmatpush1.bf16.msra.mxu0 %v756
    %3256 = vmatprep.subr.bf16.mxu0 %v761
    %3257 = vmatpush1.bf16.msra.mxu0 %v760
    %3258 = vmatprep.subr.bf16.mxu0 %v765
    %3259 = vmatpush1.bf16.msra.mxu0 %v764
    %3260 = vmatprep.subr.bf16.mxu0 %v769
    %3261 = vmatpush1.bf16.msra.mxu0 %v768
    %3262 = vmatprep.subr.bf16.mxu0 %v773
    %3263 = vmatpush1.bf16.msra.mxu0 %v772
    %3264 = vmatprep.subr.bf16.mxu0 %v777
    %3265 = vmatpush1.bf16.msra.mxu0 %v776
    %3266 = vmatprep.subr.bf16.mxu0 %v781
    %3267 = vmatpush1.bf16.msra.mxu0 %v780
    %3268 = vmatprep.subr.bf16.mxu0 %v785
    %3269 = vmatpush1.bf16.msra.mxu0 %v784
    %3270 = vmatprep.subr.bf16.mxu0 0
    %3271 = vmatpush1.bf16.msra.mxu0 0
    %3272 = vmatprep.subr.bf16.mxu0 0
    %3273 = vmatpush1.bf16.msra.mxu0 0
    %3274 = vmatprep.subr.bf16.mxu0 0
    %3275 = vmatpush1.bf16.msra.mxu0 0
    %3276 = vmatprep.subr.bf16.mxu0 0
    %3277 = vmatpush1.bf16.msra.mxu0 0
    %3278 = vmatprep.subr.bf16.mxu0 0
    %3279 = vmatpush1.bf16.msra.mxu0 0
    %3280 = vmatprep.subr.bf16.mxu0 0
    %3281 = vmatpush1.bf16.msra.mxu0 0
    %3282 = vmatprep.subr.bf16.mxu0 0
    %3283 = vmatpush1.bf16.msra.mxu0 0
    %3284 = vmatprep.subr.bf16.mxu0 0
    %3285 = vmatpush1.bf16.msra.mxu0 0
    %3286 = vmatprep.mubr.bf16.mxu0 0
    %3287 = vmatmul.mubr.bf16.gmra.mrb[0].mxu0 %v3253
    %v3288 = vpop.f32.mrb[0].mxu0
    %v3289 = vadd.f32 0.0, %v3288
    %v3290 = vpop.f32.mrb[0].mxu0
    %v3291 = vadd.f32 0.0, %v3290
    %v3292 = vpop.f32.mrb[0].mxu0
    %v3293 = vpop.f32.mrb[0].mxu0
    %3294 = vdwg.mxu0
    %3295 = vmatprep.subr.bf16.mxu0 %v759
    %3296 = vmatpush1.bf16.msra.mxu0 %v758
    %3297 = vmatprep.subr.bf16.mxu0 %v763
    %3298 = vmatpush1.bf16.msra.mxu0 %v762
    %3299 = vmatprep.subr.bf16.mxu0 %v767
    %3300 = vmatpush1.bf16.msra.mxu0 %v766
    %3301 = vmatprep.subr.bf16.mxu0 %v771
    %3302 = vmatpush1.bf16.msra.mxu0 %v770
    %3303 = vmatprep.subr.bf16.mxu0 %v775
    %3304 = vmatpush1.bf16.msra.mxu0 %v774
    %3305 = vmatprep.subr.bf16.mxu0 %v779
    %3306 = vmatpush1.bf16.msra.mxu0 %v778
    %3307 = vmatprep.subr.bf16.mxu0 %v783
    %3308 = vmatpush1.bf16.msra.mxu0 %v782
    %3309 = vmatprep.subr.bf16.mxu0 %v787
    %3310 = vmatpush1.bf16.msra.mxu0 %v786
    %3311 = vmatprep.subr.bf16.mxu0 0
    %3312 = vmatpush1.bf16.msra.mxu0 0
    %3313 = vmatprep.subr.bf16.mxu0 0
    %3314 = vmatpush1.bf16.msra.mxu0 0
    %3315 = vmatprep.subr.bf16.mxu0 0
    %3316 = vmatpush1.bf16.msra.mxu0 0
    %3317 = vmatprep.subr.bf16.mxu0 0
    %3318 = vmatpush1.bf16.msra.mxu0 0
    %3319 = vmatprep.subr.bf16.mxu0 0
    %3320 = vmatpush1.bf16.msra.mxu0 0
    %3321 = vmatprep.subr.bf16.mxu0 0
    %3322 = vmatpush1.bf16.msra.mxu0 0
    %3323 = vmatprep.subr.bf16.mxu0 0
    %3324 = vmatpush1.bf16.msra.mxu0 0
    %3325 = vmatprep.subr.bf16.mxu0 0
    %3326 = vmatpush1.bf16.msra.mxu0 0
    %3327 = vmatprep.mubr.bf16.mxu0 0
    %3328 = vmatmul.mubr.bf16.gmra.mrb[0].mxu0 %v3253
    %v3329 = vpop.f32.mrb[0].mxu0
    %v3330 = vadd.f32 0.0, %v3329
    %v3331 = vpop.f32.mrb[0].mxu0
    %v3332 = vadd.f32 0.0, %v3331
    %v3333 = vpop.f32.mrb[0].mxu0
    %v3334 = vpop.f32.mrb[0].mxu0
    %3335 = vdwg.mxu0
    %3336 = vmatprep.subr.bf16.mxu0 %v999
    %3337 = vmatpush1.bf16.msra.mxu0 %v998
    %3338 = vmatprep.subr.bf16.mxu0 %v1003
    %3339 = vmatpush1.bf16.msra.mxu0 %v1002
    %3340 = vmatprep.subr.bf16.mxu0 %v1007
    %3341 = vmatpush1.bf16.msra.mxu0 %v1006
    %3342 = vmatprep.subr.bf16.mxu0 %v1011
    %3343 = vmatpush1.bf16.msra.mxu0 %v1010
    %3344 = vmatprep.subr.bf16.mxu0 %v1015
    %3345 = vmatpush1.bf16.msra.mxu0 %v1014
    %3346 = vmatprep.subr.bf16.mxu0 %v1019
    %3347 = vmatpush1.bf16.msra.mxu0 %v1018
    %3348 = vmatprep.subr.bf16.mxu0 %v1023
    %3349 = vmatpush1.bf16.msra.mxu0 %v1022
    %3350 = vmatprep.subr.bf16.mxu0 %v1027
    %3351 = vmatpush1.bf16.msra.mxu0 %v1026
    %3352 = vmatprep.subr.bf16.mxu0 0
    %3353 = vmatpush1.bf16.msra.mxu0 0
    %3354 = vmatprep.subr.bf16.mxu0 0
    %3355 = vmatpush1.bf16.msra.mxu0 0
    %3356 = vmatprep.subr.bf16.mxu0 0
    %3357 = vmatpush1.bf16.msra.mxu0 0
    %3358 = vmatprep.subr.bf16.mxu0 0
    %3359 = vmatpush1.bf16.msra.mxu0 0
    %3360 = vmatprep.subr.bf16.mxu0 0
    %3361 = vmatpush1.bf16.msra.mxu0 0
    %3362 = vmatprep.subr.bf16.mxu0 0
    %3363 = vmatpush1.bf16.msra.mxu0 0
    %3364 = vmatprep.subr.bf16.mxu0 0
    %3365 = vmatpush1.bf16.msra.mxu0 0
    %3366 = vmatprep.subr.bf16.mxu0 0
    %3367 = vmatpush1.bf16.msra.mxu0 0
    %3368 = vmatprep.mubr.bf16.mxu0 0
    %3369 = vmatmul.mubr.bf16.gmra.mrb[0].mxu0 %v3252
    %v3370 = vpop.f32.mrb[0].mxu0
    %v3371 = vadd.f32 %v3289, %v3370
    %v3372 = vpop.f32.mrb[0].mxu0
    %v3373 = vadd.f32 %v3291, %v3372
    %v3374 = vpop.f32.mrb[0].mxu0
    %v3375 = vpop.f32.mrb[0].mxu0
    %3376 = vdwg.mxu0
    %3377 = vmatprep.subr.bf16.mxu0 %v1001
    %3378 = vmatpush1.bf16.msra.mxu0 %v1000
    %3379 = vmatprep.subr.bf16.mxu0 %v1005
    %3380 = vmatpush1.bf16.msra.mxu0 %v1004
    %3381 = vmatprep.subr.bf16.mxu0 %v1009
    %3382 = vmatpush1.bf16.msra.mxu0 %v1008
    %3383 = vmatprep.subr.bf16.mxu0 %v1013
    %3384 = vmatpush1.bf16.msra.mxu0 %v1012
    %3385 = vmatprep.subr.bf16.mxu0 %v1017
    %3386 = vmatpush1.bf16.msra.mxu0 %v1016
    %3387 = vmatprep.subr.bf16.mxu0 %v1021
    %3388 = vmatpush1.bf16.msra.mxu0 %v1020
    %3389 = vmatprep.subr.bf16.mxu0 %v1025
    %3390 = vmatpush1.bf16.msra.mxu0 %v1024
    %3391 = vmatprep.subr.bf16.mxu0 %v1029
    %3392 = vmatpush1.bf16.msra.mxu0 %v1028
    %3393 = vmatprep.subr.bf16.mxu0 0
    %3394 = vmatpush1.bf16.msra.mxu0 0
    %3395 = vmatprep.subr.bf16.mxu0 0
    %3396 = vmatpush1.bf16.msra.mxu0 0
    %3397 = vmatprep.subr.bf16.mxu0 0
    %3398 = vmatpush1.bf16.msra.mxu0 0
    %3399 = vmatprep.subr.bf16.mxu0 0
    %3400 = vmatpush1.bf16.msra.mxu0 0
    %3401 = vmatprep.subr.bf16.mxu0 0
    %3402 = vmatpush1.bf16.msra.mxu0 0
    %3403 = vmatprep.subr.bf16.mxu0 0
    %3404 = vmatpush1.bf16.msra.mxu0 0
    %3405 = vmatprep.subr.bf16.mxu0 0
    %3406 = vmatpush1.bf16.msra.mxu0 0
    %3407 = vmatprep.subr.bf16.mxu0 0
    %3408 = vmatpush1.bf16.msra.mxu0 0
    %3409 = vmatprep.mubr.bf16.mxu0 0
    %3410 = vmatmul.mubr.bf16.gmra.mrb[0].mxu0 %v3252
    %v3411 = vpop.f32.mrb[0].mxu0
    %v3412 = vadd.f32 %v3330, %v3411
    %v3413 = vpop.f32.mrb[0].mxu0
    %v3414 = vadd.f32 %v3332, %v3413
    %v3415 = vpop.f32.mrb[0].mxu0
    %v3416 = vpop.f32.mrb[0].mxu0
    %3417 = vdwg.mxu0
    %v3418 = vadd.f32 %v3371, %v246
    %v3419 = vadd.f32 %v3373, %v250
    %v3420 = vadd.f32 %v3412, %v254
    %v3421 = vadd.f32 %v3414, %v258
    %v3422 = vmul.f32 %v3418, 0.5
    %v3423 = vmul.f32 %v3419, 0.5
    %v3424 = vmul.f32 %v3420, 0.5
    %v3425 = vtanh.pop %v3422
    %v3426 = vtanh.pop %v3423
    %v3427 = vtanh.pop %v3424
    %v3428 = vmul.f32 %v3425, 0.5
    %v3429 = vmul.f32 %v3426, 0.5
    %v3430 = vmul.f32 %v3427, 0.5
    %v3431 = vadd.f32 %v3428, 0.5
    %v3432 = vadd.f32 %v3429, 0.5
    %v3433 = vadd.f32 %v3430, 0.5
    %v3434 = vtanh.pop %v3421
    %v3435 = vmul.f32 %v3432, %v3058
    %v3436 = vmul.f32 %v3431, %v3434
    %v3437 = vadd.f32 %v3435, %v3436
    %v3438 = vtanh.pop %v3437
    %v3439 = vmul.f32 %v3433, %v3438
    %s3440 = scalar_lea.vmem [#allocation2], 7
    %v3441 = vld [vmem:[%s3440] sm:$0x1]
    %v3443 = vsel %vm309, %v3441, 0
    %3445 = vmatprep.subr.bf16.mxu0 %v302
    %3446 = vmatpush1.bf16.msra.mxu0 %v301
    %3447 = vmatprep.subr.bf16.mxu0 0
    %3448 = vmatpush1.bf16.msra.mxu0 0
    %3449 = vmatprep.subr.bf16.mxu0 0
    %3450 = vmatpush1.bf16.msra.mxu0 0
    %3451 = vmatprep.subr.bf16.mxu0 0
    %3452 = vmatpush1.bf16.msra.mxu0 0
    %3453 = vmatprep.subr.bf16.mxu0 0
    %3454 = vmatpush1.bf16.msra.mxu0 0
    %3455 = vmatprep.subr.bf16.mxu0 0
    %3456 = vmatpush1.bf16.msra.mxu0 0
    %3457 = vmatprep.subr.bf16.mxu0 0
    %3458 = vmatpush1.bf16.msra.mxu0 0
    %3459 = vmatprep.subr.bf16.mxu0 0
    %3460 = vmatpush1.bf16.msra.mxu0 0
    %3461 = vmatprep.subr.bf16.mxu0 0
    %3462 = vmatpush1.bf16.msra.mxu0 0
    %3463 = vmatprep.subr.bf16.mxu0 0
    %3464 = vmatpush1.bf16.msra.mxu0 0
    %3465 = vmatprep.subr.bf16.mxu0 0
    %3466 = vmatpush1.bf16.msra.mxu0 0
    %3467 = vmatprep.subr.bf16.mxu0 0
    %3468 = vmatpush1.bf16.msra.mxu0 0
    %3469 = vmatprep.subr.bf16.mxu0 0
    %3470 = vmatpush1.bf16.msra.mxu0 0
    %3471 = vmatprep.subr.bf16.mxu0 0
    %3472 = vmatpush1.bf16.msra.mxu0 0
    %3473 = vmatprep.subr.bf16.mxu0 0
    %3474 = vmatpush1.bf16.msra.mxu0 0
    %3475 = vmatprep.subr.bf16.mxu0 0
    %3476 = vmatpush1.bf16.msra.mxu0 0
    %3477 = vmatprep.mubr.bf16.mxu0 0
    %3478 = vmatmul.mubr.bf16.gmra.mrb[0].mxu0 %v3443
    %v3479 = vpop.f32.mrb[0].mxu0
    %v3480 = vadd.f32 0.0, %v3479
    %v3481 = vpop.f32.mrb[0].mxu0
    %v3482 = vadd.f32 0.0, %v3481
    %v3483 = vpop.f32.mrb[0].mxu0
    %v3484 = vpop.f32.mrb[0].mxu0
    %3485 = vdwg.mxu0
    %3486 = vmatprep.subr.bf16.mxu0 %v304
    %3487 = vmatpush1.bf16.msra.mxu0 %v303
    %3488 = vmatprep.subr.bf16.mxu0 0
    %3489 = vmatpush1.bf16.msra.mxu0 0
    %3490 = vmatprep.subr.bf16.mxu0 0
    %3491 = vmatpush1.bf16.msra.mxu0 0
    %3492 = vmatprep.subr.bf16.mxu0 0
    %3493 = vmatpush1.bf16.msra.mxu0 0
    %3494 = vmatprep.subr.bf16.mxu0 0
    %3495 = vmatpush1.bf16.msra.mxu0 0
    %3496 = vmatprep.subr.bf16.mxu0 0
    %3497 = vmatpush1.bf16.msra.mxu0 0
    %3498 = vmatprep.subr.bf16.mxu0 0
    %3499 = vmatpush1.bf16.msra.mxu0 0
    %3500 = vmatprep.subr.bf16.mxu0 0
    %3501 = vmatpush1.bf16.msra.mxu0 0
    %3502 = vmatprep.subr.bf16.mxu0 0
    %3503 = vmatpush1.bf16.msra.mxu0 0
    %3504 = vmatprep.subr.bf16.mxu0 0
    %3505 = vmatpush1.bf16.msra.mxu0 0
    %3506 = vmatprep.subr.bf16.mxu0 0
    %3507 = vmatpush1.bf16.msra.mxu0 0
    %3508 = vmatprep.subr.bf16.mxu0 0
    %3509 = vmatpush1.bf16.msra.mxu0 0
    %3510 = vmatprep.subr.bf16.mxu0 0
    %3511 = vmatpush1.bf16.msra.mxu0 0
    %3512 = vmatprep.subr.bf16.mxu0 0
    %3513 = vmatpush1.bf16.msra.mxu0 0
    %3514 = vmatprep.subr.bf16.mxu0 0
    %3515 = vmatpush1.bf16.msra.mxu0 0
    %3516 = vmatprep.subr.bf16.mxu0 0
    %3517 = vmatpush1.bf16.msra.mxu0 0
    %3518 = vmatprep.mubr.bf16.mxu0 0
    %3519 = vmatmul.mubr.bf16.gmra.mrb[0].mxu0 %v3443
    %v3520 = vpop.f32.mrb[0].mxu0
    %v3521 = vadd.f32 0.0, %v3520
    %v3522 = vpop.f32.mrb[0].mxu0
    %v3523 = vadd.f32 0.0, %v3522
    %v3524 = vpop.f32.mrb[0].mxu0
    %v3525 = vpop.f32.mrb[0].mxu0
    %3526 = vdwg.mxu0
    %3527 = vmatprep.subr.bf16.mxu0 %v492
    %3528 = vmatpush1.bf16.msra.mxu0 %v491
    %3529 = vmatprep.subr.bf16.mxu0 %v496
    %3530 = vmatpush1.bf16.msra.mxu0 %v495
    %3531 = vmatprep.subr.bf16.mxu0 %v500
    %3532 = vmatpush1.bf16.msra.mxu0 %v499
    %3533 = vmatprep.subr.bf16.mxu0 %v504
    %3534 = vmatpush1.bf16.msra.mxu0 %v503
    %3535 = vmatprep.subr.bf16.mxu0 %v508
    %3536 = vmatpush1.bf16.msra.mxu0 %v507
    %3537 = vmatprep.subr.bf16.mxu0 %v512
    %3538 = vmatpush1.bf16.msra.mxu0 %v511
    %3539 = vmatprep.subr.bf16.mxu0 %v516
    %3540 = vmatpush1.bf16.msra.mxu0 %v515
    %3541 = vmatprep.subr.bf16.mxu0 %v520
    %3542 = vmatpush1.bf16.msra.mxu0 %v519
    %3543 = vmatprep.subr.bf16.mxu0 0
    %3544 = vmatpush1.bf16.msra.mxu0 0
    %3545 = vmatprep.subr.bf16.mxu0 0
    %3546 = vmatpush1.bf16.msra.mxu0 0
    %3547 = vmatprep.subr.bf16.mxu0 0
    %3548 = vmatpush1.bf16.msra.mxu0 0
    %3549 = vmatprep.subr.bf16.mxu0 0
    %3550 = vmatpush1.bf16.msra.mxu0 0
    %3551 = vmatprep.subr.bf16.mxu0 0
    %3552 = vmatpush1.bf16.msra.mxu0 0
    %3553 = vmatprep.subr.bf16.mxu0 0
    %3554 = vmatpush1.bf16.msra.mxu0 0
    %3555 = vmatprep.subr.bf16.mxu0 0
    %3556 = vmatpush1.bf16.msra.mxu0 0
    %3557 = vmatprep.subr.bf16.mxu0 0
    %3558 = vmatpush1.bf16.msra.mxu0 0
    %3559 = vmatprep.mubr.bf16.mxu0 0
    %3560 = vmatmul.mubr.bf16.gmra.mrb[0].mxu0 %v3253
    %v3561 = vpop.f32.mrb[0].mxu0
    %v3562 = vadd.f32 %v3480, %v3561
    %v3563 = vpop.f32.mrb[0].mxu0
    %v3564 = vadd.f32 %v3482, %v3563
    %v3565 = vpop.f32.mrb[0].mxu0
    %v3566 = vpop.f32.mrb[0].mxu0
    %3567 = vdwg.mxu0
    %3568 = vmatprep.subr.bf16.mxu0 %v494
    %3569 = vmatpush1.bf16.msra.mxu0 %v493
    %3570 = vmatprep.subr.bf16.mxu0 %v498
    %3571 = vmatpush1.bf16.msra.mxu0 %v497
    %3572 = vmatprep.subr.bf16.mxu0 %v502
    %3573 = vmatpush1.bf16.msra.mxu0 %v501
    %3574 = vmatprep.subr.bf16.mxu0 %v506
    %3575 = vmatpush1.bf16.msra.mxu0 %v505
    %3576 = vmatprep.subr.bf16.mxu0 %v510
    %3577 = vmatpush1.bf16.msra.mxu0 %v509
    %3578 = vmatprep.subr.bf16.mxu0 %v514
    %3579 = vmatpush1.bf16.msra.mxu0 %v513
    %3580 = vmatprep.subr.bf16.mxu0 %v518
    %3581 = vmatpush1.bf16.msra.mxu0 %v517
    %3582 = vmatprep.subr.bf16.mxu0 %v522
    %3583 = vmatpush1.bf16.msra.mxu0 %v521
    %3584 = vmatprep.subr.bf16.mxu0 0
    %3585 = vmatpush1.bf16.msra.mxu0 0
    %3586 = vmatprep.subr.bf16.mxu0 0
    %3587 = vmatpush1.bf16.msra.mxu0 0
    %3588 = vmatprep.subr.bf16.mxu0 0
    %3589 = vmatpush1.bf16.msra.mxu0 0
    %3590 = vmatprep.subr.bf16.mxu0 0
    %3591 = vmatpush1.bf16.msra.mxu0 0
    %3592 = vmatprep.subr.bf16.mxu0 0
    %3593 = vmatpush1.bf16.msra.mxu0 0
    %3594 = vmatprep.subr.bf16.mxu0 0
    %3595 = vmatpush1.bf16.msra.mxu0 0
    %3596 = vmatprep.subr.bf16.mxu0 0
    %3597 = vmatpush1.bf16.msra.mxu0 0
    %3598 = vmatprep.subr.bf16.mxu0 0
    %3599 = vmatpush1.bf16.msra.mxu0 0
    %3600 = vmatprep.mubr.bf16.mxu0 0
    %3601 = vmatmul.mubr.bf16.gmra.mrb[0].mxu0 %v3253
    %v3602 = vpop.f32.mrb[0].mxu0
    %v3603 = vadd.f32 %v3521, %v3602
    %v3604 = vpop.f32.mrb[0].mxu0
    %v3605 = vadd.f32 %v3523, %v3604
    %v3606 = vpop.f32.mrb[0].mxu0
    %v3607 = vpop.f32.mrb[0].mxu0
    %3608 = vdwg.mxu0
    %v3609 = vadd.f32 %v3562, %v224
    %v3610 = vadd.f32 %v3564, %v228
    %v3611 = vadd.f32 %v3603, %v232
    %v3612 = vadd.f32 %v3605, %v236
    %v3613 = vmul.f32 %v3609, 0.5
    %v3614 = vmul.f32 %v3610, 0.5
    %v3615 = vmul.f32 %v3611, 0.5
    %v3616 = vtanh.pop %v3613
    %v3617 = vtanh.pop %v3614
    %v3618 = vtanh.pop %v3615
    %v3619 = vmul.f32 %v3616, 0.5
    %v3620 = vmul.f32 %v3617, 0.5
    %v3621 = vmul.f32 %v3618, 0.5
    %v3622 = vadd.f32 %v3619, 0.5
    %v3623 = vadd.f32 %v3620, 0.5
    %v3624 = vadd.f32 %v3621, 0.5
    %v3625 = vtanh.pop %v3612
    %v3626 = vmul.f32 %v3623, %v3249
    %v3627 = vmul.f32 %v3622, %v3625
    %v3628 = vadd.f32 %v3626, %v3627
    %v3629 = vtanh.pop %v3628
    %v3630 = vmul.f32 %v3624, %v3629
    %v3631 = vpack.c.bf16 %v3439, %v3439
    %v3632 = vpack.c.bf16 %v3630, %v3630
    %3633 = vmatprep.subr.bf16.mxu0 %v757
    %3634 = vmatpush1.bf16.msra.mxu0 %v756
    %3635 = vmatprep.subr.bf16.mxu0 %v761
    %3636 = vmatpush1.bf16.msra.mxu0 %v760
    %3637 = vmatprep.subr.bf16.mxu0 %v765
    %3638 = vmatpush1.bf16.msra.mxu0 %v764
    %3639 = vmatprep.subr.bf16.mxu0 %v769
    %3640 = vmatpush1.bf16.msra.mxu0 %v768
    %3641 = vmatprep.subr.bf16.mxu0 %v773
    %3642 = vmatpush1.bf16.msra.mxu0 %v772
    %3643 = vmatprep.subr.bf16.mxu0 %v777
    %3644 = vmatpush1.bf16.msra.mxu0 %v776
    %3645 = vmatprep.subr.bf16.mxu0 %v781
    %3646 = vmatpush1.bf16.msra.mxu0 %v780
    %3647 = vmatprep.subr.bf16.mxu0 %v785
    %3648 = vmatpush1.bf16.msra.mxu0 %v784
    %3649 = vmatprep.subr.bf16.mxu0 0
    %3650 = vmatpush1.bf16.msra.mxu0 0
    %3651 = vmatprep.subr.bf16.mxu0 0
    %3652 = vmatpush1.bf16.msra.mxu0 0
    %3653 = vmatprep.subr.bf16.mxu0 0
    %3654 = vmatpush1.bf16.msra.mxu0 0
    %3655 = vmatprep.subr.bf16.mxu0 0
    %3656 = vmatpush1.bf16.msra.mxu0 0
    %3657 = vmatprep.subr.bf16.mxu0 0
    %3658 = vmatpush1.bf16.msra.mxu0 0
    %3659 = vmatprep.subr.bf16.mxu0 0
    %3660 = vmatpush1.bf16.msra.mxu0 0
    %3661 = vmatprep.subr.bf16.mxu0 0
    %3662 = vmatpush1.bf16.msra.mxu0 0
    %3663 = vmatprep.subr.bf16.mxu0 0
    %3664 = vmatpush1.bf16.msra.mxu0 0
    %3665 = vmatprep.mubr.bf16.mxu0 0
    %3666 = vmatmul.mubr.bf16.gmra.mrb[0].mxu0 %v3632
    %v3667 = vpop.f32.mrb[0].mxu0
    %v3668 = vadd.f32 0.0, %v3667
    %v3669 = vpop.f32.mrb[0].mxu0
    %v3670 = vadd.f32 0.0, %v3669
    %v3671 = vpop.f32.mrb[0].mxu0
    %v3672 = vpop.f32.mrb[0].mxu0
    %3673 = vdwg.mxu0
    %3674 = vmatprep.subr.bf16.mxu0 %v759
    %3675 = vmatpush1.bf16.msra.mxu0 %v758
    %3676 = vmatprep.subr.bf16.mxu0 %v763
    %3677 = vmatpush1.bf16.msra.mxu0 %v762
    %3678 = vmatprep.subr.bf16.mxu0 %v767
    %3679 = vmatpush1.bf16.msra.mxu0 %v766
    %3680 = vmatprep.subr.bf16.mxu0 %v771
    %3681 = vmatpush1.bf16.msra.mxu0 %v770
    %3682 = vmatprep.subr.bf16.mxu0 %v775
    %3683 = vmatpush1.bf16.msra.mxu0 %v774
    %3684 = vmatprep.subr.bf16.mxu0 %v779
    %3685 = vmatpush1.bf16.msra.mxu0 %v778
    %3686 = vmatprep.subr.bf16.mxu0 %v783
    %3687 = vmatpush1.bf16.msra.mxu0 %v782
    %3688 = vmatprep.subr.bf16.mxu0 %v787
    %3689 = vmatpush1.bf16.msra.mxu0 %v786
    %3690 = vmatprep.subr.bf16.mxu0 0
    %3691 = vmatpush1.bf16.msra.mxu0 0
    %3692 = vmatprep.subr.bf16.mxu0 0
    %3693 = vmatpush1.bf16.msra.mxu0 0
    %3694 = vmatprep.subr.bf16.mxu0 0
    %3695 = vmatpush1.bf16.msra.mxu0 0
    %3696 = vmatprep.subr.bf16.mxu0 0
    %3697 = vmatpush1.bf16.msra.mxu0 0
    %3698 = vmatprep.subr.bf16.mxu0 0
    %3699 = vmatpush1.bf16.msra.mxu0 0
    %3700 = vmatprep.subr.bf16.mxu0 0
    %3701 = vmatpush1.bf16.msra.mxu0 0
    %3702 = vmatprep.subr.bf16.mxu0 0
    %3703 = vmatpush1.bf16.msra.mxu0 0
    %3704 = vmatprep.subr.bf16.mxu0 0
    %3705 = vmatpush1.bf16.msra.mxu0 0
    %3706 = vmatprep.mubr.bf16.mxu0 0
    %3707 = vmatmul.mubr.bf16.gmra.mrb[0].mxu0 %v3632
    %v3708 = vpop.f32.mrb[0].mxu0
    %v3709 = vadd.f32 0.0, %v3708
    %v3710 = vpop.f32.mrb[0].mxu0
    %v3711 = vadd.f32 0.0, %v3710
    %v3712 = vpop.f32.mrb[0].mxu0
    %v3713 = vpop.f32.mrb[0].mxu0
    %3714 = vdwg.mxu0
    %3715 = vmatprep.subr.bf16.mxu0 %v999
    %3716 = vmatpush1.bf16.msra.mxu0 %v998
    %3717 = vmatprep.subr.bf16.mxu0 %v1003
    %3718 = vmatpush1.bf16.msra.mxu0 %v1002
    %3719 = vmatprep.subr.bf16.mxu0 %v1007
    %3720 = vmatpush1.bf16.msra.mxu0 %v1006
    %3721 = vmatprep.subr.bf16.mxu0 %v1011
    %3722 = vmatpush1.bf16.msra.mxu0 %v1010
    %3723 = vmatprep.subr.bf16.mxu0 %v1015
    %3724 = vmatpush1.bf16.msra.mxu0 %v1014
    %3725 = vmatprep.subr.bf16.mxu0 %v1019
    %3726 = vmatpush1.bf16.msra.mxu0 %v1018
    %3727 = vmatprep.subr.bf16.mxu0 %v1023
    %3728 = vmatpush1.bf16.msra.mxu0 %v1022
    %3729 = vmatprep.subr.bf16.mxu0 %v1027
    %3730 = vmatpush1.bf16.msra.mxu0 %v1026
    %3731 = vmatprep.subr.bf16.mxu0 0
    %3732 = vmatpush1.bf16.msra.mxu0 0
    %3733 = vmatprep.subr.bf16.mxu0 0
    %3734 = vmatpush1.bf16.msra.mxu0 0
    %3735 = vmatprep.subr.bf16.mxu0 0
    %3736 = vmatpush1.bf16.msra.mxu0 0
    %3737 = vmatprep.subr.bf16.mxu0 0
    %3738 = vmatpush1.bf16.msra.mxu0 0
    %3739 = vmatprep.subr.bf16.mxu0 0
    %3740 = vmatpush1.bf16.msra.mxu0 0
    %3741 = vmatprep.subr.bf16.mxu0 0
    %3742 = vmatpush1.bf16.msra.mxu0 0
    %3743 = vmatprep.subr.bf16.mxu0 0
    %3744 = vmatpush1.bf16.msra.mxu0 0
    %3745 = vmatprep.subr.bf16.mxu0 0
    %3746 = vmatpush1.bf16.msra.mxu0 0
    %3747 = vmatprep.mubr.bf16.mxu0 0
    %3748 = vmatmul.mubr.bf16.gmra.mrb[0].mxu0 %v3631
    %v3749 = vpop.f32.mrb[0].mxu0
    %v3750 = vadd.f32 %v3668, %v3749
    %v3751 = vpop.f32.mrb[0].mxu0
    %v3752 = vadd.f32 %v3670, %v3751
    %v3753 = vpop.f32.mrb[0].mxu0
    %v3754 = vpop.f32.mrb[0].mxu0
    %3755 = vdwg.mxu0
    %3756 = vmatprep.subr.bf16.mxu0 %v1001
    %3757 = vmatpush1.bf16.msra.mxu0 %v1000
    %3758 = vmatprep.subr.bf16.mxu0 %v1005
    %3759 = vmatpush1.bf16.msra.mxu0 %v1004
    %3760 = vmatprep.subr.bf16.mxu0 %v1009
    %3761 = vmatpush1.bf16.msra.mxu0 %v1008
    %3762 = vmatprep.subr.bf16.mxu0 %v1013
    %3763 = vmatpush1.bf16.msra.mxu0 %v1012
    %3764 = vmatprep.subr.bf16.mxu0 %v1017
    %3765 = vmatpush1.bf16.msra.mxu0 %v1016
    %3766 = vmatprep.subr.bf16.mxu0 %v1021
    %3767 = vmatpush1.bf16.msra.mxu0 %v1020
    %3768 = vmatprep.subr.bf16.mxu0 %v1025
    %3769 = vmatpush1.bf16.msra.mxu0 %v1024
    %3770 = vmatprep.subr.bf16.mxu0 %v1029
    %3771 = vmatpush1.bf16.msra.mxu0 %v1028
    %3772 = vmatprep.subr.bf16.mxu0 0
    %3773 = vmatpush1.bf16.msra.mxu0 0
    %3774 = vmatprep.subr.bf16.mxu0 0
    %3775 = vmatpush1.bf16.msra.mxu0 0
    %3776 = vmatprep.subr.bf16.mxu0 0
    %3777 = vmatpush1.bf16.msra.mxu0 0
    %3778 = vmatprep.subr.bf16.mxu0 0
    %3779 = vmatpush1.bf16.msra.mxu0 0
    %3780 = vmatprep.subr.bf16.mxu0 0
    %3781 = vmatpush1.bf16.msra.mxu0 0
    %3782 = vmatprep.subr.bf16.mxu0 0
    %3783 = vmatpush1.bf16.msra.mxu0 0
    %3784 = vmatprep.subr.bf16.mxu0 0
    %3785 = vmatpush1.bf16.msra.mxu0 0
    %3786 = vmatprep.subr.bf16.mxu0 0
    %3787 = vmatpush1.bf16.msra.mxu0 0
    %3788 = vmatprep.mubr.bf16.mxu0 0
    %3789 = vmatmul.mubr.bf16.gmra.mrb[0].mxu0 %v3631
    %v3790 = vpop.f32.mrb[0].mxu0
    %v3791 = vadd.f32 %v3709, %v3790
    %v3792 = vpop.f32.mrb[0].mxu0
    %v3793 = vadd.f32 %v3711, %v3792
    %v3794 = vpop.f32.mrb[0].mxu0
    %v3795 = vpop.f32.mrb[0].mxu0
    %3796 = vdwg.mxu0
    %v3797 = vadd.f32 %v3750, %v246
    %v3798 = vadd.f32 %v3752, %v250
    %v3799 = vadd.f32 %v3791, %v254
    %v3800 = vadd.f32 %v3793, %v258
    %v3801 = vmul.f32 %v3797, 0.5
    %v3802 = vmul.f32 %v3798, 0.5
    %v3803 = vmul.f32 %v3799, 0.5
    %v3804 = vtanh.pop %v3801
    %v3805 = vtanh.pop %v3802
    %v3806 = vtanh.pop %v3803
    %v3807 = vmul.f32 %v3804, 0.5
    %v3808 = vmul.f32 %v3805, 0.5
    %v3809 = vmul.f32 %v3806, 0.5
    %v3810 = vadd.f32 %v3807, 0.5
    %v3811 = vadd.f32 %v3808, 0.5
    %v3812 = vadd.f32 %v3809, 0.5
    %v3813 = vtanh.pop %v3800
    %v3814 = vmul.f32 %v3811, %v3437
    %v3815 = vmul.f32 %v3810, %v3813
    %v3816 = vadd.f32 %v3814, %v3815
    %v3817 = vtanh.pop %v3816
    %v3818 = vmul.f32 %v3812, %v3817
    %v3820 = vrot.slane %v3818, 6
    %v3822 = vrot.slane %v3818, 4
    %v3824 = vrot.slane %v3818, 2
    %vm3826 = vcmask 1041408
    %v3827 = vsel %vm3826, %v3818, %v3820
    %vm3828 = vcmask 1043456
    %v3829 = vsel %vm3828, %v3827, %v3822
    %vm3830 = vcmask 1045504
    %v3831 = vsel %vm3830, %v3829, %v3824
    %v3832 = vld [vmem:[#allocation6] sm:$0xff]
    %v3833 = vld [vmem:[#allocation6 + $0x8] sm:$0xff]
    %v3834 = vadd.f32 %v3832, %v3831
    %v3835 = vadd.f32 %v3833, %v3831
    %v3836 = vmax.f32 %v3834, 0.0
    %v3837 = vmax.f32 %v3835, 0.0
    %v3838 = vld [vmem:[%s8] sm:$0xff]
    %v3839 = vld [vmem:[%s8 + $0x8] sm:$0xff]
    %v3840 = vld [vmem:[%s9] sm:$0x1]
    %v3842 = vlaneseq
    %v3843 = vshrl.u32 %v3842, 7
    %v3844 = vsub.s32 0, %v3843
    %v3845 = vrot.slane %v3840, %v3844
    %v3848 = vsel %vm309, %v3836, 0
    %v3851 = vsel %vm309, %v3837, 0
    %3853 = vmatprep.subr.mxu0 0.0
    %3854 = vmatpush1.msra.mxu0 %v3838
    %3855 = vmatprep.subr.mxu0 0.0
    %3856 = vmatpush1.msra.mxu0 %v3839
    %3857 = vmatprep.subr.mxu0 0.0
    %3858 = vmatpush1.msra.mxu0 0.0
    %3859 = vmatprep.subr.mxu0 0.0
    %3860 = vmatpush1.msra.mxu0 0.0
    %3861 = vmatprep.subr.mxu0 0.0
    %3862 = vmatpush1.msra.mxu0 0.0
    %3863 = vmatprep.subr.mxu0 0.0
    %3864 = vmatpush1.msra.mxu0 0.0
    %3865 = vmatprep.subr.mxu0 0.0
    %3866 = vmatpush1.msra.mxu0 0.0
    %3867 = vmatprep.subr.mxu0 0.0
    %3868 = vmatpush1.msra.mxu0 0.0
    %3869 = vmatprep.subr.mxu0 0.0
    %3870 = vmatpush1.msra.mxu0 0.0
    %3871 = vmatprep.subr.mxu0 0.0
    %3872 = vmatpush1.msra.mxu0 0.0
    %3873 = vmatprep.subr.mxu0 0.0
    %3874 = vmatpush1.msra.mxu0 0.0
    %3875 = vmatprep.subr.mxu0 0.0
    %3876 = vmatpush1.msra.mxu0 0.0
    %3877 = vmatprep.subr.mxu0 0.0
    %3878 = vmatpush1.msra.mxu0 0.0
    %3879 = vmatprep.subr.mxu0 0.0
    %3880 = vmatpush1.msra.mxu0 0.0
    %3881 = vmatprep.subr.mxu0 0.0
    %3882 = vmatpush1.msra.mxu0 0.0
    %3883 = vmatprep.subr.mxu0 0.0
    %3884 = vmatpush1.msra.mxu0 0.0
    %3885 = vmatprep.subr.mxu0 0.0
    %3886 = vmatpush1.msra.mxu0 0.0
    %3887 = vmatprep.subr.mxu0 0.0
    %3888 = vmatpush1.msra.mxu0 0.0
    %3889 = vmatprep.subr.mxu0 0.0
    %3890 = vmatpush1.msra.mxu0 0.0
    %3891 = vmatprep.subr.mxu0 0.0
    %3892 = vmatpush1.msra.mxu0 0.0
    %3893 = vmatprep.subr.mxu0 0.0
    %3894 = vmatpush1.msra.mxu0 0.0
    %3895 = vmatprep.subr.mxu0 0.0
    %3896 = vmatpush1.msra.mxu0 0.0
    %3897 = vmatprep.subr.mxu0 0.0
    %3898 = vmatpush1.msra.mxu0 0.0
    %3899 = vmatprep.subr.mxu0 0.0
    %3900 = vmatpush1.msra.mxu0 0.0
    %3901 = vmatprep.subr.mxu0 0.0
    %3902 = vmatpush1.msra.mxu0 0.0
    %3903 = vmatprep.subr.mxu0 0.0
    %3904 = vmatpush1.msra.mxu0 0.0
    %3905 = vmatprep.subr.mxu0 0.0
    %3906 = vmatpush1.msra.mxu0 0.0
    %3907 = vmatprep.subr.mxu0 0.0
    %3908 = vmatpush1.msra.mxu0 0.0
    %3909 = vmatprep.subr.mxu0 0.0
    %3910 = vmatpush1.msra.mxu0 0.0
    %3911 = vmatprep.subr.mxu0 0.0
    %3912 = vmatpush1.msra.mxu0 0.0
    %3913 = vmatprep.subr.mxu0 0.0
    %3914 = vmatpush1.msra.mxu0 0.0
    %3915 = vmatprep.subr.mxu0 0.0
    %3916 = vmatpush1.msra.mxu0 0.0
    %3917 = vmatprep.mubr.f32.mxu0 0.0
    %3918 = vmatmul.mubr.f32.gmra.mrb[0].mxu0 %v3848
    %v3919 = vpop.f32.mrb[0].mxu0
    %v3920 = vadd.f32 %v3845, %v3919
    %v3921 = vpop.f32.mrb[0].mxu0
    %3922 = vmatprep.mubr.f32.mxu0 0.0
    %3923 = vmatmul.mubr.f32.gmra.mrb[0].mxu0 %v3851
    %v3924 = vpop.f32.mrb[0].mxu0
    %v3925 = vadd.f32 %v3845, %v3924
    %v3926 = vpop.f32.mrb[0].mxu0
    %3927 = vdwg.mxu0
    %3928 = vst.msk [vmem:[#allocation14] sm:$0xff] %vm309, %v3920
    %3929 = vst.msk [vmem:[#allocation14 + $0x8] sm:$0xff] %vm309, %v3925
    // Predicated region
    $region66: #{tpu_custom_call.1} parent=1 // pred_check
      _
    $region67: #{tpu_custom_call.1} parent=1 // pred_check_branch
      %3931 = sbr.rel (0) target = $region69
    $region68: #{tpu_custom_call.1} parent=1 // pred_region
      %s3933 = ssub.s32 256, 256
      %3934 = vsyncadd [#allocation5], %s3933
      %s3935 = sshll.u32 [#allocation14], 4
      %s3936 = int_to_ptr.vmem [resolvable:$true] %s3935
      %3941 = dma.vmem_to_hbm [thread:$0]  %s3936, 256, %s10, [#allocation5], 128, 128, 8
    $region69: #{tpu_custom_call.1} parent=1 // pred_fallthru
      _
    // Predicated region
    $region70: #{tpu_custom_call.1} parent=1 // pred_check
      _
    $region71: #{tpu_custom_call.1} parent=1 // pred_check_branch
      %3943 = sbr.rel (0) target = $region73
    $region72: #{tpu_custom_call.1} parent=1 // pred_region
      %3944 = dma.done [#allocation5], 256
    $region73: #{tpu_custom_call.1} parent=1 // pred_fallthru
      _
    %3945 = vsyncpa [#allocation4], 1
    %3946 = vsyncpa [#allocation7], 1
    %3947 = vsyncpa [#allocation10], 1
    %3948 = vsyncpa [#allocation13], 1
    %3949 = vsyncpa [#allocation5], 1

</llo_original>
